<compile_context>
chip_gen: v7x
topology: tpu7x:2x2x1
jax: 0.10.0
libtpu: 0.0.40
codegen_flags: <defaults>
</compile_context>

<pallas_src>
import functools

import jax
import jax.numpy as jnp
from jax.experimental import pallas as pl
from jax.experimental.pallas import tpu as pltpu


# ------------------------------- Pallas kernel ------------------------------ #

def _unet_up4_fused_kernel(x_ref, skip_ref, ah_ref, awt_ref, wup_ref, bup_ref,
                           w1_ref, b1_ref, w2_ref, b2_ref, o_ref,
                           cat_ref, h1_ref, *, toh, oh, ow, h, w):
    # x_ref   : (1, Cin, H*W)            low-res input, channel-major
    # skip_ref: (1, Cskip, OH+4, OW)     skip, pre-padded with 2 zero rows top/bottom
    # ah_ref  : (OH+4, H)                H-interpolation matrix, 2 zero rows top/bottom
    # awt_ref : (W, OW)                  W-interpolation matrix, transposed
    # wup_ref : (Cup, Cin), bup_ref: (Cup, 1)
    # w1_ref  : (Cmid, 9*Ccat), b1_ref: (Cmid, 1)
    # w2_ref  : (Cout, 9*Cmid), b2_ref: (Cout, 1)
    # o_ref   : (1, Cout, TOH*OW)        lane-dense channel-major output tile
    # cat_ref : (Ccat, TOH+4, OW+2)      VMEM scratch (fused concat, 1 zero col margin)
    # h1_ref  : (Cmid, TOH+2, OW+2)      VMEM scratch (conv1 output, 1 zero col margin)
    t = pl.program_id(1)
    cup = wup_ref.shape[0]
    cskip = skip_ref.shape[1]
    ccat = cup + cskip
    cmid = w1_ref.shape[0]
    rc = toh + 4                      # cat rows   (2-row halo each side: two 3x3 convs)
    r1 = toh + 2                      # h1 rows    (1-row halo each side: conv2)
    f32 = jnp.float32
    cdt = cat_ref.dtype               # compute dtype (bf16)

    row0 = t * toh
    if toh % 8 == 0:
        row0 = pl.multiple_of(row0, 8)

    # ---- `up` branch: 1x1 conv first (channel reduction), then separable bilinear x4 ----
    # bias is added here: bilinear weights sum to 1, so it commutes with the upsample,
    # and the zero halo rows of Ah automatically stay exact zeros (conv1 zero padding).
    y0 = jnp.dot(wup_ref[...], x_ref[0], preferred_element_type=f32) + bup_ref[...]
    y0 = y0.astype(cdt).reshape(cup, h, w)                       # (Cup, H, W)

    ah_t = ah_ref[pl.ds(row0, rc), :]                            # (RC, H)
    ah_b = jnp.broadcast_to(ah_t[None, :, :], (cup, rc, h))      # batched over channels
    zh = jax.lax.dot_general(ah_b, y0, (((2,), (1,)), ((0,), (0,))),
                             preferred_element_type=f32)         # (Cup, RC, W)
    up = jnp.dot(zh.astype(cdt).reshape(cup * rc, w), awt_ref[...],
                 preferred_element_type=f32)                     # (Cup*RC, OW)
    up = up.reshape(cup, rc, ow)

    # ---- fused concat([up, skip]) into a zero-column-padded VMEM tile ----
    cat_ref[:, :, 0:1] = jnp.zeros((ccat, rc, 1), cdt)
    cat_ref[:, :, ow + 1:ow + 2] = jnp.zeros((ccat, rc, 1), cdt)
    cat_ref[0:cup, :, 1:ow + 1] = up.astype(cdt)
    cat_ref[cup:ccat, :, 1:ow + 1] = skip_ref[0, :, pl.ds(row0, rc), :]

    # ---- conv1 3x3 + ReLU : one K = 9*Ccat matmul over 9 shifted in-VMEM slabs ----
    s1 = jnp.concatenate(
        [cat_ref[:, kh:kh + r1, kw:kw + ow].reshape(ccat, r1 * ow)
         for kh in range(3) for kw in range(3)], axis=0)          # (9*Ccat, R1*OW)
    h1 = jnp.maximum(jnp.dot(w1_ref[...], s1, preferred_element_type=f32)
                     + b1_ref[...], 0.0).reshape(cmid, r1, ow)
    # halo rows outside the image are conv2's zero padding, not ReLU(bias)
    gr = jax.lax.broadcasted_iota(jnp.int32, (1, r1, 1), 1) + (t * toh - 1)
    h1 = h1 * jnp.logical_and(gr >= 0, gr < oh).astype(h1.dtype)

    h1_ref[:, :, 0:1] = jnp.zeros((cmid, r1, 1), cdt)
    h1_ref[:, :, ow + 1:ow + 2] = jnp.zeros((cmid, r1, 1), cdt)
    h1_ref[:, :, 1:ow + 1] = h1.astype(cdt)

    # ---- conv2 3x3 + ReLU : channel-major, lane-dense output tile ----
    s2 = jnp.concatenate(
        [h1_ref[:, kh:kh + toh, kw:kw + ow].reshape(cmid, toh * ow)
         for kh in range(3) for kw in range(3)], axis=0)          # (9*Cmid, TOH*OW)
    out = jnp.maximum(jnp.dot(w2_ref[...], s2, preferred_element_type=f32)
                      + b2_ref[...], 0.0)
    o_ref[0] = out.astype(o_ref.dtype)


# ----------------------------- pallas_call wrapper -------------------------- #

def unet_up4_pallas(x, skip_pad, ah_pad, aw_t, wup_t, b_up, w1_mat, b1, w2_mat, b2,
                    *, toh, oh, ow, h, w, out_dtype=jnp.float32):
    n, cin, hw = x.shape
    _, cskip, ohp4, oww = skip_pad.shape
    assert oww == ow and ohp4 == oh + 4 and hw == h * w and oh % toh == 0
    cup = wup_t.shape[0]
    ccat = cup + cskip
    cmid = w1_mat.shape[0]
    cout = w2_mat.shape[0]
    nt = oh // toh
    rc, r1 = toh + 4, toh + 2
    cdt = x.dtype

    kernel = functools.partial(_unet_up4_fused_kernel,
                               toh=toh, oh=oh, ow=ow, h=h, w=w)

    return pl.pallas_call(
        kernel,
        out_shape=jax.ShapeDtypeStruct((n, cout, oh * ow), out_dtype),
        grid=(n, nt),
        in_specs=[
            pl.BlockSpec((1, cin, hw), lambda i, t: (i, 0, 0)),          # x (per batch)
            pl.BlockSpec((1, cskip, ohp4, ow), lambda i, t: (i, 0, 0, 0)),  # padded skip
            pl.BlockSpec((oh + 4, h), lambda i, t: (0, 0)),              # Ah (padded)
            pl.BlockSpec((w, ow), lambda i, t: (0, 0)),                  # Aw^T
            pl.BlockSpec((cup, cin), lambda i, t: (0, 0)),               # 1x1 weights
            pl.BlockSpec((cup, 1), lambda i, t: (0, 0)),                 # 1x1 bias
            pl.BlockSpec((cmid, 9 * ccat), lambda i, t: (0, 0)),         # conv1 weights
            pl.BlockSpec((cmid, 1), lambda i, t: (0, 0)),                # conv1 bias
            pl.BlockSpec((cout, 9 * cmid), lambda i, t: (0, 0)),         # conv2 weights
            pl.BlockSpec((cout, 1), lambda i, t: (0, 0)),                # conv2 bias
        ],
        out_specs=pl.BlockSpec((1, cout, toh * ow), lambda i, t: (i, 0, t)),
        scratch_shapes=[
            pltpu.VMEM((ccat, rc, ow + 2), cdt),   # fused concat tile (+ col margins)
            pltpu.VMEM((cmid, r1, ow + 2), cdt),   # conv1 output tile (+ col margins)
        ],
        compiler_params=pltpu.CompilerParams(
            dimension_semantics=("parallel", "parallel")),
    )(x, skip_pad, ah_pad, aw_t, wup_t, b_up, w1_mat, b1, w2_mat, b2)


# --------------------------------- JAX glue ---------------------------------- #

def bilinear_matrix(in_size, out_size, dtype=jnp.float32):
    # nn.UpsamplingBilinear2d == bilinear with align_corners=True (assumes in_size >= 2)
    pos = jnp.arange(out_size, dtype=jnp.float32) * (in_size - 1) / (out_size - 1)
    i0 = jnp.clip(jnp.floor(pos).astype(jnp.int32), 0, in_size - 2)
    frac = pos - i0.astype(jnp.float32)
    oh0 = jax.nn.one_hot(i0, in_size, dtype=jnp.float32)
    oh1 = jax.nn.one_hot(i0 + 1, in_size, dtype=jnp.float32)
    return ((1.0 - frac)[:, None] * oh0 + frac[:, None] * oh1).astype(dtype)


def unet_up4_forward(params, inputs0_nchw, skip_nchw, *, toh=None,
                     compute_dtype=jnp.bfloat16):
    """UnetUp4.forward (is_deconv=False, n_concat=2). NCHW in, NCHW out."""
    n, cin, h, w = inputs0_nchw.shape
    oh, ow = 4 * h, 4 * w
    ns, cskip, sh, sw = skip_nchw.shape
    assert ns == n and (sh, sw) == (oh, ow)
    cup = params["w_up"].shape[1]
    cmid = params["w_c1"].shape[3]
    cout = params["w_c2"].shape[3]
    ccat = cup + cskip
    assert params["w_c1"].shape[2] == ccat and params["w_c2"].shape[2] == cmid

    if toh is None:
        # largest row tile dividing OH that keeps the output block lane-dense (<=16K px)
        toh = oh
        for d in range(oh, 0, -1):
            if oh % d == 0 and (d * ow) % 128 == 0 and d * ow <= 16384:
                toh = d
                break

    f32 = jnp.float32
    ah = bilinear_matrix(h, oh, f32)
    aw = bilinear_matrix(w, ow, f32)
    # 2 zero rows on each side => out-of-image halo rows upsample to exact zeros.
    ah_pad = jnp.zeros((oh + 4, h), f32).at[2:oh + 2].set(ah).astype(compute_dtype)
    aw_t = aw.T.astype(compute_dtype)

    x = inputs0_nchw.reshape(n, cin, h * w).astype(compute_dtype)
    skip_pad = jnp.pad(skip_nchw, ((0, 0), (0, 0), (2, 2), (0, 0))).astype(compute_dtype)

    wup_t = params["w_up"].T.astype(compute_dtype)                       # (Cup, Cin)
    b_up = params["b_up"].reshape(cup, 1).astype(f32)
    w1_mat = jnp.transpose(params["w_c1"], (3, 0, 1, 2)).reshape(cmid, 9 * ccat)
    w2_mat = jnp.transpose(params["w_c2"], (3, 0, 1, 2)).reshape(cout, 9 * cmid)
    w1_mat = w1_mat.astype(compute_dtype)
    w2_mat = w2_mat.astype(compute_dtype)
    b1 = params["b_c1"].reshape(cmid, 1).astype(f32)
    b2 = params["b_c2"].reshape(cout, 1).astype(f32)

    out = unet_up4_pallas(x, skip_pad, ah_pad, aw_t, wup_t, b_up, w1_mat, b1,
                          w2_mat, b2, toh=toh, oh=oh, ow=ow, h=h, w=w)
    return out.reshape(n, cout, oh, ow)                                  # NCHW (no transpose)


# --------------------------------- reference ---------------------------------- #

def reference_forward(params, inputs0_nchw, skip_nchw):
    x = jnp.transpose(inputs0_nchw, (0, 2, 3, 1))
    n, h, w, cin = x.shape
    oh, ow = 4 * h, 4 * w
    ah = bilinear_matrix(h, oh)
    aw = bilinear_matrix(w, ow)
    up = jnp.einsum("oh,nhwc->nowc", ah, x)
    up = jnp.einsum("pw,nowc->nopc", aw, up)
    y = jnp.einsum("nopc,cd->nopd", up, params["w_up"]) + params["b_up"]
    skip = jnp.transpose(skip_nchw, (0, 2, 3, 1))
    cat = jnp.concatenate([y, skip], axis=-1)

    def conv(z, w_hwio, b):
        o = jax.lax.conv_general_dilated(
            z, w_hwio, (1, 1), ((1, 1), (1, 1)),
            dimension_numbers=("NHWC", "HWIO", "NHWC"))
        return jnp.maximum(o + b, 0.0)

    h1 = conv(cat, params["w_c1"], params["b_c1"])
    h2 = conv(h1, params["w_c2"], params["b_c2"])
    return jnp.transpose(h2, (0, 3, 1, 2))


# ----------------------------------- main -------------------------------------- #

if __name__ == "__main__":
    key = jax.random.PRNGKey(0)
    N, IN_C, OUT_C, H, W = 2, 8, 4, 4, 4                 # in_channels=8, out_channels=4
    OH, OW = 4 * H, 4 * W
    SKIP_C = IN_C - OUT_C                                # concat channels == in_channels

    ks = jax.random.split(key, 8)
    inputs0 = jax.random.normal(ks[0], (N, IN_C, H, W), jnp.float32)
    skip = jax.random.normal(ks[1], (N, SKIP_C, OH, OW), jnp.float32)

    def kaiming(k, shape, fan_in):
        return jax.random.normal(k, shape, jnp.float32) * jnp.sqrt(2.0 / fan_in)

    params = {
        "w_up": kaiming(ks[2], (IN_C, OUT_C), IN_C),             # Conv2d 1x1 as (Cin, Cout)
        "b_up": 0.1 * jax.random.normal(ks[3], (OUT_C,), jnp.float32),
        "w_c1": kaiming(ks[4], (3, 3, IN_C, OUT_C), 9 * IN_C),   # HWIO
        "b_c1": 0.1 * jax.random.normal(ks[5], (OUT_C,), jnp.float32),
        "w_c2": kaiming(ks[6], (3, 3, OUT_C, OUT_C), 9 * OUT_C),
        "b_c2": 0.1 * jax.random.normal(ks[7], (OUT_C,), jnp.float32),
    }

    fwd = jax.jit(functools.partial(unet_up4_forward, toh=8))   # 2 row tiles per image
    out = jax.block_until_ready(fwd(params, inputs0, skip))
    ref = jax.block_until_ready(reference_forward(params, inputs0, skip))

    assert out.shape == (N, OUT_C, OH, OW), out.shape
    max_err = float(jnp.max(jnp.abs(out - ref)))
    # bf16 matmul operands with f32 accumulation vs pure-f32 reference
    assert jnp.allclose(out, ref, atol=5e-2, rtol=5e-2), max_err

    print("KERNEL_OK")
</pallas_src>

<mosaic_0001>
module attributes {stable_mosaic.version = 11 : i64} {
  func.func @_unet_up4_fused_kernel(%arg0: i32, %arg1: i32, %arg2: memref<1x8x16xbf16, #tpu.memory_space<vmem>>, %arg3: memref<1x4x20x16xbf16, #tpu.memory_space<vmem>>, %arg4: memref<20x4xbf16, #tpu.memory_space<vmem>>, %arg5: memref<4x16xbf16, #tpu.memory_space<vmem>>, %arg6: memref<4x8xbf16, #tpu.memory_space<vmem>>, %arg7: memref<4x1xf32, #tpu.memory_space<vmem>>, %arg8: memref<4x72xbf16, #tpu.memory_space<vmem>>, %arg9: memref<4x1xf32, #tpu.memory_space<vmem>>, %arg10: memref<4x36xbf16, #tpu.memory_space<vmem>>, %arg11: memref<4x1xf32, #tpu.memory_space<vmem>>, %arg12: memref<1x4x128xf32, #tpu.memory_space<vmem>>, %arg13: memref<8x12x18xbf16, #tpu.memory_space<vmem>>, %arg14: memref<4x10x18xbf16, #tpu.memory_space<vmem>>) attributes {dimension_semantics = [#tpu.dimension_semantics<parallel>, #tpu.dimension_semantics<parallel>], iteration_bounds = array<i64: 2, 2>, scalar_prefetch = 0 : i64, scratch_operands = 2 : i64, tpu.core_type = #tpu.core_type<tc>, window_params = [{transform_indices = @transform_0, window_bounds = array<i64: 1, 8, 16>}, {transform_indices = @transform_1, window_bounds = array<i64: 1, 4, 20, 16>}, {pipeline_mode = #tpu.pipeline_mode<synchronous>, transform_indices = @transform_2, window_bounds = array<i64: 20, 4>}, {pipeline_mode = #tpu.pipeline_mode<synchronous>, transform_indices = @transform_3, window_bounds = array<i64: 4, 16>}, {pipeline_mode = #tpu.pipeline_mode<synchronous>, transform_indices = @transform_4, window_bounds = array<i64: 4, 8>}, {pipeline_mode = #tpu.pipeline_mode<synchronous>, transform_indices = @transform_5, window_bounds = array<i64: 4, 1>}, {pipeline_mode = #tpu.pipeline_mode<synchronous>, transform_indices = @transform_6, window_bounds = array<i64: 4, 72>}, {pipeline_mode = #tpu.pipeline_mode<synchronous>, transform_indices = @transform_7, window_bounds = array<i64: 4, 1>}, {pipeline_mode = #tpu.pipeline_mode<synchronous>, transform_indices = @transform_8, window_bounds = array<i64: 4, 36>}, {pipeline_mode = #tpu.pipeline_mode<synchronous>, transform_indices = @transform_9, window_bounds = array<i64: 4, 1>}, {transform_indices = @transform_10, window_bounds = array<i64: 1, 4, 128>}]} {
    %c8_i32 = arith.constant 8 : i32
    %0 = arith.muli %arg1, %c8_i32 : i32
    %1 = tpu.assume_multiple %0, 8 : i32
    %c0 = arith.constant 0 : index
    %c0_0 = arith.constant 0 : index
    %2 = vector.load %arg6[%c0, %c0_0] : memref<4x8xbf16, #tpu.memory_space<vmem>>, vector<4x8xbf16>
    %c0_1 = arith.constant 0 : index
    %c0_2 = arith.constant 0 : index
    %c0_3 = arith.constant 0 : index
    %3 = vector.load %arg2[%c0_1, %c0_2, %c0_3] : memref<1x8x16xbf16, #tpu.memory_space<vmem>>, vector<1x8x16xbf16>
    %4 = vector.shape_cast %3 : vector<1x8x16xbf16> to vector<8x16xbf16>
    %cst = arith.constant dense<0.000000e+00> : vector<4x16xf32>
    %5 = tpu.matmul %2, %4, %cst {dimension_numbers = #tpu.dot_dimension_numbers<[1], [0], [0], [1], [0, 0, 1, 1], [], []>} : vector<4x8xbf16>, vector<8x16xbf16>, vector<4x16xf32> -> vector<4x16xf32>
    %c0_4 = arith.constant 0 : index
    %c0_5 = arith.constant 0 : index
    %6 = vector.load %arg7[%c0_4, %c0_5] : memref<4x1xf32, #tpu.memory_space<vmem>>, vector<4x1xf32>
    %7 = vector.broadcast %6 : vector<4x1xf32> to vector<4x16xf32>
    %8 = arith.addf %5, %7 : vector<4x16xf32>
    %9 = arith.truncf %8 : vector<4x16xf32> to vector<4x16xbf16>
    %10 = vector.shape_cast %9 : vector<4x16xbf16> to vector<4x4x4xbf16>
    %11 = arith.index_cast %1 : i32 to index
    %c0_6 = arith.constant 0 : index
    %12 = vector.load %arg4[%11, %c0_6] : memref<20x4xbf16, #tpu.memory_space<vmem>>, vector<12x4xbf16>
    %13 = vector.shape_cast %12 : vector<12x4xbf16> to vector<1x12x4xbf16>
    %14 = vector.shape_cast %13 : vector<1x12x4xbf16> to vector<1x12x4xbf16>
    %15 = vector.broadcast %14 : vector<1x12x4xbf16> to vector<4x12x4xbf16>
    %cst_7 = arith.constant dense<0.000000e+00> : vector<4x12x4xf32>
    %16 = tpu.matmul %15, %10, %cst_7 {dimension_numbers = #tpu.dot_dimension_numbers<[2], [1], [1], [2], [0, 0, 0, 1, 1, 2], [0], [0]>} : vector<4x12x4xbf16>, vector<4x4x4xbf16>, vector<4x12x4xf32> -> vector<4x12x4xf32>
    %17 = arith.truncf %16 : vector<4x12x4xf32> to vector<4x12x4xbf16>
    %18 = vector.shape_cast %17 : vector<4x12x4xbf16> to vector<48x4xbf16>
    %c0_8 = arith.constant 0 : index
    %c0_9 = arith.constant 0 : index
    %19 = vector.load %arg5[%c0_8, %c0_9] : memref<4x16xbf16, #tpu.memory_space<vmem>>, vector<4x16xbf16>
    %cst_10 = arith.constant dense<0.000000e+00> : vector<48x16xf32>
    %20 = tpu.matmul %18, %19, %cst_10 {dimension_numbers = #tpu.dot_dimension_numbers<[1], [0], [0], [1], [0, 0, 1, 1], [], []>} : vector<48x4xbf16>, vector<4x16xbf16>, vector<48x16xf32> -> vector<48x16xf32>
    %21 = vector.shape_cast %20 : vector<48x16xf32> to vector<4x12x16xf32>
    %cst_11 = arith.constant 0.000000e+00 : bf16
    %22 = vector.broadcast %cst_11 : bf16 to vector<8x12x1xbf16>
    %c0_12 = arith.constant 0 : index
    %c0_13 = arith.constant 0 : index
    %c0_14 = arith.constant 0 : index
    %23 = vector.load %arg13[%c0_12, %c0_13, %c0_14] : memref<8x12x18xbf16, #tpu.memory_space<vmem>>, vector<8x12x1xbf16>
    tpu.vector_store %arg13[%c0_12, %c0_13, %c0_14], %22 {strides = array<i32>} : memref<8x12x18xbf16, #tpu.memory_space<vmem>>, vector<8x12x1xbf16>,
    %cst_15 = arith.constant 0.000000e+00 : bf16
    %24 = vector.broadcast %cst_15 : bf16 to vector<8x12x1xbf16>
    %c0_16 = arith.constant 0 : index
    %c0_17 = arith.constant 0 : index
    %c17 = arith.constant 17 : index
    %25 = vector.load %arg13[%c0_16, %c0_17, %c17] : memref<8x12x18xbf16, #tpu.memory_space<vmem>>, vector<8x12x1xbf16>
    tpu.vector_store %arg13[%c0_16, %c0_17, %c17], %24 {strides = array<i32>} : memref<8x12x18xbf16, #tpu.memory_space<vmem>>, vector<8x12x1xbf16>,
    %26 = arith.truncf %21 : vector<4x12x16xf32> to vector<4x12x16xbf16>
    %c0_18 = arith.constant 0 : index
    %c0_19 = arith.constant 0 : index
    %c1 = arith.constant 1 : index
    %27 = vector.load %arg13[%c0_18, %c0_19, %c1] : memref<8x12x18xbf16, #tpu.memory_space<vmem>>, vector<4x12x16xbf16>
    tpu.vector_store %arg13[%c0_18, %c0_19, %c1], %26 {strides = array<i32>} : memref<8x12x18xbf16, #tpu.memory_space<vmem>>, vector<4x12x16xbf16>,
    %c0_20 = arith.constant 0 : index
    %c0_21 = arith.constant 0 : index
    %28 = arith.index_cast %1 : i32 to index
    %c0_22 = arith.constant 0 : index
    %29 = vector.load %arg3[%c0_20, %c0_21, %28, %c0_22] : memref<1x4x20x16xbf16, #tpu.memory_space<vmem>>, vector<1x4x12x16xbf16>
    %30 = vector.shape_cast %29 : vector<1x4x12x16xbf16> to vector<4x12x16xbf16>
    %c4 = arith.constant 4 : index
    %c0_23 = arith.constant 0 : index
    %c1_24 = arith.constant 1 : index
    %31 = vector.load %arg13[%c4, %c0_23, %c1_24] : memref<8x12x18xbf16, #tpu.memory_space<vmem>>, vector<4x12x16xbf16>
    tpu.vector_store %arg13[%c4, %c0_23, %c1_24], %30 {strides = array<i32>} : memref<8x12x18xbf16, #tpu.memory_space<vmem>>, vector<4x12x16xbf16>,
    %c0_25 = arith.constant 0 : index
    %c0_26 = arith.constant 0 : index
    %c0_27 = arith.constant 0 : index
    %32 = vector.load %arg13[%c0_25, %c0_26, %c0_27] : memref<8x12x18xbf16, #tpu.memory_space<vmem>>, vector<8x10x16xbf16>
    %33 = vector.shape_cast %32 : vector<8x10x16xbf16> to vector<8x160xbf16>
    %c0_28 = arith.constant 0 : index
    %c0_29 = arith.constant 0 : index
    %c1_30 = arith.constant 1 : index
    %34 = vector.load %arg13[%c0_28, %c0_29, %c1_30] : memref<8x12x18xbf16, #tpu.memory_space<vmem>>, vector<8x10x16xbf16>
    %35 = vector.shape_cast %34 : vector<8x10x16xbf16> to vector<8x160xbf16>
    %c0_31 = arith.constant 0 : index
    %c0_32 = arith.constant 0 : index
    %c2 = arith.constant 2 : index
    %36 = vector.load %arg13[%c0_31, %c0_32, %c2] : memref<8x12x18xbf16, #tpu.memory_space<vmem>>, vector<8x10x16xbf16>
    %37 = vector.shape_cast %36 : vector<8x10x16xbf16> to vector<8x160xbf16>
    %c0_33 = arith.constant 0 : index
    %c1_34 = arith.constant 1 : index
    %c0_35 = arith.constant 0 : index
    %38 = vector.load %arg13[%c0_33, %c1_34, %c0_35] : memref<8x12x18xbf16, #tpu.memory_space<vmem>>, vector<8x10x16xbf16>
    %39 = vector.shape_cast %38 : vector<8x10x16xbf16> to vector<8x160xbf16>
    %c0_36 = arith.constant 0 : index
    %c1_37 = arith.constant 1 : index
    %c1_38 = arith.constant 1 : index
    %40 = vector.load %arg13[%c0_36, %c1_37, %c1_38] : memref<8x12x18xbf16, #tpu.memory_space<vmem>>, vector<8x10x16xbf16>
    %41 = vector.shape_cast %40 : vector<8x10x16xbf16> to vector<8x160xbf16>
    %c0_39 = arith.constant 0 : index
    %c1_40 = arith.constant 1 : index
    %c2_41 = arith.constant 2 : index
    %42 = vector.load %arg13[%c0_39, %c1_40, %c2_41] : memref<8x12x18xbf16, #tpu.memory_space<vmem>>, vector<8x10x16xbf16>
    %43 = vector.shape_cast %42 : vector<8x10x16xbf16> to vector<8x160xbf16>
    %c0_42 = arith.constant 0 : index
    %c2_43 = arith.constant 2 : index
    %c0_44 = arith.constant 0 : index
    %44 = vector.load %arg13[%c0_42, %c2_43, %c0_44] : memref<8x12x18xbf16, #tpu.memory_space<vmem>>, vector<8x10x16xbf16>
    %45 = vector.shape_cast %44 : vector<8x10x16xbf16> to vector<8x160xbf16>
    %c0_45 = arith.constant 0 : index
    %c2_46 = arith.constant 2 : index
    %c1_47 = arith.constant 1 : index
    %46 = vector.load %arg13[%c0_45, %c2_46, %c1_47] : memref<8x12x18xbf16, #tpu.memory_space<vmem>>, vector<8x10x16xbf16>
    %47 = vector.shape_cast %46 : vector<8x10x16xbf16> to vector<8x160xbf16>
    %c0_48 = arith.constant 0 : index
    %c2_49 = arith.constant 2 : index
    %c2_50 = arith.constant 2 : index
    %48 = vector.load %arg13[%c0_48, %c2_49, %c2_50] : memref<8x12x18xbf16, #tpu.memory_space<vmem>>, vector<8x10x16xbf16>
    %49 = vector.shape_cast %48 : vector<8x10x16xbf16> to vector<8x160xbf16>
    %50 = tpu.concatenate %33, %35, %37, %39, %41, %43, %45, %47, %49 in 0 : vector<8x160xbf16>, vector<8x160xbf16>, vector<8x160xbf16>, vector<8x160xbf16>, vector<8x160xbf16>, vector<8x160xbf16>, vector<8x160xbf16>, vector<8x160xbf16>, vector<8x160xbf16> -> vector<72x160xbf16>
    %c0_51 = arith.constant 0 : index
    %c0_52 = arith.constant 0 : index
    %51 = vector.load %arg8[%c0_51, %c0_52] : memref<4x72xbf16, #tpu.memory_space<vmem>>, vector<4x72xbf16>
    %cst_53 = arith.constant dense<0.000000e+00> : vector<4x160xf32>
    %52 = tpu.matmul %51, %50, %cst_53 {dimension_numbers = #tpu.dot_dimension_numbers<[1], [0], [0], [1], [0, 0, 1, 1], [], []>} : vector<4x72xbf16>, vector<72x160xbf16>, vector<4x160xf32> -> vector<4x160xf32>
    %c0_54 = arith.constant 0 : index
    %c0_55 = arith.constant 0 : index
    %53 = vector.load %arg9[%c0_54, %c0_55] : memref<4x1xf32, #tpu.memory_space<vmem>>, vector<4x1xf32>
    %54 = vector.broadcast %53 : vector<4x1xf32> to vector<4x160xf32>
    %55 = arith.addf %52, %54 : vector<4x160xf32>
    %cst_56 = arith.constant 0.000000e+00 : f32
    %56 = vector.broadcast %cst_56 : f32 to vector<4x160xf32>
    %57 = arith.maximumf %55, %56 : vector<4x160xf32>
    %58 = vector.shape_cast %57 : vector<4x160xf32> to vector<4x10x16xf32>
    %59 = tpu.iota {dimensions = array<i32: 1>} : vector<1x10x1xi32>
    %c8_i32_57 = arith.constant 8 : i32
    %60 = arith.muli %arg1, %c8_i32_57 : i32
    %c1_i32 = arith.constant 1 : i32
    %61 = arith.subi %60, %c1_i32 : i32
    %62 = vector.broadcast %61 : i32 to vector<1x10x1xi32>
    %63 = arith.addi %59, %62 : vector<1x10x1xi32>
    %c0_i32 = arith.constant 0 : i32
    %64 = vector.broadcast %c0_i32 : i32 to vector<1x10x1xi32>
    %65 = arith.cmpi sge, %63, %64 : vector<1x10x1xi32>
    %c16_i32 = arith.constant 16 : i32
    %66 = vector.broadcast %c16_i32 : i32 to vector<1x10x1xi32>
    %67 = arith.cmpi slt, %63, %66 : vector<1x10x1xi32>
    %68 = arith.andi %65, %67 : vector<1x10x1xi1>
    %69 = arith.extui %68 : vector<1x10x1xi1> to vector<1x10x1xi32>
    %70 = arith.sitofp %69 : vector<1x10x1xi32> to vector<1x10x1xf32>
    %71 = vector.broadcast %70 : vector<1x10x1xf32> to vector<4x10x16xf32>
    %72 = arith.mulf %58, %71 : vector<4x10x16xf32>
    %cst_58 = arith.constant 0.000000e+00 : bf16
    %73 = vector.broadcast %cst_58 : bf16 to vector<4x10x1xbf16>
    %c0_59 = arith.constant 0 : index
    %c0_60 = arith.constant 0 : index
    %c0_61 = arith.constant 0 : index
    %74 = vector.load %arg14[%c0_59, %c0_60, %c0_61] : memref<4x10x18xbf16, #tpu.memory_space<vmem>>, vector<4x10x1xbf16>
    tpu.vector_store %arg14[%c0_59, %c0_60, %c0_61], %73 {strides = array<i32>} : memref<4x10x18xbf16, #tpu.memory_space<vmem>>, vector<4x10x1xbf16>,
    %cst_62 = arith.constant 0.000000e+00 : bf16
    %75 = vector.broadcast %cst_62 : bf16 to vector<4x10x1xbf16>
    %c0_63 = arith.constant 0 : index
    %c0_64 = arith.constant 0 : index
    %c17_65 = arith.constant 17 : index
    %76 = vector.load %arg14[%c0_63, %c0_64, %c17_65] : memref<4x10x18xbf16, #tpu.memory_space<vmem>>, vector<4x10x1xbf16>
    tpu.vector_store %arg14[%c0_63, %c0_64, %c17_65], %75 {strides = array<i32>} : memref<4x10x18xbf16, #tpu.memory_space<vmem>>, vector<4x10x1xbf16>,
    %77 = arith.truncf %72 : vector<4x10x16xf32> to vector<4x10x16xbf16>
    %c0_66 = arith.constant 0 : index
    %c0_67 = arith.constant 0 : index
    %c1_68 = arith.constant 1 : index
    %78 = vector.load %arg14[%c0_66, %c0_67, %c1_68] : memref<4x10x18xbf16, #tpu.memory_space<vmem>>, vector<4x10x16xbf16>
    tpu.vector_store %arg14[%c0_66, %c0_67, %c1_68], %77 {strides = array<i32>} : memref<4x10x18xbf16, #tpu.memory_space<vmem>>, vector<4x10x16xbf16>,
    %c0_69 = arith.constant 0 : index
    %c0_70 = arith.constant 0 : index
    %c0_71 = arith.constant 0 : index
    %79 = vector.load %arg14[%c0_69, %c0_70, %c0_71] : memref<4x10x18xbf16, #tpu.memory_space<vmem>>, vector<4x8x16xbf16>
    %80 = vector.shape_cast %79 : vector<4x8x16xbf16> to vector<4x128xbf16>
    %c0_72 = arith.constant 0 : index
    %c0_73 = arith.constant 0 : index
    %c1_74 = arith.constant 1 : index
    %81 = vector.load %arg14[%c0_72, %c0_73, %c1_74] : memref<4x10x18xbf16, #tpu.memory_space<vmem>>, vector<4x8x16xbf16>
    %82 = vector.shape_cast %81 : vector<4x8x16xbf16> to vector<4x128xbf16>
    %c0_75 = arith.constant 0 : index
    %c0_76 = arith.constant 0 : index
    %c2_77 = arith.constant 2 : index
    %83 = vector.load %arg14[%c0_75, %c0_76, %c2_77] : memref<4x10x18xbf16, #tpu.memory_space<vmem>>, vector<4x8x16xbf16>
    %84 = vector.shape_cast %83 : vector<4x8x16xbf16> to vector<4x128xbf16>
    %c0_78 = arith.constant 0 : index
    %c1_79 = arith.constant 1 : index
    %c0_80 = arith.constant 0 : index
    %85 = vector.load %arg14[%c0_78, %c1_79, %c0_80] : memref<4x10x18xbf16, #tpu.memory_space<vmem>>, vector<4x8x16xbf16>
    %86 = vector.shape_cast %85 : vector<4x8x16xbf16> to vector<4x128xbf16>
    %c0_81 = arith.constant 0 : index
    %c1_82 = arith.constant 1 : index
    %c1_83 = arith.constant 1 : index
    %87 = vector.load %arg14[%c0_81, %c1_82, %c1_83] : memref<4x10x18xbf16, #tpu.memory_space<vmem>>, vector<4x8x16xbf16>
    %88 = vector.shape_cast %87 : vector<4x8x16xbf16> to vector<4x128xbf16>
    %c0_84 = arith.constant 0 : index
    %c1_85 = arith.constant 1 : index
    %c2_86 = arith.constant 2 : index
    %89 = vector.load %arg14[%c0_84, %c1_85, %c2_86] : memref<4x10x18xbf16, #tpu.memory_space<vmem>>, vector<4x8x16xbf16>
    %90 = vector.shape_cast %89 : vector<4x8x16xbf16> to vector<4x128xbf16>
    %c0_87 = arith.constant 0 : index
    %c2_88 = arith.constant 2 : index
    %c0_89 = arith.constant 0 : index
    %91 = vector.load %arg14[%c0_87, %c2_88, %c0_89] : memref<4x10x18xbf16, #tpu.memory_space<vmem>>, vector<4x8x16xbf16>
    %92 = vector.shape_cast %91 : vector<4x8x16xbf16> to vector<4x128xbf16>
    %c0_90 = arith.constant 0 : index
    %c2_91 = arith.constant 2 : index
    %c1_92 = arith.constant 1 : index
    %93 = vector.load %arg14[%c0_90, %c2_91, %c1_92] : memref<4x10x18xbf16, #tpu.memory_space<vmem>>, vector<4x8x16xbf16>
    %94 = vector.shape_cast %93 : vector<4x8x16xbf16> to vector<4x128xbf16>
    %c0_93 = arith.constant 0 : index
    %c2_94 = arith.constant 2 : index
    %c2_95 = arith.constant 2 : index
    %95 = vector.load %arg14[%c0_93, %c2_94, %c2_95] : memref<4x10x18xbf16, #tpu.memory_space<vmem>>, vector<4x8x16xbf16>
    %96 = vector.shape_cast %95 : vector<4x8x16xbf16> to vector<4x128xbf16>
    %97 = tpu.concatenate %80, %82, %84, %86, %88, %90, %92, %94, %96 in 0 : vector<4x128xbf16>, vector<4x128xbf16>, vector<4x128xbf16>, vector<4x128xbf16>, vector<4x128xbf16>, vector<4x128xbf16>, vector<4x128xbf16>, vector<4x128xbf16>, vector<4x128xbf16> -> vector<36x128xbf16>
    %c0_96 = arith.constant 0 : index
    %c0_97 = arith.constant 0 : index
    %98 = vector.load %arg10[%c0_96, %c0_97] : memref<4x36xbf16, #tpu.memory_space<vmem>>, vector<4x36xbf16>
    %cst_98 = arith.constant dense<0.000000e+00> : vector<4x128xf32>
    %99 = tpu.matmul %98, %97, %cst_98 {dimension_numbers = #tpu.dot_dimension_numbers<[1], [0], [0], [1], [0, 0, 1, 1], [], []>} : vector<4x36xbf16>, vector<36x128xbf16>, vector<4x128xf32> -> vector<4x128xf32>
    %c0_99 = arith.constant 0 : index
    %c0_100 = arith.constant 0 : index
    %100 = vector.load %arg11[%c0_99, %c0_100] : memref<4x1xf32, #tpu.memory_space<vmem>>, vector<4x1xf32>
    %101 = vector.broadcast %100 : vector<4x1xf32> to vector<4x128xf32>
    %102 = arith.addf %99, %101 : vector<4x128xf32>
    %cst_101 = arith.constant 0.000000e+00 : f32
    %103 = vector.broadcast %cst_101 : f32 to vector<4x128xf32>
    %104 = arith.maximumf %102, %103 : vector<4x128xf32>
    %c0_102 = arith.constant 0 : index
    %c0_103 = arith.constant 0 : index
    %c0_104 = arith.constant 0 : index
    %105 = vector.load %arg12[%c0_102, %c0_103, %c0_104] : memref<1x4x128xf32, #tpu.memory_space<vmem>>, vector<1x4x128xf32>
    %106 = vector.shape_cast %105 : vector<1x4x128xf32> to vector<4x128xf32>
    %107 = vector.shape_cast %104 : vector<4x128xf32> to vector<1x4x128xf32>
    tpu.vector_store %arg12[%c0_102, %c0_103, %c0_104], %107 {strides = array<i32>} : memref<1x4x128xf32, #tpu.memory_space<vmem>>, vector<1x4x128xf32>,
    return
  }
  func.func @transform_0(%arg0: i32, %arg1: i32) -> (i32, i32, i32) {
    %c0_i32 = arith.constant 0 : i32
    %c0_i32_0 = arith.constant 0 : i32
    %c0_i32_1 = arith.constant 0 : i32
    return %arg0, %c0_i32, %c0_i32_0 : i32, i32, i32
  }
  func.func @transform_1(%arg0: i32, %arg1: i32) -> (i32, i32, i32, i32) {
    %c0_i32 = arith.constant 0 : i32
    %c0_i32_0 = arith.constant 0 : i32
    %c0_i32_1 = arith.constant 0 : i32
    %c0_i32_2 = arith.constant 0 : i32
    return %arg0, %c0_i32, %c0_i32_0, %c0_i32_1 : i32, i32, i32, i32
  }
  func.func @transform_2(%arg0: i32, %arg1: i32) -> (i32, i32) {
    %c0_i32 = arith.constant 0 : i32
    %c0_i32_0 = arith.constant 0 : i32
    %c0_i32_1 = arith.constant 0 : i32
    return %c0_i32, %c0_i32_0 : i32, i32
  }
  func.func @transform_3(%arg0: i32, %arg1: i32) -> (i32, i32) {
    %c0_i32 = arith.constant 0 : i32
    %c0_i32_0 = arith.constant 0 : i32
    %c0_i32_1 = arith.constant 0 : i32
    return %c0_i32, %c0_i32_0 : i32, i32
  }
  func.func @transform_4(%arg0: i32, %arg1: i32) -> (i32, i32) {
    %c0_i32 = arith.constant 0 : i32
    %c0_i32_0 = arith.constant 0 : i32
    %c0_i32_1 = arith.constant 0 : i32
    return %c0_i32, %c0_i32_0 : i32, i32
  }
  func.func @transform_5(%arg0: i32, %arg1: i32) -> (i32, i32) {
    %c0_i32 = arith.constant 0 : i32
    %c0_i32_0 = arith.constant 0 : i32
    %c0_i32_1 = arith.constant 0 : i32
    return %c0_i32, %c0_i32_0 : i32, i32
  }
  func.func @transform_6(%arg0: i32, %arg1: i32) -> (i32, i32) {
    %c0_i32 = arith.constant 0 : i32
    %c0_i32_0 = arith.constant 0 : i32
    %c0_i32_1 = arith.constant 0 : i32
    return %c0_i32, %c0_i32_0 : i32, i32
  }
  func.func @transform_7(%arg0: i32, %arg1: i32) -> (i32, i32) {
    %c0_i32 = arith.constant 0 : i32
    %c0_i32_0 = arith.constant 0 : i32
    %c0_i32_1 = arith.constant 0 : i32
    return %c0_i32, %c0_i32_0 : i32, i32
  }
  func.func @transform_8(%arg0: i32, %arg1: i32) -> (i32, i32) {
    %c0_i32 = arith.constant 0 : i32
    %c0_i32_0 = arith.constant 0 : i32
    %c0_i32_1 = arith.constant 0 : i32
    return %c0_i32, %c0_i32_0 : i32, i32
  }
  func.func @transform_9(%arg0: i32, %arg1: i32) -> (i32, i32) {
    %c0_i32 = arith.constant 0 : i32
    %c0_i32_0 = arith.constant 0 : i32
    %c0_i32_1 = arith.constant 0 : i32
    return %c0_i32, %c0_i32_0 : i32, i32
  }
  func.func @transform_10(%arg0: i32, %arg1: i32) -> (i32, i32, i32) {
    %c0_i32 = arith.constant 0 : i32
    %c0_i32_0 = arith.constant 0 : i32
    return %arg0, %c0_i32, %arg1 : i32, i32, i32
  }
}

</mosaic_0001>

<llo_original>
// kernel: unet_up4_forward.1
$region0: #{unet_up4_forward.1}
  #allocation0 [shape = 'u32[]', space=smem, size = 0x4, offset = 0x4, fixed_abs, tag = 'smem constant byte address 0x4 - core index']
  #allocation1 [shape = 'u32[144,128]{1,0:T(1,128)}', space=vmem, size = 0x12000, scoped, tag = 'internal scratch']
  #allocation2 [shape = 'bf16[8,12,18]{2,1,0:T(8,128)(2,1)}', space=vmem, size = 0x8000, scoped, tag = 'scratch operand']
  #allocation3 [shape = 'bf16[4,10,18]{2,1,0:T(8,128)(2,1)}', space=vmem, size = 0x4000, scoped, tag = 'scratch operand']
  %s0 = inlined_call_operand.vmem [shape: bf16[2,8,16], index: 0, kind: input, shape index: {}]
  %s1 = inlined_call_operand.vmem [shape: bf16[2,4,20,16], index: 1, kind: input, shape index: {}]
  %s2 = inlined_call_operand.vmem [shape: bf16[20,4], index: 2, kind: input, shape index: {}]
  %s3 = inlined_call_operand.vmem [shape: bf16[4,16], index: 3, kind: input, shape index: {}]
  %s4 = inlined_call_operand.vmem [shape: bf16[4,8], index: 4, kind: input, shape index: {}]
  %s5 = inlined_call_operand.vmem [shape: f32[4,1], index: 5, kind: input, shape index: {}]
  %s6 = inlined_call_operand.vmem [shape: bf16[4,72], index: 6, kind: input, shape index: {}]
  %s7 = inlined_call_operand.vmem [shape: f32[4,1], index: 7, kind: input, shape index: {}]
  %s8 = inlined_call_operand.vmem [shape: bf16[4,36], index: 8, kind: input, shape index: {}]
  %s9 = inlined_call_operand.vmem [shape: f32[4,1], index: 9, kind: input, shape index: {}]
  %s10 = inlined_call_operand.vmem [shape: f32[2,4,256], index: 10, kind: output, shape index: {}]
  %s11 = sld [smem:[#allocation0]]
  $region73: #{unet_up4_forward.1} parent=0
    _
  %s13 = ssub.s32 1, %s11
  %s14 = scalar_select 0, %s13, %s11
  loop: start=0, step=1, limit=6
  $region2: #{unet_up4_forward.1} parent=0 // loop_pre_header
    _
  $region3: #{unet_up4_forward.1} parent=0 // loop_header
    %s16 = sphi 0, %s20
    %p17 = scmp.ge.s32.totalorder %s16, 6
    %s23 = sphi 0, %s35
    %s24 = sphi 0, %s31
    %s25 = sphi 0, %s23
    %s26 = sphi 0, %s24
    %s27 = sphi 0, %s25
    %s28 = sphi 0, %s26
    %s38 = sphi 0, %s40
    %s41 = sphi 0, %s38
    %s42 = sphi 0, %s41
    %s58 = sphi 0, %s42
    %s64 = sphi 0, %s66
    %s67 = sphi 0, %s64
    %s68 = sphi 0, %s67
    %s84 = sphi 0, %s68
    %s88 = sphi 0, %s88
    %s90 = sphi 0, %s88
    %s91 = sphi 0, %s90
    %s105 = sphi 0, %s91
    %s109 = sphi 0, %s109
    %s111 = sphi 0, %s109
    %s112 = sphi 0, %s111
    %s126 = sphi 0, %s112
    %s130 = sphi 0, %s130
    %s132 = sphi 0, %s130
    %s133 = sphi 0, %s132
    %s147 = sphi 0, %s133
    %s151 = sphi 0, %s151
    %s153 = sphi 0, %s151
    %s154 = sphi 0, %s153
    %s168 = sphi 0, %s154
    %s172 = sphi 0, %s172
    %s174 = sphi 0, %s172
    %s175 = sphi 0, %s174
    %s189 = sphi 0, %s175
    %s193 = sphi 0, %s193
    %s195 = sphi 0, %s193
    %s196 = sphi 0, %s195
    %s210 = sphi 0, %s196
    %s214 = sphi 0, %s214
    %s216 = sphi 0, %s214
    %s217 = sphi 0, %s216
    %s231 = sphi 0, %s217
    %s235 = sphi 0, %s235
    %s237 = sphi 0, %s235
    %s238 = sphi 0, %s237
    %s252 = sphi 0, %s238
    %s260 = sphi 0, %s262
    %s263 = sphi 0, %s260
    %s264 = sphi 0, %s263
    %s280 = sphi 0, %s264
  $region4: #{unet_up4_forward.1} parent=0 // loop_header_branch
    %19 = sbr.rel (%p17) target = $region8
  $region5: #{unet_up4_forward.1} parent=0 // loop_body
    %s21 = ssub.s32 %s16, 1
    %s22 = ssub.s32 %s16, 2
    %s29 = sadd.s32 1, %s24
    %p30 = scmp.ge.s32.totalorder %s29, 2
    %s31 = scalar_select %p30, 0, %s29
    %s32 = sadd.s32 1, %s23
    %s33 = scalar_select %p30, %s32, %s23
    %p34 = scmp.ge.s32.totalorder %s33, 2
    %s35 = scalar_select %p34, 0, %s33
    %s36 = ssub.s32 %s23, %s35
    %p37 = scmp.eq.s32.totalorder %s36, 0
    %s39 = sadd.s32 %s38, 1
    %s40 = scalar_select %p37, %s38, %s39
    %p43 = pneg %p37
    %p44 = scmp.eq.s32.totalorder %s16, 3
    %p45 = por %p43, %p44
    %p46 = scmp.ne.s32.totalorder %s38, %s41
    %p47 = scmp.eq.s32.totalorder %s16, 0
    %p48 = por %p46, %p47
    %p49 = scmp.ne.s32.totalorder %s38, %s41
    %p50 = scmp.eq.s32.totalorder %s21, 3
    %p51 = por %p49, %p50
    %p52 = scmp.ne.s32.totalorder %s41, %s42
    %p53 = scmp.eq.s32.totalorder %s21, 0
    %p54 = por %p52, %p53
    %p55 = scmp.ne.s32.totalorder %s41, %s42
    %p56 = scmp.eq.s32.totalorder %s22, 3
    %p57 = por %p55, %p56
    %p59 = scmp.ne.s32.totalorder %s42, %s58
    %p60 = scmp.eq.s32.totalorder %s22, 0
    %p61 = por %p59, %p60
    %s62 = ssub.s32 %s23, %s35
    %p63 = scmp.eq.s32.totalorder %s62, 0
    %s65 = sadd.s32 %s64, 1
    %s66 = scalar_select %p63, %s64, %s65
    %p69 = pneg %p63
    %p70 = scmp.eq.s32.totalorder %s16, 3
    %p71 = por %p69, %p70
    %p72 = scmp.ne.s32.totalorder %s64, %s67
    %p73 = scmp.eq.s32.totalorder %s16, 0
    %p74 = por %p72, %p73
    %p75 = scmp.ne.s32.totalorder %s64, %s67
    %p76 = scmp.eq.s32.totalorder %s21, 3
    %p77 = por %p75, %p76
    %p78 = scmp.ne.s32.totalorder %s67, %s68
    %p79 = scmp.eq.s32.totalorder %s21, 0
    %p80 = por %p78, %p79
    %p81 = scmp.ne.s32.totalorder %s67, %s68
    %p82 = scmp.eq.s32.totalorder %s22, 3
    %p83 = por %p81, %p82
    %p85 = scmp.ne.s32.totalorder %s68, %s84
    %p86 = scmp.eq.s32.totalorder %s22, 0
    %p87 = por %p85, %p86
    %s89 = sadd.s32 %s88, 1
    %p92 = scmp.eq.s32.totalorder %s16, 3
    %p93 = scmp.ne.s32.totalorder %s88, %s90
    %p94 = scmp.eq.s32.totalorder %s16, 0
    %p95 = por %p93, %p94
    %p96 = scmp.ne.s32.totalorder %s88, %s90
    %p97 = scmp.eq.s32.totalorder %s21, 3
    %p98 = por %p96, %p97
    %p99 = scmp.ne.s32.totalorder %s90, %s91
    %p100 = scmp.eq.s32.totalorder %s21, 0
    %p101 = por %p99, %p100
    %p102 = scmp.ne.s32.totalorder %s90, %s91
    %p103 = scmp.eq.s32.totalorder %s22, 3
    %p104 = por %p102, %p103
    %p106 = scmp.ne.s32.totalorder %s91, %s105
    %p107 = scmp.eq.s32.totalorder %s22, 0
    %p108 = por %p106, %p107
    %s110 = sadd.s32 %s109, 1
    %p113 = scmp.eq.s32.totalorder %s16, 3
    %p114 = scmp.ne.s32.totalorder %s109, %s111
    %p115 = scmp.eq.s32.totalorder %s16, 0
    %p116 = por %p114, %p115
    %p117 = scmp.ne.s32.totalorder %s109, %s111
    %p118 = scmp.eq.s32.totalorder %s21, 3
    %p119 = por %p117, %p118
    %p120 = scmp.ne.s32.totalorder %s111, %s112
    %p121 = scmp.eq.s32.totalorder %s21, 0
    %p122 = por %p120, %p121
    %p123 = scmp.ne.s32.totalorder %s111, %s112
    %p124 = scmp.eq.s32.totalorder %s22, 3
    %p125 = por %p123, %p124
    %p127 = scmp.ne.s32.totalorder %s112, %s126
    %p128 = scmp.eq.s32.totalorder %s22, 0
    %p129 = por %p127, %p128
    %s131 = sadd.s32 %s130, 1
    %p134 = scmp.eq.s32.totalorder %s16, 3
    %p135 = scmp.ne.s32.totalorder %s130, %s132
    %p136 = scmp.eq.s32.totalorder %s16, 0
    %p137 = por %p135, %p136
    %p138 = scmp.ne.s32.totalorder %s130, %s132
    %p139 = scmp.eq.s32.totalorder %s21, 3
    %p140 = por %p138, %p139
    %p141 = scmp.ne.s32.totalorder %s132, %s133
    %p142 = scmp.eq.s32.totalorder %s21, 0
    %p143 = por %p141, %p142
    %p144 = scmp.ne.s32.totalorder %s132, %s133
    %p145 = scmp.eq.s32.totalorder %s22, 3
    %p146 = por %p144, %p145
    %p148 = scmp.ne.s32.totalorder %s133, %s147
    %p149 = scmp.eq.s32.totalorder %s22, 0
    %p150 = por %p148, %p149
    %s152 = sadd.s32 %s151, 1
    %p155 = scmp.eq.s32.totalorder %s16, 3
    %p156 = scmp.ne.s32.totalorder %s151, %s153
    %p157 = scmp.eq.s32.totalorder %s16, 0
    %p158 = por %p156, %p157
    %p159 = scmp.ne.s32.totalorder %s151, %s153
    %p160 = scmp.eq.s32.totalorder %s21, 3
    %p161 = por %p159, %p160
    %p162 = scmp.ne.s32.totalorder %s153, %s154
    %p163 = scmp.eq.s32.totalorder %s21, 0
    %p164 = por %p162, %p163
    %p165 = scmp.ne.s32.totalorder %s153, %s154
    %p166 = scmp.eq.s32.totalorder %s22, 3
    %p167 = por %p165, %p166
    %p169 = scmp.ne.s32.totalorder %s154, %s168
    %p170 = scmp.eq.s32.totalorder %s22, 0
    %p171 = por %p169, %p170
    %s173 = sadd.s32 %s172, 1
    %p176 = scmp.eq.s32.totalorder %s16, 3
    %p177 = scmp.ne.s32.totalorder %s172, %s174
    %p178 = scmp.eq.s32.totalorder %s16, 0
    %p179 = por %p177, %p178
    %p180 = scmp.ne.s32.totalorder %s172, %s174
    %p181 = scmp.eq.s32.totalorder %s21, 3
    %p182 = por %p180, %p181
    %p183 = scmp.ne.s32.totalorder %s174, %s175
    %p184 = scmp.eq.s32.totalorder %s21, 0
    %p185 = por %p183, %p184
    %p186 = scmp.ne.s32.totalorder %s174, %s175
    %p187 = scmp.eq.s32.totalorder %s22, 3
    %p188 = por %p186, %p187
    %p190 = scmp.ne.s32.totalorder %s175, %s189
    %p191 = scmp.eq.s32.totalorder %s22, 0
    %p192 = por %p190, %p191
    %s194 = sadd.s32 %s193, 1
    %p197 = scmp.eq.s32.totalorder %s16, 3
    %p198 = scmp.ne.s32.totalorder %s193, %s195
    %p199 = scmp.eq.s32.totalorder %s16, 0
    %p200 = por %p198, %p199
    %p201 = scmp.ne.s32.totalorder %s193, %s195
    %p202 = scmp.eq.s32.totalorder %s21, 3
    %p203 = por %p201, %p202
    %p204 = scmp.ne.s32.totalorder %s195, %s196
    %p205 = scmp.eq.s32.totalorder %s21, 0
    %p206 = por %p204, %p205
    %p207 = scmp.ne.s32.totalorder %s195, %s196
    %p208 = scmp.eq.s32.totalorder %s22, 3
    %p209 = por %p207, %p208
    %p211 = scmp.ne.s32.totalorder %s196, %s210
    %p212 = scmp.eq.s32.totalorder %s22, 0
    %p213 = por %p211, %p212
    %s215 = sadd.s32 %s214, 1
    %p218 = scmp.eq.s32.totalorder %s16, 3
    %p219 = scmp.ne.s32.totalorder %s214, %s216
    %p220 = scmp.eq.s32.totalorder %s16, 0
    %p221 = por %p219, %p220
    %p222 = scmp.ne.s32.totalorder %s214, %s216
    %p223 = scmp.eq.s32.totalorder %s21, 3
    %p224 = por %p222, %p223
    %p225 = scmp.ne.s32.totalorder %s216, %s217
    %p226 = scmp.eq.s32.totalorder %s21, 0
    %p227 = por %p225, %p226
    %p228 = scmp.ne.s32.totalorder %s216, %s217
    %p229 = scmp.eq.s32.totalorder %s22, 3
    %p230 = por %p228, %p229
    %p232 = scmp.ne.s32.totalorder %s217, %s231
    %p233 = scmp.eq.s32.totalorder %s22, 0
    %p234 = por %p232, %p233
    %s236 = sadd.s32 %s235, 1
    %p239 = scmp.eq.s32.totalorder %s16, 3
    %p240 = scmp.ne.s32.totalorder %s235, %s237
    %p241 = scmp.eq.s32.totalorder %s16, 0
    %p242 = por %p240, %p241
    %p243 = scmp.ne.s32.totalorder %s235, %s237
    %p244 = scmp.eq.s32.totalorder %s21, 3
    %p245 = por %p243, %p244
    %p246 = scmp.ne.s32.totalorder %s237, %s238
    %p247 = scmp.eq.s32.totalorder %s21, 0
    %p248 = por %p246, %p247
    %p249 = scmp.ne.s32.totalorder %s237, %s238
    %p250 = scmp.eq.s32.totalorder %s22, 3
    %p251 = por %p249, %p250
    %p253 = scmp.ne.s32.totalorder %s238, %s252
    %p254 = scmp.eq.s32.totalorder %s22, 0
    %p255 = por %p253, %p254
    %s256 = ssub.s32 %s23, %s35
    %s257 = ssub.s32 %s24, %s31
    %s258 = sor.u32 %s256, %s257
    %p259 = scmp.eq.s32.totalorder %s258, 0
    %s261 = sadd.s32 %s260, 1
    %s262 = scalar_select %p259, %s260, %s261
    %p265 = pneg %p259
    %p266 = scmp.eq.s32.totalorder %s16, 3
    %p267 = por %p265, %p266
    %p268 = scmp.ne.s32.totalorder %s260, %s263
    %p269 = scmp.eq.s32.totalorder %s16, 0
    %p270 = por %p268, %p269
    %p271 = scmp.ne.s32.totalorder %s260, %s263
    %p272 = scmp.eq.s32.totalorder %s21, 3
    %p273 = por %p271, %p272
    %p274 = scmp.ne.s32.totalorder %s263, %s264
    %p275 = scmp.eq.s32.totalorder %s21, 0
    %p276 = por %p274, %p275
    %p277 = scmp.ne.s32.totalorder %s263, %s264
    %p278 = scmp.eq.s32.totalorder %s22, 3
    %p279 = por %p277, %p278
    %p281 = scmp.ne.s32.totalorder %s264, %s280
    %p282 = scmp.eq.s32.totalorder %s22, 0
    %p283 = por %p281, %p282
    %p284 = scmp.le.s32.totalorder 1, %s16
    %p285 = scmp.lt.s32.totalorder %s16, 5
    %p286 = pnand %p284, %p285
    %p287 = pneg %p286
    // Predicated region
    $region9: #{unet_up4_forward.1} parent=5 // pred_check
      _
    $region10: #{unet_up4_forward.1} parent=5 // pred_check_branch
      %289 = sbr.rel (%p286) target = $region12
    $region11: #{unet_up4_forward.1} parent=5 // pred_region
      %s290 = ssub.s32 %s16, 1
      // Predicated region
      $region13: #{unet_up4_forward.1} parent=11 // pred_check
        %p291 = pneg %p101
      $region14: #{unet_up4_forward.1} parent=11 // pred_check_branch
        %293 = sbr.rel (%p291) target = $region16
      $region15: #{unet_up4_forward.1} parent=11 // pred_region
        _
      $region16: #{unet_up4_forward.1} parent=11 // pred_fallthru
        _
      // Predicated region
      $region17: #{unet_up4_forward.1} parent=11 // pred_check
        %p294 = pneg %p122
      $region18: #{unet_up4_forward.1} parent=11 // pred_check_branch
        %296 = sbr.rel (%p294) target = $region20
      $region19: #{unet_up4_forward.1} parent=11 // pred_region
        _
      $region20: #{unet_up4_forward.1} parent=11 // pred_fallthru
        _
      // Predicated region
      $region21: #{unet_up4_forward.1} parent=11 // pred_check
        %p297 = pneg %p143
      $region22: #{unet_up4_forward.1} parent=11 // pred_check_branch
        %299 = sbr.rel (%p297) target = $region24
      $region23: #{unet_up4_forward.1} parent=11 // pred_region
        _
      $region24: #{unet_up4_forward.1} parent=11 // pred_fallthru
        _
      // Predicated region
      $region25: #{unet_up4_forward.1} parent=11 // pred_check
        %p300 = pneg %p164
      $region26: #{unet_up4_forward.1} parent=11 // pred_check_branch
        %302 = sbr.rel (%p300) target = $region28
      $region27: #{unet_up4_forward.1} parent=11 // pred_region
        _
      $region28: #{unet_up4_forward.1} parent=11 // pred_fallthru
        _
      // Predicated region
      $region29: #{unet_up4_forward.1} parent=11 // pred_check
        %p303 = pneg %p185
      $region30: #{unet_up4_forward.1} parent=11 // pred_check_branch
        %305 = sbr.rel (%p303) target = $region32
      $region31: #{unet_up4_forward.1} parent=11 // pred_region
        _
      $region32: #{unet_up4_forward.1} parent=11 // pred_fallthru
        _
      // Predicated region
      $region33: #{unet_up4_forward.1} parent=11 // pred_check
        %p306 = pneg %p206
      $region34: #{unet_up4_forward.1} parent=11 // pred_check_branch
        %308 = sbr.rel (%p306) target = $region36
      $region35: #{unet_up4_forward.1} parent=11 // pred_region
        _
      $region36: #{unet_up4_forward.1} parent=11 // pred_fallthru
        _
      // Predicated region
      $region37: #{unet_up4_forward.1} parent=11 // pred_check
        %p309 = pneg %p227
      $region38: #{unet_up4_forward.1} parent=11 // pred_check_branch
        %311 = sbr.rel (%p309) target = $region40
      $region39: #{unet_up4_forward.1} parent=11 // pred_region
        _
      $region40: #{unet_up4_forward.1} parent=11 // pred_fallthru
        _
      // Predicated region
      $region41: #{unet_up4_forward.1} parent=11 // pred_check
        %p312 = pneg %p248
      $region42: #{unet_up4_forward.1} parent=11 // pred_check_branch
        %314 = sbr.rel (%p312) target = $region44
      $region43: #{unet_up4_forward.1} parent=11 // pred_region
        _
      $region44: #{unet_up4_forward.1} parent=11 // pred_fallthru
        _
    $region12: #{unet_up4_forward.1} parent=5 // pred_fallthru
      _
    %p315 = scmp.lt.s32.totalorder %s16, 4
    // Predicated region
    $region45: #{unet_up4_forward.1} parent=5 // pred_check
      %p316 = pneg %p315
    $region46: #{unet_up4_forward.1} parent=5 // pred_check_branch
      %318 = sbr.rel (%p316) target = $region48
    $region47: #{unet_up4_forward.1} parent=5 // pred_region
      // Predicated region
      $region49: #{unet_up4_forward.1} parent=47 // pred_check
        %p319 = pneg %p48
      $region50: #{unet_up4_forward.1} parent=47 // pred_check_branch
        %321 = sbr.rel (%p319) target = $region52
      $region51: #{unet_up4_forward.1} parent=47 // pred_region
        %p322 = scmp.lt.s32.totalorder %s23, 1
        %s323 = scalar_select %p322, %s23, 1
        %s324 = smul.addr %s323, 4
        %s325 = scalar_lea.vmem %s0, %s324
      $region52: #{unet_up4_forward.1} parent=47 // pred_fallthru
        _
      // Predicated region
      $region53: #{unet_up4_forward.1} parent=47 // pred_check
        %p326 = pneg %p74
      $region54: #{unet_up4_forward.1} parent=47 // pred_check_branch
        %328 = sbr.rel (%p326) target = $region56
      $region55: #{unet_up4_forward.1} parent=47 // pred_region
        %p329 = scmp.lt.s32.totalorder %s23, 1
        %s330 = scalar_select %p329, %s23, 1
        %s331 = smul.addr %s330, 12
        %s332 = smul.addr %s331, 4
        %s333 = scalar_lea.vmem %s1, %s332
      $region56: #{unet_up4_forward.1} parent=47 // pred_fallthru
        _
    $region48: #{unet_up4_forward.1} parent=5 // pred_fallthru
      _
    %p334 = scmp.le.s32.totalorder 1, %s16
    %p335 = scmp.lt.s32.totalorder %s16, 5
    %p336 = pnand %p334, %p335
    %p337 = pneg %p336
    // Predicated region
    $region57: #{unet_up4_forward.1} parent=5 // pred_check
      _
    $region58: #{unet_up4_forward.1} parent=5 // pred_check_branch
      %339 = sbr.rel (%p336) target = $region60
    $region59: #{unet_up4_forward.1} parent=5 // pred_region
      %s340 = ssub.s32 %s16, 1
      %p341 = scmp.lt.s32.totalorder %s25, 1
      %s342 = scalar_select %p341, %s25, 1
      %s343 = smul.addr %s342, 4
      %s344 = scalar_lea.vmem %s0, %s343
      %p345 = pneg %p54
      %p346 = pneg %p51
      %p347 = scmp.lt.s32.totalorder %s25, 1
      %s348 = scalar_select %p347, %s25, 1
      %s349 = smul.addr %s348, 12
      %s350 = smul.addr %s349, 4
      %s351 = scalar_lea.vmem %s1, %s350
      %p352 = pneg %p80
      %p353 = pneg %p77
      %p354 = pneg %p101
      %p355 = pneg %p98
      %p356 = pneg %p122
      %p357 = pneg %p119
      %p358 = pneg %p143
      %p359 = pneg %p140
      %p360 = pneg %p164
      %p361 = pneg %p161
      %p362 = pneg %p185
      %p363 = pneg %p182
      %p364 = pneg %p206
      %p365 = pneg %p203
      %p366 = pneg %p227
      %p367 = pneg %p224
      %p368 = pneg %p248
      %p369 = pneg %p245
      %p370 = pneg %p276
      %p371 = pneg %p273
      %p372 = scmp.lt.s32.totalorder %s25, 1
      %s373 = scalar_select %p372, %s25, 1
      %p374 = scmp.lt.s32.totalorder %s26, 1
      %s375 = scalar_select %p374, %s26, 1
      %s376 = smul.addr %s373, 2
      %s377 = sadd.s32 %s375, %s376
      %s378 = smul.addr %s377, 4
      %s379 = scalar_lea.vmem %s10, %s378
      %p380 = scmp.lt.s32.totalorder %s25, 1
      %s381 = scalar_select %p380, %s25, 1
      %s382 = smul.addr %s381, 4
      %s383 = scalar_lea.vmem %s0, %s382
      %p384 = scmp.lt.s32.totalorder %s25, 1
      %s385 = scalar_select %p384, %s25, 1
      %s386 = smul.addr %s385, 12
      %s387 = smul.addr %s386, 4
      %s388 = scalar_lea.vmem %s1, %s387
      %p389 = scmp.lt.s32.totalorder %s25, 1
      %s390 = scalar_select %p389, %s25, 1
      %p391 = scmp.lt.s32.totalorder %s26, 1
      %s392 = scalar_select %p391, %s26, 1
      %s393 = smul.addr %s390, 2
      %s394 = sadd.s32 %s392, %s393
      %s395 = smul.addr %s394, 4
      %s396 = scalar_lea.vmem %s10, %s395
      %s398 = smul.u32 %s26, 8
      %v399 = vld [vmem:[%s4] sm:$0x3]
      %v400 = vld [vmem:[%s383] sm:$0xf]
      %v401 = vld [vmem:[%s5] sm:$0xf]
      %403 = vset.pattern.permute.xlu0 0
      %404 = vperm.xlu0 %403, %v401
      %v405 = vpop.permute.xlu0 %404
      %vm407 = vcmask 64512
      %v409 = vsel %vm407, %v399, 0
      %vm411 = vcmask 1043456
      %v413 = vsel %vm411, %v400, 0
      %415 = vmatprep.subr.bf16.mxu0 0
      %416 = vmatpush1.bf16.msra.mxu0 %v413
      %417 = vmatprep.subr.bf16.mxu0 0
      %418 = vmatpush1.bf16.msra.mxu0 0
      %419 = vmatprep.subr.bf16.mxu0 0
      %420 = vmatpush1.bf16.msra.mxu0 0
      %421 = vmatprep.subr.bf16.mxu0 0
      %422 = vmatpush1.bf16.msra.mxu0 0
      %423 = vmatprep.subr.bf16.mxu0 0
      %424 = vmatpush1.bf16.msra.mxu0 0
      %425 = vmatprep.subr.bf16.mxu0 0
      %426 = vmatpush1.bf16.msra.mxu0 0
      %427 = vmatprep.subr.bf16.mxu0 0
      %428 = vmatpush1.bf16.msra.mxu0 0
      %429 = vmatprep.subr.bf16.mxu0 0
      %430 = vmatpush1.bf16.msra.mxu0 0
      %431 = vmatprep.subr.bf16.mxu0 0
      %432 = vmatpush1.bf16.msra.mxu0 0
      %433 = vmatprep.subr.bf16.mxu0 0
      %434 = vmatpush1.bf16.msra.mxu0 0
      %435 = vmatprep.subr.bf16.mxu0 0
      %436 = vmatpush1.bf16.msra.mxu0 0
      %437 = vmatprep.subr.bf16.mxu0 0
      %438 = vmatpush1.bf16.msra.mxu0 0
      %439 = vmatprep.subr.bf16.mxu0 0
      %440 = vmatpush1.bf16.msra.mxu0 0
      %441 = vmatprep.subr.bf16.mxu0 0
      %442 = vmatpush1.bf16.msra.mxu0 0
      %443 = vmatprep.subr.bf16.mxu0 0
      %444 = vmatpush1.bf16.msra.mxu0 0
      %445 = vmatprep.subr.bf16.mxu0 0
      %446 = vmatpush1.bf16.msra.mxu0 0
      %447 = vmatprep.mubr.bf16.mxu0 0
      %448 = vmatmul.mubr.bf16.gmra.mrb[0].mxu0 %v409
      %v449 = vpop.f32.mrb[0].mxu0
      %v450 = vadd.f32 %v405, %v449
      %v451 = vpop.f32.mrb[0].mxu0
      %v452 = vpop.f32.mrb[0].mxu0
      %v453 = vpop.f32.mrb[0].mxu0
      %454 = vdwg.mxu0
      %v455 = vpack.c.bf16 %v450, %v450
      %457 = vrot.lane.b32.xlu0 %v455, 124
      %v458 = vpop.permute.xlu0 %457
      %459 = vrot.lane.b32.xlu0 %v455, 120
      %v460 = vpop.permute.xlu0 %459
      %461 = vrot.lane.b32.xlu0 %v455, 116
      %v462 = vpop.permute.xlu0 %461
      %v464 = vcombine.low %v455, %v460
      %v466 = vunpack.c.l.s4 1934713408
      %v467 = vunpack.c.0.s8 %v466
      %v468 = vlaneseq
      %v469 = vshrl.u32 %v468, 7
      %v470 = vsub.s32 %v467, %v469
      %v471 = vrot.slane %v464, %v470
      %v472 = vcombine.high %v471, 0
      %v475 = vcombine.low %v458, %v462
      %v477 = vunpack.c.l.s4 1934713408
      %v478 = vunpack.c.0.s8 %v477
      %v479 = vlaneseq
      %v480 = vshrl.u32 %v479, 7
      %v481 = vsub.s32 %v478, %v480
      %v482 = vrot.slane %v475, %v481
      %v483 = vcombine.high %v482, 0
      %v486 = vpack.i.b16 %v482, %v471
      %v487 = vshrl.u32 %v471, 16
      %v488 = vshrl.u32 %v482, 16
      %v489 = vpack.i.b16 %v488, %v487
      %v492 = vpack.i.b16 %v483, %v472
      %v493 = vshrl.u32 %v472, 16
      %v494 = vshrl.u32 %v483, 16
      %v495 = vpack.i.b16 %v494, %v493
      %s496 = sshra.s32 %s398, 3
      %s497 = sand.u32 %s398, 7
      %s498 = smul.addr %s496, 4
      %s499 = scalar_lea.vmem %s2, %s498
      %v500 = vld [vmem:[%s499] sm:$0xf]
      %v501 = vld [vmem:[%s499 + $0x4] sm:$0x3]
      %v504 = vunpack.c.l.b16 %v500
      %v505 = vunpack.c.l.b16 %v501
      %v506 = vpack.c.b16 %v505, %v504
      %vm507 = vcmask 31744
      %v509 = vsel %vm507, %v506, 0
      %vm511 = vcmask 1041408
      %v513 = vsel %vm511, %v486, 0
      %515 = vmatprep.subr.bf16.mxu0 0
      %516 = vmatpush1.bf16.msra.mxu0 %v513
      %517 = vmatprep.subr.bf16.mxu0 0
      %518 = vmatpush1.bf16.msra.mxu0 0
      %519 = vmatprep.subr.bf16.mxu0 0
      %520 = vmatpush1.bf16.msra.mxu0 0
      %521 = vmatprep.subr.bf16.mxu0 0
      %522 = vmatpush1.bf16.msra.mxu0 0
      %523 = vmatprep.subr.bf16.mxu0 0
      %524 = vmatpush1.bf16.msra.mxu0 0
      %525 = vmatprep.subr.bf16.mxu0 0
      %526 = vmatpush1.bf16.msra.mxu0 0
      %527 = vmatprep.subr.bf16.mxu0 0
      %528 = vmatpush1.bf16.msra.mxu0 0
      %529 = vmatprep.subr.bf16.mxu0 0
      %530 = vmatpush1.bf16.msra.mxu0 0
      %531 = vmatprep.subr.bf16.mxu0 0
      %532 = vmatpush1.bf16.msra.mxu0 0
      %533 = vmatprep.subr.bf16.mxu0 0
      %534 = vmatpush1.bf16.msra.mxu0 0
      %535 = vmatprep.subr.bf16.mxu0 0
      %536 = vmatpush1.bf16.msra.mxu0 0
      %537 = vmatprep.subr.bf16.mxu0 0
      %538 = vmatpush1.bf16.msra.mxu0 0
      %539 = vmatprep.subr.bf16.mxu0 0
      %540 = vmatpush1.bf16.msra.mxu0 0
      %541 = vmatprep.subr.bf16.mxu0 0
      %542 = vmatpush1.bf16.msra.mxu0 0
      %543 = vmatprep.subr.bf16.mxu0 0
      %544 = vmatpush1.bf16.msra.mxu0 0
      %545 = vmatprep.subr.bf16.mxu0 0
      %546 = vmatpush1.bf16.msra.mxu0 0
      %547 = vmatprep.mubr.bf16.mxu0 0
      %548 = vmatmul.mubr.bf16.gmra.mrb[0].mxu0 %v509
      %v549 = vpop.f32.mrb[0].mxu0
      %v550 = vadd.f32 0.0, %v549
      %v551 = vpop.f32.mrb[0].mxu0
      %v552 = vpop.f32.mrb[0].mxu0
      %v553 = vadd.f32 0.0, %v552
      %v554 = vpop.f32.mrb[0].mxu0
      %555 = vdwg.mxu0
      %v557 = vsel %vm511, %v489, 0
      %559 = vmatprep.subr.bf16.mxu0 0
      %560 = vmatpush1.bf16.msra.mxu0 %v557
      %561 = vmatprep.subr.bf16.mxu0 0
      %562 = vmatpush1.bf16.msra.mxu0 0
      %563 = vmatprep.subr.bf16.mxu0 0
      %564 = vmatpush1.bf16.msra.mxu0 0
      %565 = vmatprep.subr.bf16.mxu0 0
      %566 = vmatpush1.bf16.msra.mxu0 0
      %567 = vmatprep.subr.bf16.mxu0 0
      %568 = vmatpush1.bf16.msra.mxu0 0
      %569 = vmatprep.subr.bf16.mxu0 0
      %570 = vmatpush1.bf16.msra.mxu0 0
      %571 = vmatprep.subr.bf16.mxu0 0
      %572 = vmatpush1.bf16.msra.mxu0 0
      %573 = vmatprep.subr.bf16.mxu0 0
      %574 = vmatpush1.bf16.msra.mxu0 0
      %575 = vmatprep.subr.bf16.mxu0 0
      %576 = vmatpush1.bf16.msra.mxu0 0
      %577 = vmatprep.subr.bf16.mxu0 0
      %578 = vmatpush1.bf16.msra.mxu0 0
      %579 = vmatprep.subr.bf16.mxu0 0
      %580 = vmatpush1.bf16.msra.mxu0 0
      %581 = vmatprep.subr.bf16.mxu0 0
      %582 = vmatpush1.bf16.msra.mxu0 0
      %583 = vmatprep.subr.bf16.mxu0 0
      %584 = vmatpush1.bf16.msra.mxu0 0
      %585 = vmatprep.subr.bf16.mxu0 0
      %586 = vmatpush1.bf16.msra.mxu0 0
      %587 = vmatprep.subr.bf16.mxu0 0
      %588 = vmatpush1.bf16.msra.mxu0 0
      %589 = vmatprep.subr.bf16.mxu0 0
      %590 = vmatpush1.bf16.msra.mxu0 0
      %591 = vmatprep.mubr.bf16.mxu0 0
      %592 = vmatmul.mubr.bf16.gmra.mrb[0].mxu0 %v509
      %v593 = vpop.f32.mrb[0].mxu0
      %v594 = vadd.f32 0.0, %v593
      %v595 = vpop.f32.mrb[0].mxu0
      %v596 = vpop.f32.mrb[0].mxu0
      %v597 = vadd.f32 0.0, %v596
      %v598 = vpop.f32.mrb[0].mxu0
      %599 = vdwg.mxu0
      %v601 = vsel %vm511, %v492, 0
      %603 = vmatprep.subr.bf16.mxu0 0
      %604 = vmatpush1.bf16.msra.mxu0 %v601
      %605 = vmatprep.subr.bf16.mxu0 0
      %606 = vmatpush1.bf16.msra.mxu0 0
      %607 = vmatprep.subr.bf16.mxu0 0
      %608 = vmatpush1.bf16.msra.mxu0 0
      %609 = vmatprep.subr.bf16.mxu0 0
      %610 = vmatpush1.bf16.msra.mxu0 0
      %611 = vmatprep.subr.bf16.mxu0 0
      %612 = vmatpush1.bf16.msra.mxu0 0
      %613 = vmatprep.subr.bf16.mxu0 0
      %614 = vmatpush1.bf16.msra.mxu0 0
      %615 = vmatprep.subr.bf16.mxu0 0
      %616 = vmatpush1.bf16.msra.mxu0 0
      %617 = vmatprep.subr.bf16.mxu0 0
      %618 = vmatpush1.bf16.msra.mxu0 0
      %619 = vmatprep.subr.bf16.mxu0 0
      %620 = vmatpush1.bf16.msra.mxu0 0
      %621 = vmatprep.subr.bf16.mxu0 0
      %622 = vmatpush1.bf16.msra.mxu0 0
      %623 = vmatprep.subr.bf16.mxu0 0
      %624 = vmatpush1.bf16.msra.mxu0 0
      %625 = vmatprep.subr.bf16.mxu0 0
      %626 = vmatpush1.bf16.msra.mxu0 0
      %627 = vmatprep.subr.bf16.mxu0 0
      %628 = vmatpush1.bf16.msra.mxu0 0
      %629 = vmatprep.subr.bf16.mxu0 0
      %630 = vmatpush1.bf16.msra.mxu0 0
      %631 = vmatprep.subr.bf16.mxu0 0
      %632 = vmatpush1.bf16.msra.mxu0 0
      %633 = vmatprep.subr.bf16.mxu0 0
      %634 = vmatpush1.bf16.msra.mxu0 0
      %635 = vmatprep.mubr.bf16.mxu0 0
      %636 = vmatmul.mubr.bf16.gmra.mrb[0].mxu0 %v509
      %v637 = vpop.f32.mrb[0].mxu0
      %v638 = vadd.f32 0.0, %v637
      %v639 = vpop.f32.mrb[0].mxu0
      %v640 = vpop.f32.mrb[0].mxu0
      %v641 = vadd.f32 0.0, %v640
      %v642 = vpop.f32.mrb[0].mxu0
      %643 = vdwg.mxu0
      %v645 = vsel %vm511, %v495, 0
      %647 = vmatprep.subr.bf16.mxu0 0
      %648 = vmatpush1.bf16.msra.mxu0 %v645
      %649 = vmatprep.subr.bf16.mxu0 0
      %650 = vmatpush1.bf16.msra.mxu0 0
      %651 = vmatprep.subr.bf16.mxu0 0
      %652 = vmatpush1.bf16.msra.mxu0 0
      %653 = vmatprep.subr.bf16.mxu0 0
      %654 = vmatpush1.bf16.msra.mxu0 0
      %655 = vmatprep.subr.bf16.mxu0 0
      %656 = vmatpush1.bf16.msra.mxu0 0
      %657 = vmatprep.subr.bf16.mxu0 0
      %658 = vmatpush1.bf16.msra.mxu0 0
      %659 = vmatprep.subr.bf16.mxu0 0
      %660 = vmatpush1.bf16.msra.mxu0 0
      %661 = vmatprep.subr.bf16.mxu0 0
      %662 = vmatpush1.bf16.msra.mxu0 0
      %663 = vmatprep.subr.bf16.mxu0 0
      %664 = vmatpush1.bf16.msra.mxu0 0
      %665 = vmatprep.subr.bf16.mxu0 0
      %666 = vmatpush1.bf16.msra.mxu0 0
      %667 = vmatprep.subr.bf16.mxu0 0
      %668 = vmatpush1.bf16.msra.mxu0 0
      %669 = vmatprep.subr.bf16.mxu0 0
      %670 = vmatpush1.bf16.msra.mxu0 0
      %671 = vmatprep.subr.bf16.mxu0 0
      %672 = vmatpush1.bf16.msra.mxu0 0
      %673 = vmatprep.subr.bf16.mxu0 0
      %674 = vmatpush1.bf16.msra.mxu0 0
      %675 = vmatprep.subr.bf16.mxu0 0
      %676 = vmatpush1.bf16.msra.mxu0 0
      %677 = vmatprep.subr.bf16.mxu0 0
      %678 = vmatpush1.bf16.msra.mxu0 0
      %679 = vmatprep.mubr.bf16.mxu0 0
      %680 = vmatmul.mubr.bf16.gmra.mrb[0].mxu0 %v509
      %v681 = vpop.f32.mrb[0].mxu0
      %v682 = vadd.f32 0.0, %v681
      %v683 = vpop.f32.mrb[0].mxu0
      %v684 = vpop.f32.mrb[0].mxu0
      %v685 = vadd.f32 0.0, %v684
      %v686 = vpop.f32.mrb[0].mxu0
      %687 = vdwg.mxu0
      %v688 = vpack.c.bf16 %v553, %v550
      %v689 = vpack.c.bf16 %v597, %v594
      %v690 = vpack.c.bf16 %v641, %v638
      %v691 = vpack.c.bf16 %v685, %v682
      %v696 = vcombine.high %v688, %v688
      %v698 = vunpack.c.l.s4 1983009808
      %v699 = vunpack.c.0.s8 %v698
      %v700 = vlaneseq
      %v701 = vshrl.u32 %v700, 7
      %v702 = vsub.s32 %v699, %v701
      %v703 = vrot.slane %v688, %v702
      %v705 = vunpack.c.l.s4 1983009808
      %v706 = vunpack.c.0.s8 %v705
      %v707 = vlaneseq
      %v708 = vshrl.u32 %v707, 7
      %v709 = vsub.s32 %v706, %v708
      %v710 = vrot.slane %v696, %v709
      %v711 = vcombine.high %v703, %v703
      %v712 = vcombine.high %v689, %v689
      %v714 = vunpack.c.l.s4 1983009808
      %v715 = vunpack.c.0.s8 %v714
      %v716 = vlaneseq
      %v717 = vshrl.u32 %v716, 7
      %v718 = vsub.s32 %v715, %v717
      %v719 = vrot.slane %v689, %v718
      %v721 = vunpack.c.l.s4 1983009808
      %v722 = vunpack.c.0.s8 %v721
      %v723 = vlaneseq
      %v724 = vshrl.u32 %v723, 7
      %v725 = vsub.s32 %v722, %v724
      %v726 = vrot.slane %v712, %v725
      %v727 = vcombine.high %v719, %v719
      %v728 = vcombine.high %v690, %v690
      %v730 = vunpack.c.l.s4 1983009808
      %v731 = vunpack.c.0.s8 %v730
      %v732 = vlaneseq
      %v733 = vshrl.u32 %v732, 7
      %v734 = vsub.s32 %v731, %v733
      %v735 = vrot.slane %v690, %v734
      %v737 = vunpack.c.l.s4 1983009808
      %v738 = vunpack.c.0.s8 %v737
      %v739 = vlaneseq
      %v740 = vshrl.u32 %v739, 7
      %v741 = vsub.s32 %v738, %v740
      %v742 = vrot.slane %v728, %v741
      %v743 = vcombine.high %v735, %v735
      %v744 = vcombine.high %v691, %v691
      %v746 = vunpack.c.l.s4 1983009808
      %v747 = vunpack.c.0.s8 %v746
      %v748 = vlaneseq
      %v749 = vshrl.u32 %v748, 7
      %v750 = vsub.s32 %v747, %v749
      %v751 = vrot.slane %v691, %v750
      %v753 = vunpack.c.l.s4 1983009808
      %v754 = vunpack.c.0.s8 %v753
      %v755 = vlaneseq
      %v756 = vshrl.u32 %v755, 7
      %v757 = vsub.s32 %v754, %v756
      %v758 = vrot.slane %v744, %v757
      %v759 = vcombine.high %v751, %v751
      %v760 = vld [vmem:[%s3] sm:$0x3]
      %v761 = vcombine.low %v703, %v711
      %v762 = vcombine.low %v710, %v719
      %v764 = vunpack.c.l.s4 1983009808
      %v765 = vunpack.c.0.s8 %v764
      %v766 = vlaneseq
      %v767 = vshrl.u32 %v766, 7
      %v768 = vsub.s32 %v765, %v767
      %v769 = vrot.slane %v761, %v768
      %v771 = vunpack.c.l.s4 1983009808
      %v772 = vunpack.c.0.s8 %v771
      %v773 = vlaneseq
      %v774 = vshrl.u32 %v773, 7
      %v775 = vsub.s32 %v772, %v774
      %v776 = vrot.slane %v762, %v775
      %v777 = vcombine.low %v769, %v776
      %v778 = vcombine.low %v727, %v726
      %v779 = vcombine.low %v735, %v743
      %v781 = vunpack.c.l.s4 1983009808
      %v782 = vunpack.c.0.s8 %v781
      %v783 = vlaneseq
      %v784 = vshrl.u32 %v783, 7
      %v785 = vsub.s32 %v782, %v784
      %v786 = vrot.slane %v778, %v785
      %v788 = vunpack.c.l.s4 1983009808
      %v789 = vunpack.c.0.s8 %v788
      %v790 = vlaneseq
      %v791 = vshrl.u32 %v790, 7
      %v792 = vsub.s32 %v789, %v791
      %v793 = vrot.slane %v779, %v792
      %v794 = vcombine.low %v786, %v793
      %v795 = vcombine.low %v742, %v751
      %v796 = vcombine.low %v759, %v758
      %v798 = vunpack.c.l.s4 1983009808
      %v799 = vunpack.c.0.s8 %v798
      %v800 = vlaneseq
      %v801 = vshrl.u32 %v800, 7
      %v802 = vsub.s32 %v799, %v801
      %v803 = vrot.slane %v795, %v802
      %v805 = vunpack.c.l.s4 1983009808
      %v806 = vunpack.c.0.s8 %v805
      %v807 = vlaneseq
      %v808 = vshrl.u32 %v807, 7
      %v809 = vsub.s32 %v806, %v808
      %v810 = vrot.slane %v796, %v809
      %v811 = vcombine.low %v803, %v810
      %v813 = vsel %vm507, %v777, 0
      %v816 = vsel %vm507, %v794, 0
      %v819 = vsel %vm507, %v811, 0
      %v822 = vsel %vm511, %v760, 0
      %824 = vmatprep.subr.bf16.mxu0 0
      %825 = vmatpush1.bf16.msra.mxu0 %v822
      %826 = vmatprep.subr.bf16.mxu0 0
      %827 = vmatpush1.bf16.msra.mxu0 0
      %828 = vmatprep.subr.bf16.mxu0 0
      %829 = vmatpush1.bf16.msra.mxu0 0
      %830 = vmatprep.subr.bf16.mxu0 0
      %831 = vmatpush1.bf16.msra.mxu0 0
      %832 = vmatprep.subr.bf16.mxu0 0
      %833 = vmatpush1.bf16.msra.mxu0 0
      %834 = vmatprep.subr.bf16.mxu0 0
      %835 = vmatpush1.bf16.msra.mxu0 0
      %836 = vmatprep.subr.bf16.mxu0 0
      %837 = vmatpush1.bf16.msra.mxu0 0
      %838 = vmatprep.subr.bf16.mxu0 0
      %839 = vmatpush1.bf16.msra.mxu0 0
      %840 = vmatprep.subr.bf16.mxu0 0
      %841 = vmatpush1.bf16.msra.mxu0 0
      %842 = vmatprep.subr.bf16.mxu0 0
      %843 = vmatpush1.bf16.msra.mxu0 0
      %844 = vmatprep.subr.bf16.mxu0 0
      %845 = vmatpush1.bf16.msra.mxu0 0
      %846 = vmatprep.subr.bf16.mxu0 0
      %847 = vmatpush1.bf16.msra.mxu0 0
      %848 = vmatprep.subr.bf16.mxu0 0
      %849 = vmatpush1.bf16.msra.mxu0 0
      %850 = vmatprep.subr.bf16.mxu0 0
      %851 = vmatpush1.bf16.msra.mxu0 0
      %852 = vmatprep.subr.bf16.mxu0 0
      %853 = vmatpush1.bf16.msra.mxu0 0
      %854 = vmatprep.subr.bf16.mxu0 0
      %855 = vmatpush1.bf16.msra.mxu0 0
      %856 = vmatprep.mubr.bf16.mxu0 0
      %857 = vmatmul.mubr.bf16.gmra.mrb[0].mxu0 %v813
      %v858 = vpop.f32.mrb[0].mxu0
      %v859 = vadd.f32 0.0, %v858
      %v860 = vpop.f32.mrb[0].mxu0
      %v861 = vpop.f32.mrb[0].mxu0
      %v862 = vadd.f32 0.0, %v861
      %v863 = vpop.f32.mrb[0].mxu0
      %864 = vmatprep.mubr.bf16.mxu0 0
      %865 = vmatmul.mubr.bf16.gmra.mrb[0].mxu0 %v816
      %v866 = vpop.f32.mrb[0].mxu0
      %v867 = vadd.f32 0.0, %v866
      %v868 = vpop.f32.mrb[0].mxu0
      %v869 = vpop.f32.mrb[0].mxu0
      %v870 = vadd.f32 0.0, %v869
      %v871 = vpop.f32.mrb[0].mxu0
      %872 = vmatprep.mubr.bf16.mxu0 0
      %873 = vmatmul.mubr.bf16.gmra.mrb[0].mxu0 %v819
      %v874 = vpop.f32.mrb[0].mxu0
      %v875 = vadd.f32 0.0, %v874
      %v876 = vpop.f32.mrb[0].mxu0
      %v877 = vpop.f32.mrb[0].mxu0
      %v878 = vadd.f32 0.0, %v877
      %v879 = vpop.f32.mrb[0].mxu0
      %880 = vdwg.mxu0
      %v887 = vcombine.high %v859, %v859
      %v888 = vcombine.high %v862, %v862
      %v889 = vcombine.high %v867, %v867
      %v890 = vcombine.high %v870, %v870
      %v891 = vcombine.high %v875, %v875
      %v892 = vcombine.high %v878, %v878
      %vm895 = vcmask 3072
      %896 = vst.msk [vmem:[#allocation2] sm:$0xf] %vm895, 0
      %vm897 = vcmask 1024
      %898 = vst.msk [vmem:[#allocation2 + $0x4] sm:$0x3] %vm897, 0
      %899 = vst.msk [vmem:[#allocation2 + $0x8] sm:$0xf] %vm895, 0
      %900 = vst.msk [vmem:[#allocation2 + $0xc] sm:$0x3] %vm897, 0
      %901 = vst.msk [vmem:[#allocation2 + $0x10] sm:$0xf] %vm895, 0
      %902 = vst.msk [vmem:[#allocation2 + $0x14] sm:$0x3] %vm897, 0
      %903 = vst.msk [vmem:[#allocation2 + $0x18] sm:$0xf] %vm895, 0
      %904 = vst.msk [vmem:[#allocation2 + $0x1c] sm:$0x3] %vm897, 0
      %905 = vst.msk [vmem:[#allocation2 + $0x20] sm:$0xf] %vm895, 0
      %906 = vst.msk [vmem:[#allocation2 + $0x24] sm:$0x3] %vm897, 0
      %907 = vst.msk [vmem:[#allocation2 + $0x28] sm:$0xf] %vm895, 0
      %908 = vst.msk [vmem:[#allocation2 + $0x2c] sm:$0x3] %vm897, 0
      %909 = vst.msk [vmem:[#allocation2 + $0x30] sm:$0xf] %vm895, 0
      %910 = vst.msk [vmem:[#allocation2 + $0x34] sm:$0x3] %vm897, 0
      %911 = vst.msk [vmem:[#allocation2 + $0x38] sm:$0xf] %vm895, 0
      %912 = vst.msk [vmem:[#allocation2 + $0x3c] sm:$0x3] %vm897, 0
      %vm913 = vcmask 142472
      %914 = vst.msk [vmem:[#allocation2] sm:$0xf] %vm913, 0
      %vm915 = vcmask 140424
      %916 = vst.msk [vmem:[#allocation2 + $0x4] sm:$0x3] %vm915, 0
      %917 = vst.msk [vmem:[#allocation2 + $0x8] sm:$0xf] %vm913, 0
      %918 = vst.msk [vmem:[#allocation2 + $0xc] sm:$0x3] %vm915, 0
      %919 = vst.msk [vmem:[#allocation2 + $0x10] sm:$0xf] %vm913, 0
      %920 = vst.msk [vmem:[#allocation2 + $0x14] sm:$0x3] %vm915, 0
      %921 = vst.msk [vmem:[#allocation2 + $0x18] sm:$0xf] %vm913, 0
      %922 = vst.msk [vmem:[#allocation2 + $0x1c] sm:$0x3] %vm915, 0
      %923 = vst.msk [vmem:[#allocation2 + $0x20] sm:$0xf] %vm913, 0
      %924 = vst.msk [vmem:[#allocation2 + $0x24] sm:$0x3] %vm915, 0
      %925 = vst.msk [vmem:[#allocation2 + $0x28] sm:$0xf] %vm913, 0
      %926 = vst.msk [vmem:[#allocation2 + $0x2c] sm:$0x3] %vm915, 0
      %927 = vst.msk [vmem:[#allocation2 + $0x30] sm:$0xf] %vm913, 0
      %928 = vst.msk [vmem:[#allocation2 + $0x34] sm:$0x3] %vm915, 0
      %929 = vst.msk [vmem:[#allocation2 + $0x38] sm:$0xf] %vm913, 0
      %930 = vst.msk [vmem:[#allocation2 + $0x3c] sm:$0x3] %vm915, 0
      %v931 = vcombine.low %v859, %v887
      %v932 = vcombine.low %v888, %v867
      %v933 = vcombine.low %v870, %v890
      %v934 = vcombine.low %v891, %v878
      %v939 = vpack.c.bf16 %v862, %v931
      %v940 = vpack.c.bf16 %v889, %v932
      %v941 = vpack.c.bf16 %v875, %v933
      %v942 = vpack.c.bf16 %v892, %v934
      %v947 = vunpack.c.l.b16 %v939
      %v948 = vunpack.c.h.b16 %v939
      %v949 = vunpack.c.l.b16 %v940
      %v950 = vunpack.c.h.b16 %v940
      %v951 = vunpack.c.l.b16 %v941
      %v952 = vunpack.c.h.b16 %v941
      %v953 = vunpack.c.l.b16 %v942
      %v954 = vunpack.c.h.b16 %v942
      %v955 = vpack.c.b16 %v947, %v947
      %v956 = vpack.c.b16 %v948, %v948
      %v957 = vpack.c.b16 %v949, %v949
      %v958 = vpack.c.b16 %v950, %v950
      %v959 = vpack.c.b16 %v951, %v951
      %v960 = vpack.c.b16 %v952, %v952
      %v961 = vpack.c.b16 %v953, %v953
      %v962 = vpack.c.b16 %v954, %v954
      %963 = vrot.lane.b32.xlu0 %v955, 1
      %v964 = vpop.permute.xlu0 %963
      %965 = vrot.lane.b32.xlu0 %v956, 1
      %v966 = vpop.permute.xlu0 %965
      %967 = vrot.lane.b32.xlu0 %v957, 1
      %v968 = vpop.permute.xlu0 %967
      %969 = vrot.lane.b32.xlu0 %v958, 1
      %v970 = vpop.permute.xlu0 %969
      %971 = vrot.lane.b32.xlu0 %v959, 1
      %v972 = vpop.permute.xlu0 %971
      %973 = vrot.lane.b32.xlu0 %v960, 1
      %v974 = vpop.permute.xlu0 %973
      %975 = vrot.lane.b32.xlu0 %v961, 1
      %v976 = vpop.permute.xlu0 %975
      %977 = vrot.lane.b32.xlu0 %v962, 1
      %v978 = vpop.permute.xlu0 %977
      %vm987 = vcmask 134152
      %988 = vst.msk [vmem:[#allocation2] sm:$0xf] %vm987, %v964
      %vm989 = vcmask 132104
      %990 = vst.msk [vmem:[#allocation2 + $0x4] sm:$0x3] %vm989, %v966
      %991 = vst.msk [vmem:[#allocation2 + $0x8] sm:$0xf] %vm987, %v968
      %992 = vst.msk [vmem:[#allocation2 + $0xc] sm:$0x3] %vm989, %v970
      %993 = vst.msk [vmem:[#allocation2 + $0x10] sm:$0xf] %vm987, %v972
      %994 = vst.msk [vmem:[#allocation2 + $0x14] sm:$0x3] %vm989, %v974
      %995 = vst.msk [vmem:[#allocation2 + $0x18] sm:$0xf] %vm987, %v976
      %996 = vst.msk [vmem:[#allocation2 + $0x1c] sm:$0x3] %vm989, %v978
      %s997 = smul.addr %s496, 4
      %s998 = scalar_lea.vmem %s388, %s997
      %v999 = vld [vmem:[%s998] sm:$0xf]
      %v1000 = vld [vmem:[%s998 + $0x4] sm:$0x3]
      %v1001 = vld [vmem:[%s998 + $0xc] sm:$0xf]
      %v1002 = vld [vmem:[%s998 + $0x10] sm:$0x3]
      %v1003 = vld [vmem:[%s998 + $0x18] sm:$0xf]
      %v1004 = vld [vmem:[%s998 + $0x1c] sm:$0x3]
      %v1005 = vld [vmem:[%s998 + $0x24] sm:$0xf]
      %v1006 = vld [vmem:[%s998 + $0x28] sm:$0x3]
      %1015 = vrot.lane.b32.xlu0 %v999, 1
      %v1016 = vpop.permute.xlu0 %1015
      %1017 = vrot.lane.b32.xlu0 %v1000, 1
      %v1018 = vpop.permute.xlu0 %1017
      %1019 = vrot.lane.b32.xlu0 %v1001, 1
      %v1020 = vpop.permute.xlu0 %1019
      %1021 = vrot.lane.b32.xlu0 %v1002, 1
      %v1022 = vpop.permute.xlu0 %1021
      %1023 = vrot.lane.b32.xlu0 %v1003, 1
      %v1024 = vpop.permute.xlu0 %1023
      %1025 = vrot.lane.b32.xlu0 %v1004, 1
      %v1026 = vpop.permute.xlu0 %1025
      %1027 = vrot.lane.b32.xlu0 %v1005, 1
      %v1028 = vpop.permute.xlu0 %1027
      %1029 = vrot.lane.b32.xlu0 %v1006, 1
      %v1030 = vpop.permute.xlu0 %1029
      %s1039 = scalar_lea.vmem [#allocation2], 32
      %1040 = vst.msk [vmem:[%s1039] sm:$0xf] %vm987, %v1016
      %1041 = vst.msk [vmem:[%s1039 + $0x4] sm:$0x3] %vm989, %v1018
      %1042 = vst.msk [vmem:[%s1039 + $0x8] sm:$0xf] %vm987, %v1020
      %1043 = vst.msk [vmem:[%s1039 + $0xc] sm:$0x3] %vm989, %v1022
      %1044 = vst.msk [vmem:[%s1039 + $0x10] sm:$0xf] %vm987, %v1024
      %1045 = vst.msk [vmem:[%s1039 + $0x14] sm:$0x3] %vm989, %v1026
      %1046 = vst.msk [vmem:[%s1039 + $0x18] sm:$0xf] %vm987, %v1028
      %1047 = vst.msk [vmem:[%s1039 + $0x1c] sm:$0x3] %vm989, %v1030
      %v1048 = vld [vmem:[#allocation2] sm:$0xf]
      %v1049 = vld [vmem:[#allocation2 + $0x4] sm:$0x1]
      %v1050 = vld [vmem:[#allocation2 + $0x8] sm:$0xf]
      %v1051 = vld [vmem:[#allocation2 + $0xc] sm:$0x1]
      %v1052 = vld [vmem:[#allocation2 + $0x10] sm:$0xf]
      %v1053 = vld [vmem:[#allocation2 + $0x14] sm:$0x1]
      %v1054 = vld [vmem:[#allocation2 + $0x18] sm:$0xf]
      %v1055 = vld [vmem:[#allocation2 + $0x1c] sm:$0x1]
      %v1056 = vld [vmem:[#allocation2 + $0x20] sm:$0xf]
      %v1057 = vld [vmem:[#allocation2 + $0x24] sm:$0x1]
      %v1058 = vld [vmem:[#allocation2 + $0x28] sm:$0xf]
      %v1059 = vld [vmem:[#allocation2 + $0x2c] sm:$0x1]
      %v1060 = vld [vmem:[#allocation2 + $0x30] sm:$0xf]
      %v1061 = vld [vmem:[#allocation2 + $0x34] sm:$0x1]
      %v1062 = vld [vmem:[#allocation2 + $0x38] sm:$0xf]
      %v1063 = vld [vmem:[#allocation2 + $0x3c] sm:$0x1]
      %v1064 = vcombine.low %v1048, %v1056
      %v1066 = vunpack.c.l.s4 1983009808
      %v1067 = vunpack.c.0.s8 %v1066
      %v1068 = vlaneseq
      %v1069 = vshrl.u32 %v1068, 7
      %v1070 = vsub.s32 %v1067, %v1069
      %v1071 = vrot.slane %v1064, %v1070
      %v1072 = vcombine.low %v1052, %v1060
      %v1074 = vunpack.c.l.s4 1983009808
      %v1075 = vunpack.c.0.s8 %v1074
      %v1076 = vlaneseq
      %v1077 = vshrl.u32 %v1076, 7
      %v1078 = vsub.s32 %v1075, %v1077
      %v1079 = vrot.slane %v1072, %v1078
      %v1080 = vcombine.low %v1071, %v1079
      %v1081 = vcombine.high %v1071, %v1079
      %v1083 = vunpack.c.l.s4 1934713408
      %v1084 = vunpack.c.0.s8 %v1083
      %v1085 = vlaneseq
      %v1086 = vshrl.u32 %v1085, 7
      %v1087 = vsub.s32 %v1084, %v1086
      %v1088 = vrot.slane %v1080, %v1087
      %v1090 = vunpack.c.l.s4 1934713408
      %v1091 = vunpack.c.0.s8 %v1090
      %v1092 = vlaneseq
      %v1093 = vshrl.u32 %v1092, 7
      %v1094 = vsub.s32 %v1091, %v1093
      %v1095 = vrot.slane %v1081, %v1094
      %v1096 = vcombine.high %v1088, 0
      %v1097 = vcombine.high %v1095, 0
      %v1098 = vcombine.low %v1050, %v1058
      %v1100 = vunpack.c.l.s4 1983009808
      %v1101 = vunpack.c.0.s8 %v1100
      %v1102 = vlaneseq
      %v1103 = vshrl.u32 %v1102, 7
      %v1104 = vsub.s32 %v1101, %v1103
      %v1105 = vrot.slane %v1098, %v1104
      %v1106 = vcombine.low %v1054, %v1062
      %v1108 = vunpack.c.l.s4 1983009808
      %v1109 = vunpack.c.0.s8 %v1108
      %v1110 = vlaneseq
      %v1111 = vshrl.u32 %v1110, 7
      %v1112 = vsub.s32 %v1109, %v1111
      %v1113 = vrot.slane %v1106, %v1112
      %v1114 = vcombine.low %v1105, %v1113
      %v1115 = vcombine.high %v1105, %v1113
      %v1117 = vunpack.c.l.s4 1934713408
      %v1118 = vunpack.c.0.s8 %v1117
      %v1119 = vlaneseq
      %v1120 = vshrl.u32 %v1119, 7
      %v1121 = vsub.s32 %v1118, %v1120
      %v1122 = vrot.slane %v1114, %v1121
      %v1124 = vunpack.c.l.s4 1934713408
      %v1125 = vunpack.c.0.s8 %v1124
      %v1126 = vlaneseq
      %v1127 = vshrl.u32 %v1126, 7
      %v1128 = vsub.s32 %v1125, %v1127
      %v1129 = vrot.slane %v1115, %v1128
      %v1130 = vcombine.high %v1122, 0
      %v1131 = vcombine.high %v1129, 0
      %v1132 = vcombine.low %v1049, %v1057
      %v1134 = vunpack.c.l.s4 1983009808
      %v1135 = vunpack.c.0.s8 %v1134
      %v1136 = vlaneseq
      %v1137 = vshrl.u32 %v1136, 7
      %v1138 = vsub.s32 %v1135, %v1137
      %v1139 = vrot.slane %v1132, %v1138
      %v1140 = vcombine.low %v1053, %v1061
      %v1142 = vunpack.c.l.s4 1983009808
      %v1143 = vunpack.c.0.s8 %v1142
      %v1144 = vlaneseq
      %v1145 = vshrl.u32 %v1144, 7
      %v1146 = vsub.s32 %v1143, %v1145
      %v1147 = vrot.slane %v1140, %v1146
      %v1148 = vcombine.low %v1139, %v1147
      %v1150 = vunpack.c.l.s4 1934713408
      %v1151 = vunpack.c.0.s8 %v1150
      %v1152 = vlaneseq
      %v1153 = vshrl.u32 %v1152, 7
      %v1154 = vsub.s32 %v1151, %v1153
      %v1155 = vrot.slane %v1148, %v1154
      %v1156 = vcombine.low %v1051, %v1059
      %v1158 = vunpack.c.l.s4 1983009808
      %v1159 = vunpack.c.0.s8 %v1158
      %v1160 = vlaneseq
      %v1161 = vshrl.u32 %v1160, 7
      %v1162 = vsub.s32 %v1159, %v1161
      %v1163 = vrot.slane %v1156, %v1162
      %v1164 = vcombine.low %v1055, %v1063
      %v1166 = vunpack.c.l.s4 1983009808
      %v1167 = vunpack.c.0.s8 %v1166
      %v1168 = vlaneseq
      %v1169 = vshrl.u32 %v1168, 7
      %v1170 = vsub.s32 %v1167, %v1169
      %v1171 = vrot.slane %v1164, %v1170
      %v1172 = vcombine.low %v1163, %v1171
      %v1174 = vunpack.c.l.s4 1934713408
      %v1175 = vunpack.c.0.s8 %v1174
      %v1176 = vlaneseq
      %v1177 = vshrl.u32 %v1176, 7
      %v1178 = vsub.s32 %v1175, %v1177
      %v1179 = vrot.slane %v1172, %v1178
      %v1182 = vpack.i.b16 %v1122, %v1088
      %v1183 = vshrl.u32 %v1088, 16
      %v1184 = vshrl.u32 %v1122, 16
      %v1185 = vpack.i.b16 %v1184, %v1183
      %v1188 = vpack.i.b16 %v1130, %v1096
      %v1189 = vshrl.u32 %v1096, 16
      %v1190 = vshrl.u32 %v1130, 16
      %v1191 = vpack.i.b16 %v1190, %v1189
      %v1194 = vpack.i.b16 %v1129, %v1095
      %v1195 = vshrl.u32 %v1095, 16
      %v1196 = vshrl.u32 %v1129, 16
      %v1197 = vpack.i.b16 %v1196, %v1195
      %v1200 = vpack.i.b16 %v1131, %v1097
      %v1201 = vshrl.u32 %v1097, 16
      %v1202 = vshrl.u32 %v1131, 16
      %v1203 = vpack.i.b16 %v1202, %v1201
      %v1206 = vpack.i.b16 %v1179, %v1155
      %v1207 = vshrl.u32 %v1155, 16
      %v1208 = vshrl.u32 %v1179, 16
      %v1209 = vpack.i.b16 %v1208, %v1207
      %v1210 = vunpack.c.l.b16 %v1185
      %v1211 = vpack.c.b16 %v1210, %v1210
      %1212 = vrot.lane.b32.xlu0 %v1211, 16
      %v1213 = vpop.permute.xlu0 %1212
      %v1214 = vunpack.c.l.b16 %v1188
      %v1215 = vpack.c.b16 %v1214, %v1214
      %1216 = vrot.lane.b32.xlu0 %v1215, 32
      %v1217 = vpop.permute.xlu0 %1216
      %v1218 = vunpack.c.l.b16 %v1191
      %v1219 = vpack.c.b16 %v1218, %v1218
      %1220 = vrot.lane.b32.xlu0 %v1219, 48
      %v1221 = vpop.permute.xlu0 %1220
      %v1222 = vunpack.c.l.b16 %v1194
      %v1223 = vpack.c.b16 %v1222, %v1222
      %1224 = vrot.lane.b32.xlu0 %v1223, 64
      %v1225 = vpop.permute.xlu0 %1224
      %v1226 = vunpack.c.l.b16 %v1197
      %v1227 = vpack.c.b16 %v1226, %v1226
      %1228 = vrot.lane.b32.xlu0 %v1227, 80
      %v1229 = vpop.permute.xlu0 %1228
      %v1230 = vunpack.c.l.b16 %v1200
      %v1231 = vpack.c.b16 %v1230, %v1230
      %1232 = vrot.lane.b32.xlu0 %v1231, 96
      %v1233 = vpop.permute.xlu0 %1232
      %v1234 = vunpack.c.l.b16 %v1203
      %v1235 = vpack.c.b16 %v1234, %v1234
      %1236 = vrot.lane.b32.xlu0 %v1235, 112
      %v1237 = vpop.permute.xlu0 %1236
      %v1238 = vunpack.c.l.b16 %v1209
      %v1239 = vpack.c.b16 %v1238, %v1238
      %1240 = vrot.lane.b32.xlu0 %v1239, 16
      %v1241 = vpop.permute.xlu0 %1240
      %vm1242 = vcmask 130048
      %v1245 = vsel %vm1242, %v1182, %v1213
      %vm1246 = vcmask 261120
      %v1248 = vsel %vm1246, %v1245, %v1217
      %vm1249 = vcmask 392192
      %v1251 = vsel %vm1249, %v1248, %v1221
      %vm1252 = vcmask 523264
      %v1254 = vsel %vm1252, %v1251, %v1225
      %vm1255 = vcmask 654336
      %v1257 = vsel %vm1255, %v1254, %v1229
      %vm1258 = vcmask 785408
      %v1260 = vsel %vm1258, %v1257, %v1233
      %vm1261 = vcmask 916480
      %v1263 = vsel %vm1261, %v1260, %v1237
      %v1266 = vsel %vm1242, %v1206, %v1241
      %1283 = vrot.lane.b32.xlu0 %v1048, 127
      %v1284 = vpop.permute.xlu0 %1283
      %1285 = vrot.lane.b32.xlu0 %v1049, 127
      %v1286 = vpop.permute.xlu0 %1285
      %1287 = vrot.lane.b32.xlu0 %v1050, 127
      %v1288 = vpop.permute.xlu0 %1287
      %1289 = vrot.lane.b32.xlu0 %v1051, 127
      %v1290 = vpop.permute.xlu0 %1289
      %1291 = vrot.lane.b32.xlu0 %v1052, 127
      %v1292 = vpop.permute.xlu0 %1291
      %1293 = vrot.lane.b32.xlu0 %v1053, 127
      %v1294 = vpop.permute.xlu0 %1293
      %1295 = vrot.lane.b32.xlu0 %v1054, 127
      %v1296 = vpop.permute.xlu0 %1295
      %1297 = vrot.lane.b32.xlu0 %v1055, 127
      %v1298 = vpop.permute.xlu0 %1297
      %1299 = vrot.lane.b32.xlu0 %v1056, 127
      %v1300 = vpop.permute.xlu0 %1299
      %1301 = vrot.lane.b32.xlu0 %v1057, 127
      %v1302 = vpop.permute.xlu0 %1301
      %1303 = vrot.lane.b32.xlu0 %v1058, 127
      %v1304 = vpop.permute.xlu0 %1303
      %1305 = vrot.lane.b32.xlu0 %v1059, 127
      %v1306 = vpop.permute.xlu0 %1305
      %1307 = vrot.lane.b32.xlu0 %v1060, 127
      %v1308 = vpop.permute.xlu0 %1307
      %1309 = vrot.lane.b32.xlu0 %v1061, 127
      %v1310 = vpop.permute.xlu0 %1309
      %1311 = vrot.lane.b32.xlu0 %v1062, 127
      %v1312 = vpop.permute.xlu0 %1311
      %1313 = vrot.lane.b32.xlu0 %v1063, 127
      %v1314 = vpop.permute.xlu0 %1313
      %v1331 = vcombine.low %v1284, %v1300
      %v1333 = vunpack.c.l.s4 1983009808
      %v1334 = vunpack.c.0.s8 %v1333
      %v1335 = vlaneseq
      %v1336 = vshrl.u32 %v1335, 7
      %v1337 = vsub.s32 %v1334, %v1336
      %v1338 = vrot.slane %v1331, %v1337
      %v1339 = vcombine.low %v1292, %v1308
      %v1341 = vunpack.c.l.s4 1983009808
      %v1342 = vunpack.c.0.s8 %v1341
      %v1343 = vlaneseq
      %v1344 = vshrl.u32 %v1343, 7
      %v1345 = vsub.s32 %v1342, %v1344
      %v1346 = vrot.slane %v1339, %v1345
      %v1347 = vcombine.low %v1338, %v1346
      %v1348 = vcombine.high %v1338, %v1346
      %v1350 = vunpack.c.l.s4 1934713408
      %v1351 = vunpack.c.0.s8 %v1350
      %v1352 = vlaneseq
      %v1353 = vshrl.u32 %v1352, 7
      %v1354 = vsub.s32 %v1351, %v1353
      %v1355 = vrot.slane %v1347, %v1354
      %v1357 = vunpack.c.l.s4 1934713408
      %v1358 = vunpack.c.0.s8 %v1357
      %v1359 = vlaneseq
      %v1360 = vshrl.u32 %v1359, 7
      %v1361 = vsub.s32 %v1358, %v1360
      %v1362 = vrot.slane %v1348, %v1361
      %v1363 = vcombine.high %v1355, 0
      %v1364 = vcombine.high %v1362, 0
      %v1365 = vcombine.low %v1288, %v1304
      %v1367 = vunpack.c.l.s4 1983009808
      %v1368 = vunpack.c.0.s8 %v1367
      %v1369 = vlaneseq
      %v1370 = vshrl.u32 %v1369, 7
      %v1371 = vsub.s32 %v1368, %v1370
      %v1372 = vrot.slane %v1365, %v1371
      %v1373 = vcombine.low %v1296, %v1312
      %v1375 = vunpack.c.l.s4 1983009808
      %v1376 = vunpack.c.0.s8 %v1375
      %v1377 = vlaneseq
      %v1378 = vshrl.u32 %v1377, 7
      %v1379 = vsub.s32 %v1376, %v1378
      %v1380 = vrot.slane %v1373, %v1379
      %v1381 = vcombine.low %v1372, %v1380
      %v1382 = vcombine.high %v1372, %v1380
      %v1384 = vunpack.c.l.s4 1934713408
      %v1385 = vunpack.c.0.s8 %v1384
      %v1386 = vlaneseq
      %v1387 = vshrl.u32 %v1386, 7
      %v1388 = vsub.s32 %v1385, %v1387
      %v1389 = vrot.slane %v1381, %v1388
      %v1391 = vunpack.c.l.s4 1934713408
      %v1392 = vunpack.c.0.s8 %v1391
      %v1393 = vlaneseq
      %v1394 = vshrl.u32 %v1393, 7
      %v1395 = vsub.s32 %v1392, %v1394
      %v1396 = vrot.slane %v1382, %v1395
      %v1397 = vcombine.high %v1389, 0
      %v1398 = vcombine.high %v1396, 0
      %v1399 = vcombine.low %v1286, %v1302
      %v1401 = vunpack.c.l.s4 1983009808
      %v1402 = vunpack.c.0.s8 %v1401
      %v1403 = vlaneseq
      %v1404 = vshrl.u32 %v1403, 7
      %v1405 = vsub.s32 %v1402, %v1404
      %v1406 = vrot.slane %v1399, %v1405
      %v1407 = vcombine.low %v1294, %v1310
      %v1409 = vunpack.c.l.s4 1983009808
      %v1410 = vunpack.c.0.s8 %v1409
      %v1411 = vlaneseq
      %v1412 = vshrl.u32 %v1411, 7
      %v1413 = vsub.s32 %v1410, %v1412
      %v1414 = vrot.slane %v1407, %v1413
      %v1415 = vcombine.low %v1406, %v1414
      %v1417 = vunpack.c.l.s4 1934713408
      %v1418 = vunpack.c.0.s8 %v1417
      %v1419 = vlaneseq
      %v1420 = vshrl.u32 %v1419, 7
      %v1421 = vsub.s32 %v1418, %v1420
      %v1422 = vrot.slane %v1415, %v1421
      %v1423 = vcombine.low %v1290, %v1306
      %v1425 = vunpack.c.l.s4 1983009808
      %v1426 = vunpack.c.0.s8 %v1425
      %v1427 = vlaneseq
      %v1428 = vshrl.u32 %v1427, 7
      %v1429 = vsub.s32 %v1426, %v1428
      %v1430 = vrot.slane %v1423, %v1429
      %v1431 = vcombine.low %v1298, %v1314
      %v1433 = vunpack.c.l.s4 1983009808
      %v1434 = vunpack.c.0.s8 %v1433
      %v1435 = vlaneseq
      %v1436 = vshrl.u32 %v1435, 7
      %v1437 = vsub.s32 %v1434, %v1436
      %v1438 = vrot.slane %v1431, %v1437
      %v1439 = vcombine.low %v1430, %v1438
      %v1441 = vunpack.c.l.s4 1934713408
      %v1442 = vunpack.c.0.s8 %v1441
      %v1443 = vlaneseq
      %v1444 = vshrl.u32 %v1443, 7
      %v1445 = vsub.s32 %v1442, %v1444
      %v1446 = vrot.slane %v1439, %v1445
      %v1449 = vpack.i.b16 %v1389, %v1355
      %v1450 = vshrl.u32 %v1355, 16
      %v1451 = vshrl.u32 %v1389, 16
      %v1452 = vpack.i.b16 %v1451, %v1450
      %v1455 = vpack.i.b16 %v1397, %v1363
      %v1456 = vshrl.u32 %v1363, 16
      %v1457 = vshrl.u32 %v1397, 16
      %v1458 = vpack.i.b16 %v1457, %v1456
      %v1461 = vpack.i.b16 %v1396, %v1362
      %v1462 = vshrl.u32 %v1362, 16
      %v1463 = vshrl.u32 %v1396, 16
      %v1464 = vpack.i.b16 %v1463, %v1462
      %v1467 = vpack.i.b16 %v1398, %v1364
      %v1468 = vshrl.u32 %v1364, 16
      %v1469 = vshrl.u32 %v1398, 16
      %v1470 = vpack.i.b16 %v1469, %v1468
      %v1473 = vpack.i.b16 %v1446, %v1422
      %v1474 = vshrl.u32 %v1422, 16
      %v1475 = vshrl.u32 %v1446, 16
      %v1476 = vpack.i.b16 %v1475, %v1474
      %v1477 = vunpack.c.l.b16 %v1452
      %v1478 = vpack.c.b16 %v1477, %v1477
      %1479 = vrot.lane.b32.xlu0 %v1478, 16
      %v1480 = vpop.permute.xlu0 %1479
      %v1481 = vunpack.c.l.b16 %v1455
      %v1482 = vpack.c.b16 %v1481, %v1481
      %1483 = vrot.lane.b32.xlu0 %v1482, 32
      %v1484 = vpop.permute.xlu0 %1483
      %v1485 = vunpack.c.l.b16 %v1458
      %v1486 = vpack.c.b16 %v1485, %v1485
      %1487 = vrot.lane.b32.xlu0 %v1486, 48
      %v1488 = vpop.permute.xlu0 %1487
      %v1489 = vunpack.c.l.b16 %v1461
      %v1490 = vpack.c.b16 %v1489, %v1489
      %1491 = vrot.lane.b32.xlu0 %v1490, 64
      %v1492 = vpop.permute.xlu0 %1491
      %v1493 = vunpack.c.l.b16 %v1464
      %v1494 = vpack.c.b16 %v1493, %v1493
      %1495 = vrot.lane.b32.xlu0 %v1494, 80
      %v1496 = vpop.permute.xlu0 %1495
      %v1497 = vunpack.c.l.b16 %v1467
      %v1498 = vpack.c.b16 %v1497, %v1497
      %1499 = vrot.lane.b32.xlu0 %v1498, 96
      %v1500 = vpop.permute.xlu0 %1499
      %v1501 = vunpack.c.l.b16 %v1470
      %v1502 = vpack.c.b16 %v1501, %v1501
      %1503 = vrot.lane.b32.xlu0 %v1502, 112
      %v1504 = vpop.permute.xlu0 %1503
      %v1505 = vunpack.c.l.b16 %v1476
      %v1506 = vpack.c.b16 %v1505, %v1505
      %1507 = vrot.lane.b32.xlu0 %v1506, 16
      %v1508 = vpop.permute.xlu0 %1507
      %v1511 = vsel %vm1242, %v1449, %v1480
      %v1513 = vsel %vm1246, %v1511, %v1484
      %v1515 = vsel %vm1249, %v1513, %v1488
      %v1517 = vsel %vm1252, %v1515, %v1492
      %v1519 = vsel %vm1255, %v1517, %v1496
      %v1521 = vsel %vm1258, %v1519, %v1500
      %v1523 = vsel %vm1261, %v1521, %v1504
      %v1526 = vsel %vm1242, %v1473, %v1508
      %1527 = vrot.lane.b32.xlu0 %v1048, 126
      %v1528 = vpop.permute.xlu0 %1527
      %1529 = vrot.lane.b32.xlu0 %v1049, 126
      %v1530 = vpop.permute.xlu0 %1529
      %1531 = vrot.lane.b32.xlu0 %v1050, 126
      %v1532 = vpop.permute.xlu0 %1531
      %1533 = vrot.lane.b32.xlu0 %v1051, 126
      %v1534 = vpop.permute.xlu0 %1533
      %1535 = vrot.lane.b32.xlu0 %v1052, 126
      %v1536 = vpop.permute.xlu0 %1535
      %1537 = vrot.lane.b32.xlu0 %v1053, 126
      %v1538 = vpop.permute.xlu0 %1537
      %1539 = vrot.lane.b32.xlu0 %v1054, 126
      %v1540 = vpop.permute.xlu0 %1539
      %1541 = vrot.lane.b32.xlu0 %v1055, 126
      %v1542 = vpop.permute.xlu0 %1541
      %1543 = vrot.lane.b32.xlu0 %v1056, 126
      %v1544 = vpop.permute.xlu0 %1543
      %1545 = vrot.lane.b32.xlu0 %v1057, 126
      %v1546 = vpop.permute.xlu0 %1545
      %1547 = vrot.lane.b32.xlu0 %v1058, 126
      %v1548 = vpop.permute.xlu0 %1547
      %1549 = vrot.lane.b32.xlu0 %v1059, 126
      %v1550 = vpop.permute.xlu0 %1549
      %1551 = vrot.lane.b32.xlu0 %v1060, 126
      %v1552 = vpop.permute.xlu0 %1551
      %1553 = vrot.lane.b32.xlu0 %v1061, 126
      %v1554 = vpop.permute.xlu0 %1553
      %1555 = vrot.lane.b32.xlu0 %v1062, 126
      %v1556 = vpop.permute.xlu0 %1555
      %1557 = vrot.lane.b32.xlu0 %v1063, 126
      %v1558 = vpop.permute.xlu0 %1557
      %v1575 = vcombine.low %v1528, %v1544
      %v1577 = vunpack.c.l.s4 1983009808
      %v1578 = vunpack.c.0.s8 %v1577
      %v1579 = vlaneseq
      %v1580 = vshrl.u32 %v1579, 7
      %v1581 = vsub.s32 %v1578, %v1580
      %v1582 = vrot.slane %v1575, %v1581
      %v1583 = vcombine.low %v1536, %v1552
      %v1585 = vunpack.c.l.s4 1983009808
      %v1586 = vunpack.c.0.s8 %v1585
      %v1587 = vlaneseq
      %v1588 = vshrl.u32 %v1587, 7
      %v1589 = vsub.s32 %v1586, %v1588
      %v1590 = vrot.slane %v1583, %v1589
      %v1591 = vcombine.low %v1582, %v1590
      %v1592 = vcombine.high %v1582, %v1590
      %v1594 = vunpack.c.l.s4 1934713408
      %v1595 = vunpack.c.0.s8 %v1594
      %v1596 = vlaneseq
      %v1597 = vshrl.u32 %v1596, 7
      %v1598 = vsub.s32 %v1595, %v1597
      %v1599 = vrot.slane %v1591, %v1598
      %v1601 = vunpack.c.l.s4 1934713408
      %v1602 = vunpack.c.0.s8 %v1601
      %v1603 = vlaneseq
      %v1604 = vshrl.u32 %v1603, 7
      %v1605 = vsub.s32 %v1602, %v1604
      %v1606 = vrot.slane %v1592, %v1605
      %v1607 = vcombine.high %v1599, 0
      %v1608 = vcombine.high %v1606, 0
      %v1609 = vcombine.low %v1532, %v1548
      %v1611 = vunpack.c.l.s4 1983009808
      %v1612 = vunpack.c.0.s8 %v1611
      %v1613 = vlaneseq
      %v1614 = vshrl.u32 %v1613, 7
      %v1615 = vsub.s32 %v1612, %v1614
      %v1616 = vrot.slane %v1609, %v1615
      %v1617 = vcombine.low %v1540, %v1556
      %v1619 = vunpack.c.l.s4 1983009808
      %v1620 = vunpack.c.0.s8 %v1619
      %v1621 = vlaneseq
      %v1622 = vshrl.u32 %v1621, 7
      %v1623 = vsub.s32 %v1620, %v1622
      %v1624 = vrot.slane %v1617, %v1623
      %v1625 = vcombine.low %v1616, %v1624
      %v1626 = vcombine.high %v1616, %v1624
      %v1628 = vunpack.c.l.s4 1934713408
      %v1629 = vunpack.c.0.s8 %v1628
      %v1630 = vlaneseq
      %v1631 = vshrl.u32 %v1630, 7
      %v1632 = vsub.s32 %v1629, %v1631
      %v1633 = vrot.slane %v1625, %v1632
      %v1635 = vunpack.c.l.s4 1934713408
      %v1636 = vunpack.c.0.s8 %v1635
      %v1637 = vlaneseq
      %v1638 = vshrl.u32 %v1637, 7
      %v1639 = vsub.s32 %v1636, %v1638
      %v1640 = vrot.slane %v1626, %v1639
      %v1641 = vcombine.high %v1633, 0
      %v1642 = vcombine.high %v1640, 0
      %v1643 = vcombine.low %v1530, %v1546
      %v1645 = vunpack.c.l.s4 1983009808
      %v1646 = vunpack.c.0.s8 %v1645
      %v1647 = vlaneseq
      %v1648 = vshrl.u32 %v1647, 7
      %v1649 = vsub.s32 %v1646, %v1648
      %v1650 = vrot.slane %v1643, %v1649
      %v1651 = vcombine.low %v1538, %v1554
      %v1653 = vunpack.c.l.s4 1983009808
      %v1654 = vunpack.c.0.s8 %v1653
      %v1655 = vlaneseq
      %v1656 = vshrl.u32 %v1655, 7
      %v1657 = vsub.s32 %v1654, %v1656
      %v1658 = vrot.slane %v1651, %v1657
      %v1659 = vcombine.low %v1650, %v1658
      %v1661 = vunpack.c.l.s4 1934713408
      %v1662 = vunpack.c.0.s8 %v1661
      %v1663 = vlaneseq
      %v1664 = vshrl.u32 %v1663, 7
      %v1665 = vsub.s32 %v1662, %v1664
      %v1666 = vrot.slane %v1659, %v1665
      %v1667 = vcombine.low %v1534, %v1550
      %v1669 = vunpack.c.l.s4 1983009808
      %v1670 = vunpack.c.0.s8 %v1669
      %v1671 = vlaneseq
      %v1672 = vshrl.u32 %v1671, 7
      %v1673 = vsub.s32 %v1670, %v1672
      %v1674 = vrot.slane %v1667, %v1673
      %v1675 = vcombine.low %v1542, %v1558
      %v1677 = vunpack.c.l.s4 1983009808
      %v1678 = vunpack.c.0.s8 %v1677
      %v1679 = vlaneseq
      %v1680 = vshrl.u32 %v1679, 7
      %v1681 = vsub.s32 %v1678, %v1680
      %v1682 = vrot.slane %v1675, %v1681
      %v1683 = vcombine.low %v1674, %v1682
      %v1685 = vunpack.c.l.s4 1934713408
      %v1686 = vunpack.c.0.s8 %v1685
      %v1687 = vlaneseq
      %v1688 = vshrl.u32 %v1687, 7
      %v1689 = vsub.s32 %v1686, %v1688
      %v1690 = vrot.slane %v1683, %v1689
      %v1693 = vpack.i.b16 %v1633, %v1599
      %v1694 = vshrl.u32 %v1599, 16
      %v1695 = vshrl.u32 %v1633, 16
      %v1696 = vpack.i.b16 %v1695, %v1694
      %v1699 = vpack.i.b16 %v1641, %v1607
      %v1700 = vshrl.u32 %v1607, 16
      %v1701 = vshrl.u32 %v1641, 16
      %v1702 = vpack.i.b16 %v1701, %v1700
      %v1705 = vpack.i.b16 %v1640, %v1606
      %v1706 = vshrl.u32 %v1606, 16
      %v1707 = vshrl.u32 %v1640, 16
      %v1708 = vpack.i.b16 %v1707, %v1706
      %v1711 = vpack.i.b16 %v1642, %v1608
      %v1712 = vshrl.u32 %v1608, 16
      %v1713 = vshrl.u32 %v1642, 16
      %v1714 = vpack.i.b16 %v1713, %v1712
      %v1717 = vpack.i.b16 %v1690, %v1666
      %v1718 = vshrl.u32 %v1666, 16
      %v1719 = vshrl.u32 %v1690, 16
      %v1720 = vpack.i.b16 %v1719, %v1718
      %v1721 = vunpack.c.l.b16 %v1696
      %v1722 = vpack.c.b16 %v1721, %v1721
      %1723 = vrot.lane.b32.xlu0 %v1722, 16
      %v1724 = vpop.permute.xlu0 %1723
      %v1725 = vunpack.c.l.b16 %v1699
      %v1726 = vpack.c.b16 %v1725, %v1725
      %1727 = vrot.lane.b32.xlu0 %v1726, 32
      %v1728 = vpop.permute.xlu0 %1727
      %v1729 = vunpack.c.l.b16 %v1702
      %v1730 = vpack.c.b16 %v1729, %v1729
      %1731 = vrot.lane.b32.xlu0 %v1730, 48
      %v1732 = vpop.permute.xlu0 %1731
      %v1733 = vunpack.c.l.b16 %v1705
      %v1734 = vpack.c.b16 %v1733, %v1733
      %1735 = vrot.lane.b32.xlu0 %v1734, 64
      %v1736 = vpop.permute.xlu0 %1735
      %v1737 = vunpack.c.l.b16 %v1708
      %v1738 = vpack.c.b16 %v1737, %v1737
      %1739 = vrot.lane.b32.xlu0 %v1738, 80
      %v1740 = vpop.permute.xlu0 %1739
      %v1741 = vunpack.c.l.b16 %v1711
      %v1742 = vpack.c.b16 %v1741, %v1741
      %1743 = vrot.lane.b32.xlu0 %v1742, 96
      %v1744 = vpop.permute.xlu0 %1743
      %v1745 = vunpack.c.l.b16 %v1714
      %v1746 = vpack.c.b16 %v1745, %v1745
      %1747 = vrot.lane.b32.xlu0 %v1746, 112
      %v1748 = vpop.permute.xlu0 %1747
      %v1749 = vunpack.c.l.b16 %v1720
      %v1750 = vpack.c.b16 %v1749, %v1749
      %1751 = vrot.lane.b32.xlu0 %v1750, 16
      %v1752 = vpop.permute.xlu0 %1751
      %v1755 = vsel %vm1242, %v1693, %v1724
      %v1757 = vsel %vm1246, %v1755, %v1728
      %v1759 = vsel %vm1249, %v1757, %v1732
      %v1761 = vsel %vm1252, %v1759, %v1736
      %v1763 = vsel %vm1255, %v1761, %v1740
      %v1765 = vsel %vm1258, %v1763, %v1744
      %v1767 = vsel %vm1261, %v1765, %v1748
      %v1770 = vsel %vm1242, %v1717, %v1752
      %v1771 = vld [vmem:[#allocation2 + $0x4] sm:$0x3]
      %v1772 = vld [vmem:[#allocation2 + $0xc] sm:$0x3]
      %v1773 = vld [vmem:[#allocation2 + $0x14] sm:$0x3]
      %v1774 = vld [vmem:[#allocation2 + $0x1c] sm:$0x3]
      %v1775 = vld [vmem:[#allocation2 + $0x24] sm:$0x3]
      %v1776 = vld [vmem:[#allocation2 + $0x2c] sm:$0x3]
      %v1777 = vld [vmem:[#allocation2 + $0x34] sm:$0x3]
      %v1778 = vld [vmem:[#allocation2 + $0x3c] sm:$0x3]
      %vm1779 = vsmask.f32 3328
      %vm1780 = vsmask.f32 7440
      %vm1781 = vmor %vm1779, %vm1780
      %v1783 = vshrl.u32 %v1048, 16
      %v1785 = vrot.slane %v1783, 4
      %v1786 = vshll.u32 %v1048, 16
      %v1788 = vrot.slane %v1786, 5
      %v1789 = vor.u32 %v1785, %v1788
      %v1790 = vrot.slane %v1789, 4
      %v1792 = vshll.u32 %v1771, 16
      %v1794 = vrot.slane %v1792, 5
      %v1795 = vsel %vm1781, %v1790, %v1794
      %v1796 = vshrl.u32 %v1771, 16
      %v1798 = vrot.slane %v1796, 4
      %v1799 = vor.u32 %v1798, %v1794
      %v1800 = vrot.slane %v1799, 4
      %v1802 = vshrl.u32 %v1050, 16
      %v1804 = vrot.slane %v1802, 4
      %v1805 = vshll.u32 %v1050, 16
      %v1807 = vrot.slane %v1805, 5
      %v1808 = vor.u32 %v1804, %v1807
      %v1809 = vrot.slane %v1808, 4
      %v1811 = vshll.u32 %v1772, 16
      %v1813 = vrot.slane %v1811, 5
      %v1814 = vsel %vm1781, %v1809, %v1813
      %v1815 = vshrl.u32 %v1772, 16
      %v1817 = vrot.slane %v1815, 4
      %v1818 = vor.u32 %v1817, %v1813
      %v1819 = vrot.slane %v1818, 4
      %v1821 = vshrl.u32 %v1052, 16
      %v1823 = vrot.slane %v1821, 4
      %v1824 = vshll.u32 %v1052, 16
      %v1826 = vrot.slane %v1824, 5
      %v1827 = vor.u32 %v1823, %v1826
      %v1828 = vrot.slane %v1827, 4
      %v1830 = vshll.u32 %v1773, 16
      %v1832 = vrot.slane %v1830, 5
      %v1833 = vsel %vm1781, %v1828, %v1832
      %v1834 = vshrl.u32 %v1773, 16
      %v1836 = vrot.slane %v1834, 4
      %v1837 = vor.u32 %v1836, %v1832
      %v1838 = vrot.slane %v1837, 4
      %v1840 = vshrl.u32 %v1054, 16
      %v1842 = vrot.slane %v1840, 4
      %v1843 = vshll.u32 %v1054, 16
      %v1845 = vrot.slane %v1843, 5
      %v1846 = vor.u32 %v1842, %v1845
      %v1847 = vrot.slane %v1846, 4
      %v1849 = vshll.u32 %v1774, 16
      %v1851 = vrot.slane %v1849, 5
      %v1852 = vsel %vm1781, %v1847, %v1851
      %v1853 = vshrl.u32 %v1774, 16
      %v1855 = vrot.slane %v1853, 4
      %v1856 = vor.u32 %v1855, %v1851
      %v1857 = vrot.slane %v1856, 4
      %v1859 = vshrl.u32 %v1056, 16
      %v1861 = vrot.slane %v1859, 4
      %v1862 = vshll.u32 %v1056, 16
      %v1864 = vrot.slane %v1862, 5
      %v1865 = vor.u32 %v1861, %v1864
      %v1866 = vrot.slane %v1865, 4
      %v1868 = vshll.u32 %v1775, 16
      %v1870 = vrot.slane %v1868, 5
      %v1871 = vsel %vm1781, %v1866, %v1870
      %v1872 = vshrl.u32 %v1775, 16
      %v1874 = vrot.slane %v1872, 4
      %v1875 = vor.u32 %v1874, %v1870
      %v1876 = vrot.slane %v1875, 4
      %v1878 = vshrl.u32 %v1058, 16
      %v1880 = vrot.slane %v1878, 4
      %v1881 = vshll.u32 %v1058, 16
      %v1883 = vrot.slane %v1881, 5
      %v1884 = vor.u32 %v1880, %v1883
      %v1885 = vrot.slane %v1884, 4
      %v1887 = vshll.u32 %v1776, 16
      %v1889 = vrot.slane %v1887, 5
      %v1890 = vsel %vm1781, %v1885, %v1889
      %v1891 = vshrl.u32 %v1776, 16
      %v1893 = vrot.slane %v1891, 4
      %v1894 = vor.u32 %v1893, %v1889
      %v1895 = vrot.slane %v1894, 4
      %v1897 = vshrl.u32 %v1060, 16
      %v1899 = vrot.slane %v1897, 4
      %v1900 = vshll.u32 %v1060, 16
      %v1902 = vrot.slane %v1900, 5
      %v1903 = vor.u32 %v1899, %v1902
      %v1904 = vrot.slane %v1903, 4
      %v1906 = vshll.u32 %v1777, 16
      %v1908 = vrot.slane %v1906, 5
      %v1909 = vsel %vm1781, %v1904, %v1908
      %v1910 = vshrl.u32 %v1777, 16
      %v1912 = vrot.slane %v1910, 4
      %v1913 = vor.u32 %v1912, %v1908
      %v1914 = vrot.slane %v1913, 4
      %v1916 = vshrl.u32 %v1062, 16
      %v1918 = vrot.slane %v1916, 4
      %v1919 = vshll.u32 %v1062, 16
      %v1921 = vrot.slane %v1919, 5
      %v1922 = vor.u32 %v1918, %v1921
      %v1923 = vrot.slane %v1922, 4
      %v1925 = vshll.u32 %v1778, 16
      %v1927 = vrot.slane %v1925, 5
      %v1928 = vsel %vm1781, %v1923, %v1927
      %v1929 = vshrl.u32 %v1778, 16
      %v1931 = vrot.slane %v1929, 4
      %v1932 = vor.u32 %v1931, %v1927
      %v1933 = vrot.slane %v1932, 4
      %v1950 = vcombine.low %v1795, %v1871
      %v1952 = vunpack.c.l.s4 1983009808
      %v1953 = vunpack.c.0.s8 %v1952
      %v1954 = vlaneseq
      %v1955 = vshrl.u32 %v1954, 7
      %v1956 = vsub.s32 %v1953, %v1955
      %v1957 = vrot.slane %v1950, %v1956
      %v1958 = vcombine.low %v1833, %v1909
      %v1960 = vunpack.c.l.s4 1983009808
      %v1961 = vunpack.c.0.s8 %v1960
      %v1962 = vlaneseq
      %v1963 = vshrl.u32 %v1962, 7
      %v1964 = vsub.s32 %v1961, %v1963
      %v1965 = vrot.slane %v1958, %v1964
      %v1966 = vcombine.low %v1957, %v1965
      %v1967 = vcombine.high %v1957, %v1965
      %v1969 = vunpack.c.l.s4 1934713408
      %v1970 = vunpack.c.0.s8 %v1969
      %v1971 = vlaneseq
      %v1972 = vshrl.u32 %v1971, 7
      %v1973 = vsub.s32 %v1970, %v1972
      %v1974 = vrot.slane %v1966, %v1973
      %v1976 = vunpack.c.l.s4 1934713408
      %v1977 = vunpack.c.0.s8 %v1976
      %v1978 = vlaneseq
      %v1979 = vshrl.u32 %v1978, 7
      %v1980 = vsub.s32 %v1977, %v1979
      %v1981 = vrot.slane %v1967, %v1980
      %v1982 = vcombine.high %v1974, 0
      %v1983 = vcombine.high %v1981, 0
      %v1984 = vcombine.low %v1814, %v1890
      %v1986 = vunpack.c.l.s4 1983009808
      %v1987 = vunpack.c.0.s8 %v1986
      %v1988 = vlaneseq
      %v1989 = vshrl.u32 %v1988, 7
      %v1990 = vsub.s32 %v1987, %v1989
      %v1991 = vrot.slane %v1984, %v1990
      %v1992 = vcombine.low %v1852, %v1928
      %v1994 = vunpack.c.l.s4 1983009808
      %v1995 = vunpack.c.0.s8 %v1994
      %v1996 = vlaneseq
      %v1997 = vshrl.u32 %v1996, 7
      %v1998 = vsub.s32 %v1995, %v1997
      %v1999 = vrot.slane %v1992, %v1998
      %v2000 = vcombine.low %v1991, %v1999
      %v2001 = vcombine.high %v1991, %v1999
      %v2003 = vunpack.c.l.s4 1934713408
      %v2004 = vunpack.c.0.s8 %v2003
      %v2005 = vlaneseq
      %v2006 = vshrl.u32 %v2005, 7
      %v2007 = vsub.s32 %v2004, %v2006
      %v2008 = vrot.slane %v2000, %v2007
      %v2010 = vunpack.c.l.s4 1934713408
      %v2011 = vunpack.c.0.s8 %v2010
      %v2012 = vlaneseq
      %v2013 = vshrl.u32 %v2012, 7
      %v2014 = vsub.s32 %v2011, %v2013
      %v2015 = vrot.slane %v2001, %v2014
      %v2016 = vcombine.high %v2008, 0
      %v2017 = vcombine.high %v2015, 0
      %v2018 = vcombine.low %v1800, %v1876
      %v2020 = vunpack.c.l.s4 1983009808
      %v2021 = vunpack.c.0.s8 %v2020
      %v2022 = vlaneseq
      %v2023 = vshrl.u32 %v2022, 7
      %v2024 = vsub.s32 %v2021, %v2023
      %v2025 = vrot.slane %v2018, %v2024
      %v2026 = vcombine.low %v1838, %v1914
      %v2028 = vunpack.c.l.s4 1983009808
      %v2029 = vunpack.c.0.s8 %v2028
      %v2030 = vlaneseq
      %v2031 = vshrl.u32 %v2030, 7
      %v2032 = vsub.s32 %v2029, %v2031
      %v2033 = vrot.slane %v2026, %v2032
      %v2034 = vcombine.low %v2025, %v2033
      %v2036 = vunpack.c.l.s4 1934713408
      %v2037 = vunpack.c.0.s8 %v2036
      %v2038 = vlaneseq
      %v2039 = vshrl.u32 %v2038, 7
      %v2040 = vsub.s32 %v2037, %v2039
      %v2041 = vrot.slane %v2034, %v2040
      %v2042 = vcombine.low %v1819, %v1895
      %v2044 = vunpack.c.l.s4 1983009808
      %v2045 = vunpack.c.0.s8 %v2044
      %v2046 = vlaneseq
      %v2047 = vshrl.u32 %v2046, 7
      %v2048 = vsub.s32 %v2045, %v2047
      %v2049 = vrot.slane %v2042, %v2048
      %v2050 = vcombine.low %v1857, %v1933
      %v2052 = vunpack.c.l.s4 1983009808
      %v2053 = vunpack.c.0.s8 %v2052
      %v2054 = vlaneseq
      %v2055 = vshrl.u32 %v2054, 7
      %v2056 = vsub.s32 %v2053, %v2055
      %v2057 = vrot.slane %v2050, %v2056
      %v2058 = vcombine.low %v2049, %v2057
      %v2060 = vunpack.c.l.s4 1934713408
      %v2061 = vunpack.c.0.s8 %v2060
      %v2062 = vlaneseq
      %v2063 = vshrl.u32 %v2062, 7
      %v2064 = vsub.s32 %v2061, %v2063
      %v2065 = vrot.slane %v2058, %v2064
      %v2068 = vpack.i.b16 %v2008, %v1974
      %v2069 = vshrl.u32 %v1974, 16
      %v2070 = vshrl.u32 %v2008, 16
      %v2071 = vpack.i.b16 %v2070, %v2069
      %v2074 = vpack.i.b16 %v2016, %v1982
      %v2075 = vshrl.u32 %v1982, 16
      %v2076 = vshrl.u32 %v2016, 16
      %v2077 = vpack.i.b16 %v2076, %v2075
      %v2080 = vpack.i.b16 %v2015, %v1981
      %v2081 = vshrl.u32 %v1981, 16
      %v2082 = vshrl.u32 %v2015, 16
      %v2083 = vpack.i.b16 %v2082, %v2081
      %v2086 = vpack.i.b16 %v2017, %v1983
      %v2087 = vshrl.u32 %v1983, 16
      %v2088 = vshrl.u32 %v2017, 16
      %v2089 = vpack.i.b16 %v2088, %v2087
      %v2092 = vpack.i.b16 %v2065, %v2041
      %v2093 = vshrl.u32 %v2041, 16
      %v2094 = vshrl.u32 %v2065, 16
      %v2095 = vpack.i.b16 %v2094, %v2093
      %v2096 = vunpack.c.l.b16 %v2071
      %v2097 = vpack.c.b16 %v2096, %v2096
      %2098 = vrot.lane.b32.xlu0 %v2097, 16
      %v2099 = vpop.permute.xlu0 %2098
      %v2100 = vunpack.c.l.b16 %v2074
      %v2101 = vpack.c.b16 %v2100, %v2100
      %2102 = vrot.lane.b32.xlu0 %v2101, 32
      %v2103 = vpop.permute.xlu0 %2102
      %v2104 = vunpack.c.l.b16 %v2077
      %v2105 = vpack.c.b16 %v2104, %v2104
      %2106 = vrot.lane.b32.xlu0 %v2105, 48
      %v2107 = vpop.permute.xlu0 %2106
      %v2108 = vunpack.c.l.b16 %v2080
      %v2109 = vpack.c.b16 %v2108, %v2108
      %2110 = vrot.lane.b32.xlu0 %v2109, 64
      %v2111 = vpop.permute.xlu0 %2110
      %v2112 = vunpack.c.l.b16 %v2083
      %v2113 = vpack.c.b16 %v2112, %v2112
      %2114 = vrot.lane.b32.xlu0 %v2113, 80
      %v2115 = vpop.permute.xlu0 %2114
      %v2116 = vunpack.c.l.b16 %v2086
      %v2117 = vpack.c.b16 %v2116, %v2116
      %2118 = vrot.lane.b32.xlu0 %v2117, 96
      %v2119 = vpop.permute.xlu0 %2118
      %v2120 = vunpack.c.l.b16 %v2089
      %v2121 = vpack.c.b16 %v2120, %v2120
      %2122 = vrot.lane.b32.xlu0 %v2121, 112
      %v2123 = vpop.permute.xlu0 %2122
      %v2124 = vunpack.c.l.b16 %v2095
      %v2125 = vpack.c.b16 %v2124, %v2124
      %2126 = vrot.lane.b32.xlu0 %v2125, 16
      %v2127 = vpop.permute.xlu0 %2126
      %v2130 = vsel %vm1242, %v2068, %v2099
      %v2132 = vsel %vm1246, %v2130, %v2103
      %v2134 = vsel %vm1249, %v2132, %v2107
      %v2136 = vsel %vm1252, %v2134, %v2111
      %v2138 = vsel %vm1255, %v2136, %v2115
      %v2140 = vsel %vm1258, %v2138, %v2119
      %v2142 = vsel %vm1261, %v2140, %v2123
      %v2145 = vsel %vm1242, %v2092, %v2127
      %2146 = vrot.lane.b32.xlu0 %v1795, 127
      %v2147 = vpop.permute.xlu0 %2146
      %2148 = vrot.lane.b32.xlu0 %v1800, 127
      %v2149 = vpop.permute.xlu0 %2148
      %2150 = vrot.lane.b32.xlu0 %v1814, 127
      %v2151 = vpop.permute.xlu0 %2150
      %2152 = vrot.lane.b32.xlu0 %v1819, 127
      %v2153 = vpop.permute.xlu0 %2152
      %2154 = vrot.lane.b32.xlu0 %v1833, 127
      %v2155 = vpop.permute.xlu0 %2154
      %2156 = vrot.lane.b32.xlu0 %v1838, 127
      %v2157 = vpop.permute.xlu0 %2156
      %2158 = vrot.lane.b32.xlu0 %v1852, 127
      %v2159 = vpop.permute.xlu0 %2158
      %2160 = vrot.lane.b32.xlu0 %v1857, 127
      %v2161 = vpop.permute.xlu0 %2160
      %2162 = vrot.lane.b32.xlu0 %v1871, 127
      %v2163 = vpop.permute.xlu0 %2162
      %2164 = vrot.lane.b32.xlu0 %v1876, 127
      %v2165 = vpop.permute.xlu0 %2164
      %2166 = vrot.lane.b32.xlu0 %v1890, 127
      %v2167 = vpop.permute.xlu0 %2166
      %2168 = vrot.lane.b32.xlu0 %v1895, 127
      %v2169 = vpop.permute.xlu0 %2168
      %2170 = vrot.lane.b32.xlu0 %v1909, 127
      %v2171 = vpop.permute.xlu0 %2170
      %2172 = vrot.lane.b32.xlu0 %v1914, 127
      %v2173 = vpop.permute.xlu0 %2172
      %2174 = vrot.lane.b32.xlu0 %v1928, 127
      %v2175 = vpop.permute.xlu0 %2174
      %2176 = vrot.lane.b32.xlu0 %v1933, 127
      %v2177 = vpop.permute.xlu0 %2176
      %v2194 = vcombine.low %v2147, %v2163
      %v2196 = vunpack.c.l.s4 1983009808
      %v2197 = vunpack.c.0.s8 %v2196
      %v2198 = vlaneseq
      %v2199 = vshrl.u32 %v2198, 7
      %v2200 = vsub.s32 %v2197, %v2199
      %v2201 = vrot.slane %v2194, %v2200
      %v2202 = vcombine.low %v2155, %v2171
      %v2204 = vunpack.c.l.s4 1983009808
      %v2205 = vunpack.c.0.s8 %v2204
      %v2206 = vlaneseq
      %v2207 = vshrl.u32 %v2206, 7
      %v2208 = vsub.s32 %v2205, %v2207
      %v2209 = vrot.slane %v2202, %v2208
      %v2210 = vcombine.low %v2201, %v2209
      %v2211 = vcombine.high %v2201, %v2209
      %v2213 = vunpack.c.l.s4 1934713408
      %v2214 = vunpack.c.0.s8 %v2213
      %v2215 = vlaneseq
      %v2216 = vshrl.u32 %v2215, 7
      %v2217 = vsub.s32 %v2214, %v2216
      %v2218 = vrot.slane %v2210, %v2217
      %v2220 = vunpack.c.l.s4 1934713408
      %v2221 = vunpack.c.0.s8 %v2220
      %v2222 = vlaneseq
      %v2223 = vshrl.u32 %v2222, 7
      %v2224 = vsub.s32 %v2221, %v2223
      %v2225 = vrot.slane %v2211, %v2224
      %v2226 = vcombine.high %v2218, 0
      %v2227 = vcombine.high %v2225, 0
      %v2228 = vcombine.low %v2151, %v2167
      %v2230 = vunpack.c.l.s4 1983009808
      %v2231 = vunpack.c.0.s8 %v2230
      %v2232 = vlaneseq
      %v2233 = vshrl.u32 %v2232, 7
      %v2234 = vsub.s32 %v2231, %v2233
      %v2235 = vrot.slane %v2228, %v2234
      %v2236 = vcombine.low %v2159, %v2175
      %v2238 = vunpack.c.l.s4 1983009808
      %v2239 = vunpack.c.0.s8 %v2238
      %v2240 = vlaneseq
      %v2241 = vshrl.u32 %v2240, 7
      %v2242 = vsub.s32 %v2239, %v2241
      %v2243 = vrot.slane %v2236, %v2242
      %v2244 = vcombine.low %v2235, %v2243
      %v2245 = vcombine.high %v2235, %v2243
      %v2247 = vunpack.c.l.s4 1934713408
      %v2248 = vunpack.c.0.s8 %v2247
      %v2249 = vlaneseq
      %v2250 = vshrl.u32 %v2249, 7
      %v2251 = vsub.s32 %v2248, %v2250
      %v2252 = vrot.slane %v2244, %v2251
      %v2254 = vunpack.c.l.s4 1934713408
      %v2255 = vunpack.c.0.s8 %v2254
      %v2256 = vlaneseq
      %v2257 = vshrl.u32 %v2256, 7
      %v2258 = vsub.s32 %v2255, %v2257
      %v2259 = vrot.slane %v2245, %v2258
      %v2260 = vcombine.high %v2252, 0
      %v2261 = vcombine.high %v2259, 0
      %v2262 = vcombine.low %v2149, %v2165
      %v2264 = vunpack.c.l.s4 1983009808
      %v2265 = vunpack.c.0.s8 %v2264
      %v2266 = vlaneseq
      %v2267 = vshrl.u32 %v2266, 7
      %v2268 = vsub.s32 %v2265, %v2267
      %v2269 = vrot.slane %v2262, %v2268
      %v2270 = vcombine.low %v2157, %v2173
      %v2272 = vunpack.c.l.s4 1983009808
      %v2273 = vunpack.c.0.s8 %v2272
      %v2274 = vlaneseq
      %v2275 = vshrl.u32 %v2274, 7
      %v2276 = vsub.s32 %v2273, %v2275
      %v2277 = vrot.slane %v2270, %v2276
      %v2278 = vcombine.low %v2269, %v2277
      %v2280 = vunpack.c.l.s4 1934713408
      %v2281 = vunpack.c.0.s8 %v2280
      %v2282 = vlaneseq
      %v2283 = vshrl.u32 %v2282, 7
      %v2284 = vsub.s32 %v2281, %v2283
      %v2285 = vrot.slane %v2278, %v2284
      %v2286 = vcombine.low %v2153, %v2169
      %v2288 = vunpack.c.l.s4 1983009808
      %v2289 = vunpack.c.0.s8 %v2288
      %v2290 = vlaneseq
      %v2291 = vshrl.u32 %v2290, 7
      %v2292 = vsub.s32 %v2289, %v2291
      %v2293 = vrot.slane %v2286, %v2292
      %v2294 = vcombine.low %v2161, %v2177
      %v2296 = vunpack.c.l.s4 1983009808
      %v2297 = vunpack.c.0.s8 %v2296
      %v2298 = vlaneseq
      %v2299 = vshrl.u32 %v2298, 7
      %v2300 = vsub.s32 %v2297, %v2299
      %v2301 = vrot.slane %v2294, %v2300
      %v2302 = vcombine.low %v2293, %v2301
      %v2304 = vunpack.c.l.s4 1934713408
      %v2305 = vunpack.c.0.s8 %v2304
      %v2306 = vlaneseq
      %v2307 = vshrl.u32 %v2306, 7
      %v2308 = vsub.s32 %v2305, %v2307
      %v2309 = vrot.slane %v2302, %v2308
      %v2312 = vpack.i.b16 %v2252, %v2218
      %v2313 = vshrl.u32 %v2218, 16
      %v2314 = vshrl.u32 %v2252, 16
      %v2315 = vpack.i.b16 %v2314, %v2313
      %v2318 = vpack.i.b16 %v2260, %v2226
      %v2319 = vshrl.u32 %v2226, 16
      %v2320 = vshrl.u32 %v2260, 16
      %v2321 = vpack.i.b16 %v2320, %v2319
      %v2324 = vpack.i.b16 %v2259, %v2225
      %v2325 = vshrl.u32 %v2225, 16
      %v2326 = vshrl.u32 %v2259, 16
      %v2327 = vpack.i.b16 %v2326, %v2325
      %v2330 = vpack.i.b16 %v2261, %v2227
      %v2331 = vshrl.u32 %v2227, 16
      %v2332 = vshrl.u32 %v2261, 16
      %v2333 = vpack.i.b16 %v2332, %v2331
      %v2336 = vpack.i.b16 %v2309, %v2285
      %v2337 = vshrl.u32 %v2285, 16
      %v2338 = vshrl.u32 %v2309, 16
      %v2339 = vpack.i.b16 %v2338, %v2337
      %v2340 = vunpack.c.l.b16 %v2315
      %v2341 = vpack.c.b16 %v2340, %v2340
      %2342 = vrot.lane.b32.xlu0 %v2341, 16
      %v2343 = vpop.permute.xlu0 %2342
      %v2344 = vunpack.c.l.b16 %v2318
      %v2345 = vpack.c.b16 %v2344, %v2344
      %2346 = vrot.lane.b32.xlu0 %v2345, 32
      %v2347 = vpop.permute.xlu0 %2346
      %v2348 = vunpack.c.l.b16 %v2321
      %v2349 = vpack.c.b16 %v2348, %v2348
      %2350 = vrot.lane.b32.xlu0 %v2349, 48
      %v2351 = vpop.permute.xlu0 %2350
      %v2352 = vunpack.c.l.b16 %v2324
      %v2353 = vpack.c.b16 %v2352, %v2352
      %2354 = vrot.lane.b32.xlu0 %v2353, 64
      %v2355 = vpop.permute.xlu0 %2354
      %v2356 = vunpack.c.l.b16 %v2327
      %v2357 = vpack.c.b16 %v2356, %v2356
      %2358 = vrot.lane.b32.xlu0 %v2357, 80
      %v2359 = vpop.permute.xlu0 %2358
      %v2360 = vunpack.c.l.b16 %v2330
      %v2361 = vpack.c.b16 %v2360, %v2360
      %2362 = vrot.lane.b32.xlu0 %v2361, 96
      %v2363 = vpop.permute.xlu0 %2362
      %v2364 = vunpack.c.l.b16 %v2333
      %v2365 = vpack.c.b16 %v2364, %v2364
      %2366 = vrot.lane.b32.xlu0 %v2365, 112
      %v2367 = vpop.permute.xlu0 %2366
      %v2368 = vunpack.c.l.b16 %v2339
      %v2369 = vpack.c.b16 %v2368, %v2368
      %2370 = vrot.lane.b32.xlu0 %v2369, 16
      %v2371 = vpop.permute.xlu0 %2370
      %v2374 = vsel %vm1242, %v2312, %v2343
      %v2376 = vsel %vm1246, %v2374, %v2347
      %v2378 = vsel %vm1249, %v2376, %v2351
      %v2380 = vsel %vm1252, %v2378, %v2355
      %v2382 = vsel %vm1255, %v2380, %v2359
      %v2384 = vsel %vm1258, %v2382, %v2363
      %v2386 = vsel %vm1261, %v2384, %v2367
      %v2389 = vsel %vm1242, %v2336, %v2371
      %2390 = vrot.lane.b32.xlu0 %v1795, 126
      %v2391 = vpop.permute.xlu0 %2390
      %2392 = vrot.lane.b32.xlu0 %v1800, 126
      %v2393 = vpop.permute.xlu0 %2392
      %2394 = vrot.lane.b32.xlu0 %v1814, 126
      %v2395 = vpop.permute.xlu0 %2394
      %2396 = vrot.lane.b32.xlu0 %v1819, 126
      %v2397 = vpop.permute.xlu0 %2396
      %2398 = vrot.lane.b32.xlu0 %v1833, 126
      %v2399 = vpop.permute.xlu0 %2398
      %2400 = vrot.lane.b32.xlu0 %v1838, 126
      %v2401 = vpop.permute.xlu0 %2400
      %2402 = vrot.lane.b32.xlu0 %v1852, 126
      %v2403 = vpop.permute.xlu0 %2402
      %2404 = vrot.lane.b32.xlu0 %v1857, 126
      %v2405 = vpop.permute.xlu0 %2404
      %2406 = vrot.lane.b32.xlu0 %v1871, 126
      %v2407 = vpop.permute.xlu0 %2406
      %2408 = vrot.lane.b32.xlu0 %v1876, 126
      %v2409 = vpop.permute.xlu0 %2408
      %2410 = vrot.lane.b32.xlu0 %v1890, 126
      %v2411 = vpop.permute.xlu0 %2410
      %2412 = vrot.lane.b32.xlu0 %v1895, 126
      %v2413 = vpop.permute.xlu0 %2412
      %2414 = vrot.lane.b32.xlu0 %v1909, 126
      %v2415 = vpop.permute.xlu0 %2414
      %2416 = vrot.lane.b32.xlu0 %v1914, 126
      %v2417 = vpop.permute.xlu0 %2416
      %2418 = vrot.lane.b32.xlu0 %v1928, 126
      %v2419 = vpop.permute.xlu0 %2418
      %2420 = vrot.lane.b32.xlu0 %v1933, 126
      %v2421 = vpop.permute.xlu0 %2420
      %v2438 = vcombine.low %v2391, %v2407
      %v2440 = vunpack.c.l.s4 1983009808
      %v2441 = vunpack.c.0.s8 %v2440
      %v2442 = vlaneseq
      %v2443 = vshrl.u32 %v2442, 7
      %v2444 = vsub.s32 %v2441, %v2443
      %v2445 = vrot.slane %v2438, %v2444
      %v2446 = vcombine.low %v2399, %v2415
      %v2448 = vunpack.c.l.s4 1983009808
      %v2449 = vunpack.c.0.s8 %v2448
      %v2450 = vlaneseq
      %v2451 = vshrl.u32 %v2450, 7
      %v2452 = vsub.s32 %v2449, %v2451
      %v2453 = vrot.slane %v2446, %v2452
      %v2454 = vcombine.low %v2445, %v2453
      %v2455 = vcombine.high %v2445, %v2453
      %v2457 = vunpack.c.l.s4 1934713408
      %v2458 = vunpack.c.0.s8 %v2457
      %v2459 = vlaneseq
      %v2460 = vshrl.u32 %v2459, 7
      %v2461 = vsub.s32 %v2458, %v2460
      %v2462 = vrot.slane %v2454, %v2461
      %v2464 = vunpack.c.l.s4 1934713408
      %v2465 = vunpack.c.0.s8 %v2464
      %v2466 = vlaneseq
      %v2467 = vshrl.u32 %v2466, 7
      %v2468 = vsub.s32 %v2465, %v2467
      %v2469 = vrot.slane %v2455, %v2468
      %v2470 = vcombine.high %v2462, 0
      %v2471 = vcombine.high %v2469, 0
      %v2472 = vcombine.low %v2395, %v2411
      %v2474 = vunpack.c.l.s4 1983009808
      %v2475 = vunpack.c.0.s8 %v2474
      %v2476 = vlaneseq
      %v2477 = vshrl.u32 %v2476, 7
      %v2478 = vsub.s32 %v2475, %v2477
      %v2479 = vrot.slane %v2472, %v2478
      %v2480 = vcombine.low %v2403, %v2419
      %v2482 = vunpack.c.l.s4 1983009808
      %v2483 = vunpack.c.0.s8 %v2482
      %v2484 = vlaneseq
      %v2485 = vshrl.u32 %v2484, 7
      %v2486 = vsub.s32 %v2483, %v2485
      %v2487 = vrot.slane %v2480, %v2486
      %v2488 = vcombine.low %v2479, %v2487
      %v2489 = vcombine.high %v2479, %v2487
      %v2491 = vunpack.c.l.s4 1934713408
      %v2492 = vunpack.c.0.s8 %v2491
      %v2493 = vlaneseq
      %v2494 = vshrl.u32 %v2493, 7
      %v2495 = vsub.s32 %v2492, %v2494
      %v2496 = vrot.slane %v2488, %v2495
      %v2498 = vunpack.c.l.s4 1934713408
      %v2499 = vunpack.c.0.s8 %v2498
      %v2500 = vlaneseq
      %v2501 = vshrl.u32 %v2500, 7
      %v2502 = vsub.s32 %v2499, %v2501
      %v2503 = vrot.slane %v2489, %v2502
      %v2504 = vcombine.high %v2496, 0
      %v2505 = vcombine.high %v2503, 0
      %v2506 = vcombine.low %v2393, %v2409
      %v2508 = vunpack.c.l.s4 1983009808
      %v2509 = vunpack.c.0.s8 %v2508
      %v2510 = vlaneseq
      %v2511 = vshrl.u32 %v2510, 7
      %v2512 = vsub.s32 %v2509, %v2511
      %v2513 = vrot.slane %v2506, %v2512
      %v2514 = vcombine.low %v2401, %v2417
      %v2516 = vunpack.c.l.s4 1983009808
      %v2517 = vunpack.c.0.s8 %v2516
      %v2518 = vlaneseq
      %v2519 = vshrl.u32 %v2518, 7
      %v2520 = vsub.s32 %v2517, %v2519
      %v2521 = vrot.slane %v2514, %v2520
      %v2522 = vcombine.low %v2513, %v2521
      %v2524 = vunpack.c.l.s4 1934713408
      %v2525 = vunpack.c.0.s8 %v2524
      %v2526 = vlaneseq
      %v2527 = vshrl.u32 %v2526, 7
      %v2528 = vsub.s32 %v2525, %v2527
      %v2529 = vrot.slane %v2522, %v2528
      %v2530 = vcombine.low %v2397, %v2413
      %v2532 = vunpack.c.l.s4 1983009808
      %v2533 = vunpack.c.0.s8 %v2532
      %v2534 = vlaneseq
      %v2535 = vshrl.u32 %v2534, 7
      %v2536 = vsub.s32 %v2533, %v2535
      %v2537 = vrot.slane %v2530, %v2536
      %v2538 = vcombine.low %v2405, %v2421
      %v2540 = vunpack.c.l.s4 1983009808
      %v2541 = vunpack.c.0.s8 %v2540
      %v2542 = vlaneseq
      %v2543 = vshrl.u32 %v2542, 7
      %v2544 = vsub.s32 %v2541, %v2543
      %v2545 = vrot.slane %v2538, %v2544
      %v2546 = vcombine.low %v2537, %v2545
      %v2548 = vunpack.c.l.s4 1934713408
      %v2549 = vunpack.c.0.s8 %v2548
      %v2550 = vlaneseq
      %v2551 = vshrl.u32 %v2550, 7
      %v2552 = vsub.s32 %v2549, %v2551
      %v2553 = vrot.slane %v2546, %v2552
      %v2556 = vpack.i.b16 %v2496, %v2462
      %v2557 = vshrl.u32 %v2462, 16
      %v2558 = vshrl.u32 %v2496, 16
      %v2559 = vpack.i.b16 %v2558, %v2557
      %v2562 = vpack.i.b16 %v2504, %v2470
      %v2563 = vshrl.u32 %v2470, 16
      %v2564 = vshrl.u32 %v2504, 16
      %v2565 = vpack.i.b16 %v2564, %v2563
      %v2568 = vpack.i.b16 %v2503, %v2469
      %v2569 = vshrl.u32 %v2469, 16
      %v2570 = vshrl.u32 %v2503, 16
      %v2571 = vpack.i.b16 %v2570, %v2569
      %v2574 = vpack.i.b16 %v2505, %v2471
      %v2575 = vshrl.u32 %v2471, 16
      %v2576 = vshrl.u32 %v2505, 16
      %v2577 = vpack.i.b16 %v2576, %v2575
      %v2580 = vpack.i.b16 %v2553, %v2529
      %v2581 = vshrl.u32 %v2529, 16
      %v2582 = vshrl.u32 %v2553, 16
      %v2583 = vpack.i.b16 %v2582, %v2581
      %v2584 = vunpack.c.l.b16 %v2559
      %v2585 = vpack.c.b16 %v2584, %v2584
      %2586 = vrot.lane.b32.xlu0 %v2585, 16
      %v2587 = vpop.permute.xlu0 %2586
      %v2588 = vunpack.c.l.b16 %v2562
      %v2589 = vpack.c.b16 %v2588, %v2588
      %2590 = vrot.lane.b32.xlu0 %v2589, 32
      %v2591 = vpop.permute.xlu0 %2590
      %v2592 = vunpack.c.l.b16 %v2565
      %v2593 = vpack.c.b16 %v2592, %v2592
      %2594 = vrot.lane.b32.xlu0 %v2593, 48
      %v2595 = vpop.permute.xlu0 %2594
      %v2596 = vunpack.c.l.b16 %v2568
      %v2597 = vpack.c.b16 %v2596, %v2596
      %2598 = vrot.lane.b32.xlu0 %v2597, 64
      %v2599 = vpop.permute.xlu0 %2598
      %v2600 = vunpack.c.l.b16 %v2571
      %v2601 = vpack.c.b16 %v2600, %v2600
      %2602 = vrot.lane.b32.xlu0 %v2601, 80
      %v2603 = vpop.permute.xlu0 %2602
      %v2604 = vunpack.c.l.b16 %v2574
      %v2605 = vpack.c.b16 %v2604, %v2604
      %2606 = vrot.lane.b32.xlu0 %v2605, 96
      %v2607 = vpop.permute.xlu0 %2606
      %v2608 = vunpack.c.l.b16 %v2577
      %v2609 = vpack.c.b16 %v2608, %v2608
      %2610 = vrot.lane.b32.xlu0 %v2609, 112
      %v2611 = vpop.permute.xlu0 %2610
      %v2612 = vunpack.c.l.b16 %v2583
      %v2613 = vpack.c.b16 %v2612, %v2612
      %2614 = vrot.lane.b32.xlu0 %v2613, 16
      %v2615 = vpop.permute.xlu0 %2614
      %v2618 = vsel %vm1242, %v2556, %v2587
      %v2620 = vsel %vm1246, %v2618, %v2591
      %v2622 = vsel %vm1249, %v2620, %v2595
      %v2624 = vsel %vm1252, %v2622, %v2599
      %v2626 = vsel %vm1255, %v2624, %v2603
      %v2628 = vsel %vm1258, %v2626, %v2607
      %v2630 = vsel %vm1261, %v2628, %v2611
      %v2633 = vsel %vm1242, %v2580, %v2615
      %v2634 = vld [vmem:[#allocation2] sm:$0xe]
      %v2635 = vld [vmem:[#allocation2 + $0x8] sm:$0xe]
      %v2636 = vld [vmem:[#allocation2 + $0x10] sm:$0xe]
      %v2637 = vld [vmem:[#allocation2 + $0x18] sm:$0xe]
      %v2638 = vld [vmem:[#allocation2 + $0x20] sm:$0xe]
      %v2639 = vld [vmem:[#allocation2 + $0x28] sm:$0xe]
      %v2640 = vld [vmem:[#allocation2 + $0x30] sm:$0xe]
      %v2641 = vld [vmem:[#allocation2 + $0x38] sm:$0xe]
      %vm2658 = vcmask 1042432
      %vm2659 = vcmask 1046532
      %vm2660 = vmor %vm2658, %vm2659
      %v2661 = vrot.slane %v2634, 5
      %v2662 = vrot.slane %v2661, 4
      %v2663 = vrot.slane %v1771, 5
      %v2664 = vsel %vm2660, %v2662, %v2663
      %v2665 = vrot.slane %v2663, 4
      %v2666 = vrot.slane %v2635, 5
      %v2667 = vrot.slane %v2666, 4
      %v2668 = vrot.slane %v1772, 5
      %v2669 = vsel %vm2660, %v2667, %v2668
      %v2670 = vrot.slane %v2668, 4
      %v2671 = vrot.slane %v2636, 5
      %v2672 = vrot.slane %v2671, 4
      %v2673 = vrot.slane %v1773, 5
      %v2674 = vsel %vm2660, %v2672, %v2673
      %v2675 = vrot.slane %v2673, 4
      %v2676 = vrot.slane %v2637, 5
      %v2677 = vrot.slane %v2676, 4
      %v2678 = vrot.slane %v1774, 5
      %v2679 = vsel %vm2660, %v2677, %v2678
      %v2680 = vrot.slane %v2678, 4
      %v2681 = vrot.slane %v2638, 5
      %v2682 = vrot.slane %v2681, 4
      %v2683 = vrot.slane %v1775, 5
      %v2684 = vsel %vm2660, %v2682, %v2683
      %v2685 = vrot.slane %v2683, 4
      %v2686 = vrot.slane %v2639, 5
      %v2687 = vrot.slane %v2686, 4
      %v2688 = vrot.slane %v1776, 5
      %v2689 = vsel %vm2660, %v2687, %v2688
      %v2690 = vrot.slane %v2688, 4
      %v2691 = vrot.slane %v2640, 5
      %v2692 = vrot.slane %v2691, 4
      %v2693 = vrot.slane %v1777, 5
      %v2694 = vsel %vm2660, %v2692, %v2693
      %v2695 = vrot.slane %v2693, 4
      %v2696 = vrot.slane %v2641, 5
      %v2697 = vrot.slane %v2696, 4
      %v2698 = vrot.slane %v1778, 5
      %v2699 = vsel %vm2660, %v2697, %v2698
      %v2700 = vrot.slane %v2698, 4
      %v2717 = vcombine.low %v2664, %v2684
      %v2719 = vunpack.c.l.s4 1983009808
      %v2720 = vunpack.c.0.s8 %v2719
      %v2721 = vlaneseq
      %v2722 = vshrl.u32 %v2721, 7
      %v2723 = vsub.s32 %v2720, %v2722
      %v2724 = vrot.slane %v2717, %v2723
      %v2725 = vcombine.low %v2674, %v2694
      %v2727 = vunpack.c.l.s4 1983009808
      %v2728 = vunpack.c.0.s8 %v2727
      %v2729 = vlaneseq
      %v2730 = vshrl.u32 %v2729, 7
      %v2731 = vsub.s32 %v2728, %v2730
      %v2732 = vrot.slane %v2725, %v2731
      %v2733 = vcombine.low %v2724, %v2732
      %v2734 = vcombine.high %v2724, %v2732
      %v2736 = vunpack.c.l.s4 1934713408
      %v2737 = vunpack.c.0.s8 %v2736
      %v2738 = vlaneseq
      %v2739 = vshrl.u32 %v2738, 7
      %v2740 = vsub.s32 %v2737, %v2739
      %v2741 = vrot.slane %v2733, %v2740
      %v2743 = vunpack.c.l.s4 1934713408
      %v2744 = vunpack.c.0.s8 %v2743
      %v2745 = vlaneseq
      %v2746 = vshrl.u32 %v2745, 7
      %v2747 = vsub.s32 %v2744, %v2746
      %v2748 = vrot.slane %v2734, %v2747
      %v2749 = vcombine.high %v2741, 0
      %v2750 = vcombine.high %v2748, 0
      %v2751 = vcombine.low %v2669, %v2689
      %v2753 = vunpack.c.l.s4 1983009808
      %v2754 = vunpack.c.0.s8 %v2753
      %v2755 = vlaneseq
      %v2756 = vshrl.u32 %v2755, 7
      %v2757 = vsub.s32 %v2754, %v2756
      %v2758 = vrot.slane %v2751, %v2757
      %v2759 = vcombine.low %v2679, %v2699
      %v2761 = vunpack.c.l.s4 1983009808
      %v2762 = vunpack.c.0.s8 %v2761
      %v2763 = vlaneseq
      %v2764 = vshrl.u32 %v2763, 7
      %v2765 = vsub.s32 %v2762, %v2764
      %v2766 = vrot.slane %v2759, %v2765
      %v2767 = vcombine.low %v2758, %v2766
      %v2768 = vcombine.high %v2758, %v2766
      %v2770 = vunpack.c.l.s4 1934713408
      %v2771 = vunpack.c.0.s8 %v2770
      %v2772 = vlaneseq
      %v2773 = vshrl.u32 %v2772, 7
      %v2774 = vsub.s32 %v2771, %v2773
      %v2775 = vrot.slane %v2767, %v2774
      %v2777 = vunpack.c.l.s4 1934713408
      %v2778 = vunpack.c.0.s8 %v2777
      %v2779 = vlaneseq
      %v2780 = vshrl.u32 %v2779, 7
      %v2781 = vsub.s32 %v2778, %v2780
      %v2782 = vrot.slane %v2768, %v2781
      %v2783 = vcombine.high %v2775, 0
      %v2784 = vcombine.high %v2782, 0
      %v2785 = vcombine.low %v2665, %v2685
      %v2787 = vunpack.c.l.s4 1983009808
      %v2788 = vunpack.c.0.s8 %v2787
      %v2789 = vlaneseq
      %v2790 = vshrl.u32 %v2789, 7
      %v2791 = vsub.s32 %v2788, %v2790
      %v2792 = vrot.slane %v2785, %v2791
      %v2793 = vcombine.low %v2675, %v2695
      %v2795 = vunpack.c.l.s4 1983009808
      %v2796 = vunpack.c.0.s8 %v2795
      %v2797 = vlaneseq
      %v2798 = vshrl.u32 %v2797, 7
      %v2799 = vsub.s32 %v2796, %v2798
      %v2800 = vrot.slane %v2793, %v2799
      %v2801 = vcombine.low %v2792, %v2800
      %v2803 = vunpack.c.l.s4 1934713408
      %v2804 = vunpack.c.0.s8 %v2803
      %v2805 = vlaneseq
      %v2806 = vshrl.u32 %v2805, 7
      %v2807 = vsub.s32 %v2804, %v2806
      %v2808 = vrot.slane %v2801, %v2807
      %v2809 = vcombine.low %v2670, %v2690
      %v2811 = vunpack.c.l.s4 1983009808
      %v2812 = vunpack.c.0.s8 %v2811
      %v2813 = vlaneseq
      %v2814 = vshrl.u32 %v2813, 7
      %v2815 = vsub.s32 %v2812, %v2814
      %v2816 = vrot.slane %v2809, %v2815
      %v2817 = vcombine.low %v2680, %v2700
      %v2819 = vunpack.c.l.s4 1983009808
      %v2820 = vunpack.c.0.s8 %v2819
      %v2821 = vlaneseq
      %v2822 = vshrl.u32 %v2821, 7
      %v2823 = vsub.s32 %v2820, %v2822
      %v2824 = vrot.slane %v2817, %v2823
      %v2825 = vcombine.low %v2816, %v2824
      %v2827 = vunpack.c.l.s4 1934713408
      %v2828 = vunpack.c.0.s8 %v2827
      %v2829 = vlaneseq
      %v2830 = vshrl.u32 %v2829, 7
      %v2831 = vsub.s32 %v2828, %v2830
      %v2832 = vrot.slane %v2825, %v2831
      %v2835 = vpack.i.b16 %v2775, %v2741
      %v2836 = vshrl.u32 %v2741, 16
      %v2837 = vshrl.u32 %v2775, 16
      %v2838 = vpack.i.b16 %v2837, %v2836
      %v2841 = vpack.i.b16 %v2783, %v2749
      %v2842 = vshrl.u32 %v2749, 16
      %v2843 = vshrl.u32 %v2783, 16
      %v2844 = vpack.i.b16 %v2843, %v2842
      %v2847 = vpack.i.b16 %v2782, %v2748
      %v2848 = vshrl.u32 %v2748, 16
      %v2849 = vshrl.u32 %v2782, 16
      %v2850 = vpack.i.b16 %v2849, %v2848
      %v2853 = vpack.i.b16 %v2784, %v2750
      %v2854 = vshrl.u32 %v2750, 16
      %v2855 = vshrl.u32 %v2784, 16
      %v2856 = vpack.i.b16 %v2855, %v2854
      %v2859 = vpack.i.b16 %v2832, %v2808
      %v2860 = vshrl.u32 %v2808, 16
      %v2861 = vshrl.u32 %v2832, 16
      %v2862 = vpack.i.b16 %v2861, %v2860
      %v2863 = vunpack.c.l.b16 %v2838
      %v2864 = vpack.c.b16 %v2863, %v2863
      %2865 = vrot.lane.b32.xlu0 %v2864, 16
      %v2866 = vpop.permute.xlu0 %2865
      %v2867 = vunpack.c.l.b16 %v2841
      %v2868 = vpack.c.b16 %v2867, %v2867
      %2869 = vrot.lane.b32.xlu0 %v2868, 32
      %v2870 = vpop.permute.xlu0 %2869
      %v2871 = vunpack.c.l.b16 %v2844
      %v2872 = vpack.c.b16 %v2871, %v2871
      %2873 = vrot.lane.b32.xlu0 %v2872, 48
      %v2874 = vpop.permute.xlu0 %2873
      %v2875 = vunpack.c.l.b16 %v2847
      %v2876 = vpack.c.b16 %v2875, %v2875
      %2877 = vrot.lane.b32.xlu0 %v2876, 64
      %v2878 = vpop.permute.xlu0 %2877
      %v2879 = vunpack.c.l.b16 %v2850
      %v2880 = vpack.c.b16 %v2879, %v2879
      %2881 = vrot.lane.b32.xlu0 %v2880, 80
      %v2882 = vpop.permute.xlu0 %2881
      %v2883 = vunpack.c.l.b16 %v2853
      %v2884 = vpack.c.b16 %v2883, %v2883
      %2885 = vrot.lane.b32.xlu0 %v2884, 96
      %v2886 = vpop.permute.xlu0 %2885
      %v2887 = vunpack.c.l.b16 %v2856
      %v2888 = vpack.c.b16 %v2887, %v2887
      %2889 = vrot.lane.b32.xlu0 %v2888, 112
      %v2890 = vpop.permute.xlu0 %2889
      %v2891 = vunpack.c.l.b16 %v2862
      %v2892 = vpack.c.b16 %v2891, %v2891
      %2893 = vrot.lane.b32.xlu0 %v2892, 16
      %v2894 = vpop.permute.xlu0 %2893
      %v2897 = vsel %vm1242, %v2835, %v2866
      %v2899 = vsel %vm1246, %v2897, %v2870
      %v2901 = vsel %vm1249, %v2899, %v2874
      %v2903 = vsel %vm1252, %v2901, %v2878
      %v2905 = vsel %vm1255, %v2903, %v2882
      %v2907 = vsel %vm1258, %v2905, %v2886
      %v2909 = vsel %vm1261, %v2907, %v2890
      %v2912 = vsel %vm1242, %v2859, %v2894
      %2913 = vrot.lane.b32.xlu0 %v2664, 127
      %v2914 = vpop.permute.xlu0 %2913
      %2915 = vrot.lane.b32.xlu0 %v2665, 127
      %v2916 = vpop.permute.xlu0 %2915
      %2917 = vrot.lane.b32.xlu0 %v2669, 127
      %v2918 = vpop.permute.xlu0 %2917
      %2919 = vrot.lane.b32.xlu0 %v2670, 127
      %v2920 = vpop.permute.xlu0 %2919
      %2921 = vrot.lane.b32.xlu0 %v2674, 127
      %v2922 = vpop.permute.xlu0 %2921
      %2923 = vrot.lane.b32.xlu0 %v2675, 127
      %v2924 = vpop.permute.xlu0 %2923
      %2925 = vrot.lane.b32.xlu0 %v2679, 127
      %v2926 = vpop.permute.xlu0 %2925
      %2927 = vrot.lane.b32.xlu0 %v2680, 127
      %v2928 = vpop.permute.xlu0 %2927
      %2929 = vrot.lane.b32.xlu0 %v2684, 127
      %v2930 = vpop.permute.xlu0 %2929
      %2931 = vrot.lane.b32.xlu0 %v2685, 127
      %v2932 = vpop.permute.xlu0 %2931
      %2933 = vrot.lane.b32.xlu0 %v2689, 127
      %v2934 = vpop.permute.xlu0 %2933
      %2935 = vrot.lane.b32.xlu0 %v2690, 127
      %v2936 = vpop.permute.xlu0 %2935
      %2937 = vrot.lane.b32.xlu0 %v2694, 127
      %v2938 = vpop.permute.xlu0 %2937
      %2939 = vrot.lane.b32.xlu0 %v2695, 127
      %v2940 = vpop.permute.xlu0 %2939
      %2941 = vrot.lane.b32.xlu0 %v2699, 127
      %v2942 = vpop.permute.xlu0 %2941
      %2943 = vrot.lane.b32.xlu0 %v2700, 127
      %v2944 = vpop.permute.xlu0 %2943
      %v2961 = vcombine.low %v2914, %v2930
      %v2963 = vunpack.c.l.s4 1983009808
      %v2964 = vunpack.c.0.s8 %v2963
      %v2965 = vlaneseq
      %v2966 = vshrl.u32 %v2965, 7
      %v2967 = vsub.s32 %v2964, %v2966
      %v2968 = vrot.slane %v2961, %v2967
      %v2969 = vcombine.low %v2922, %v2938
      %v2971 = vunpack.c.l.s4 1983009808
      %v2972 = vunpack.c.0.s8 %v2971
      %v2973 = vlaneseq
      %v2974 = vshrl.u32 %v2973, 7
      %v2975 = vsub.s32 %v2972, %v2974
      %v2976 = vrot.slane %v2969, %v2975
      %v2977 = vcombine.low %v2968, %v2976
      %v2978 = vcombine.high %v2968, %v2976
      %v2980 = vunpack.c.l.s4 1934713408
      %v2981 = vunpack.c.0.s8 %v2980
      %v2982 = vlaneseq
      %v2983 = vshrl.u32 %v2982, 7
      %v2984 = vsub.s32 %v2981, %v2983
      %v2985 = vrot.slane %v2977, %v2984
      %v2987 = vunpack.c.l.s4 1934713408
      %v2988 = vunpack.c.0.s8 %v2987
      %v2989 = vlaneseq
      %v2990 = vshrl.u32 %v2989, 7
      %v2991 = vsub.s32 %v2988, %v2990
      %v2992 = vrot.slane %v2978, %v2991
      %v2993 = vcombine.high %v2985, 0
      %v2994 = vcombine.high %v2992, 0
      %v2995 = vcombine.low %v2918, %v2934
      %v2997 = vunpack.c.l.s4 1983009808
      %v2998 = vunpack.c.0.s8 %v2997
      %v2999 = vlaneseq
      %v3000 = vshrl.u32 %v2999, 7
      %v3001 = vsub.s32 %v2998, %v3000
      %v3002 = vrot.slane %v2995, %v3001
      %v3003 = vcombine.low %v2926, %v2942
      %v3005 = vunpack.c.l.s4 1983009808
      %v3006 = vunpack.c.0.s8 %v3005
      %v3007 = vlaneseq
      %v3008 = vshrl.u32 %v3007, 7
      %v3009 = vsub.s32 %v3006, %v3008
      %v3010 = vrot.slane %v3003, %v3009
      %v3011 = vcombine.low %v3002, %v3010
      %v3012 = vcombine.high %v3002, %v3010
      %v3014 = vunpack.c.l.s4 1934713408
      %v3015 = vunpack.c.0.s8 %v3014
      %v3016 = vlaneseq
      %v3017 = vshrl.u32 %v3016, 7
      %v3018 = vsub.s32 %v3015, %v3017
      %v3019 = vrot.slane %v3011, %v3018
      %v3021 = vunpack.c.l.s4 1934713408
      %v3022 = vunpack.c.0.s8 %v3021
      %v3023 = vlaneseq
      %v3024 = vshrl.u32 %v3023, 7
      %v3025 = vsub.s32 %v3022, %v3024
      %v3026 = vrot.slane %v3012, %v3025
      %v3027 = vcombine.high %v3019, 0
      %v3028 = vcombine.high %v3026, 0
      %v3029 = vcombine.low %v2916, %v2932
      %v3031 = vunpack.c.l.s4 1983009808
      %v3032 = vunpack.c.0.s8 %v3031
      %v3033 = vlaneseq
      %v3034 = vshrl.u32 %v3033, 7
      %v3035 = vsub.s32 %v3032, %v3034
      %v3036 = vrot.slane %v3029, %v3035
      %v3037 = vcombine.low %v2924, %v2940
      %v3039 = vunpack.c.l.s4 1983009808
      %v3040 = vunpack.c.0.s8 %v3039
      %v3041 = vlaneseq
      %v3042 = vshrl.u32 %v3041, 7
      %v3043 = vsub.s32 %v3040, %v3042
      %v3044 = vrot.slane %v3037, %v3043
      %v3045 = vcombine.low %v3036, %v3044
      %v3047 = vunpack.c.l.s4 1934713408
      %v3048 = vunpack.c.0.s8 %v3047
      %v3049 = vlaneseq
      %v3050 = vshrl.u32 %v3049, 7
      %v3051 = vsub.s32 %v3048, %v3050
      %v3052 = vrot.slane %v3045, %v3051
      %v3053 = vcombine.low %v2920, %v2936
      %v3055 = vunpack.c.l.s4 1983009808
      %v3056 = vunpack.c.0.s8 %v3055
      %v3057 = vlaneseq
      %v3058 = vshrl.u32 %v3057, 7
      %v3059 = vsub.s32 %v3056, %v3058
      %v3060 = vrot.slane %v3053, %v3059
      %v3061 = vcombine.low %v2928, %v2944
      %v3063 = vunpack.c.l.s4 1983009808
      %v3064 = vunpack.c.0.s8 %v3063
      %v3065 = vlaneseq
      %v3066 = vshrl.u32 %v3065, 7
      %v3067 = vsub.s32 %v3064, %v3066
      %v3068 = vrot.slane %v3061, %v3067
      %v3069 = vcombine.low %v3060, %v3068
      %v3071 = vunpack.c.l.s4 1934713408
      %v3072 = vunpack.c.0.s8 %v3071
      %v3073 = vlaneseq
      %v3074 = vshrl.u32 %v3073, 7
      %v3075 = vsub.s32 %v3072, %v3074
      %v3076 = vrot.slane %v3069, %v3075
      %v3079 = vpack.i.b16 %v3019, %v2985
      %v3080 = vshrl.u32 %v2985, 16
      %v3081 = vshrl.u32 %v3019, 16
      %v3082 = vpack.i.b16 %v3081, %v3080
      %v3085 = vpack.i.b16 %v3027, %v2993
      %v3086 = vshrl.u32 %v2993, 16
      %v3087 = vshrl.u32 %v3027, 16
      %v3088 = vpack.i.b16 %v3087, %v3086
      %v3091 = vpack.i.b16 %v3026, %v2992
      %v3092 = vshrl.u32 %v2992, 16
      %v3093 = vshrl.u32 %v3026, 16
      %v3094 = vpack.i.b16 %v3093, %v3092
      %v3097 = vpack.i.b16 %v3028, %v2994
      %v3098 = vshrl.u32 %v2994, 16
      %v3099 = vshrl.u32 %v3028, 16
      %v3100 = vpack.i.b16 %v3099, %v3098
      %v3103 = vpack.i.b16 %v3076, %v3052
      %v3104 = vshrl.u32 %v3052, 16
      %v3105 = vshrl.u32 %v3076, 16
      %v3106 = vpack.i.b16 %v3105, %v3104
      %v3107 = vunpack.c.l.b16 %v3082
      %v3108 = vpack.c.b16 %v3107, %v3107
      %3109 = vrot.lane.b32.xlu0 %v3108, 16
      %v3110 = vpop.permute.xlu0 %3109
      %v3111 = vunpack.c.l.b16 %v3085
      %v3112 = vpack.c.b16 %v3111, %v3111
      %3113 = vrot.lane.b32.xlu0 %v3112, 32
      %v3114 = vpop.permute.xlu0 %3113
      %v3115 = vunpack.c.l.b16 %v3088
      %v3116 = vpack.c.b16 %v3115, %v3115
      %3117 = vrot.lane.b32.xlu0 %v3116, 48
      %v3118 = vpop.permute.xlu0 %3117
      %v3119 = vunpack.c.l.b16 %v3091
      %v3120 = vpack.c.b16 %v3119, %v3119
      %3121 = vrot.lane.b32.xlu0 %v3120, 64
      %v3122 = vpop.permute.xlu0 %3121
      %v3123 = vunpack.c.l.b16 %v3094
      %v3124 = vpack.c.b16 %v3123, %v3123
      %3125 = vrot.lane.b32.xlu0 %v3124, 80
      %v3126 = vpop.permute.xlu0 %3125
      %v3127 = vunpack.c.l.b16 %v3097
      %v3128 = vpack.c.b16 %v3127, %v3127
      %3129 = vrot.lane.b32.xlu0 %v3128, 96
      %v3130 = vpop.permute.xlu0 %3129
      %v3131 = vunpack.c.l.b16 %v3100
      %v3132 = vpack.c.b16 %v3131, %v3131
      %3133 = vrot.lane.b32.xlu0 %v3132, 112
      %v3134 = vpop.permute.xlu0 %3133
      %v3135 = vunpack.c.l.b16 %v3106
      %v3136 = vpack.c.b16 %v3135, %v3135
      %3137 = vrot.lane.b32.xlu0 %v3136, 16
      %v3138 = vpop.permute.xlu0 %3137
      %v3141 = vsel %vm1242, %v3079, %v3110
      %v3143 = vsel %vm1246, %v3141, %v3114
      %v3145 = vsel %vm1249, %v3143, %v3118
      %v3147 = vsel %vm1252, %v3145, %v3122
      %v3149 = vsel %vm1255, %v3147, %v3126
      %v3151 = vsel %vm1258, %v3149, %v3130
      %v3153 = vsel %vm1261, %v3151, %v3134
      %v3156 = vsel %vm1242, %v3103, %v3138
      %3157 = vrot.lane.b32.xlu0 %v2664, 126
      %v3158 = vpop.permute.xlu0 %3157
      %3159 = vrot.lane.b32.xlu0 %v2665, 126
      %v3160 = vpop.permute.xlu0 %3159
      %3161 = vrot.lane.b32.xlu0 %v2669, 126
      %v3162 = vpop.permute.xlu0 %3161
      %3163 = vrot.lane.b32.xlu0 %v2670, 126
      %v3164 = vpop.permute.xlu0 %3163
      %3165 = vrot.lane.b32.xlu0 %v2674, 126
      %v3166 = vpop.permute.xlu0 %3165
      %3167 = vrot.lane.b32.xlu0 %v2675, 126
      %v3168 = vpop.permute.xlu0 %3167
      %3169 = vrot.lane.b32.xlu0 %v2679, 126
      %v3170 = vpop.permute.xlu0 %3169
      %3171 = vrot.lane.b32.xlu0 %v2680, 126
      %v3172 = vpop.permute.xlu0 %3171
      %3173 = vrot.lane.b32.xlu0 %v2684, 126
      %v3174 = vpop.permute.xlu0 %3173
      %3175 = vrot.lane.b32.xlu0 %v2685, 126
      %v3176 = vpop.permute.xlu0 %3175
      %3177 = vrot.lane.b32.xlu0 %v2689, 126
      %v3178 = vpop.permute.xlu0 %3177
      %3179 = vrot.lane.b32.xlu0 %v2690, 126
      %v3180 = vpop.permute.xlu0 %3179
      %3181 = vrot.lane.b32.xlu0 %v2694, 126
      %v3182 = vpop.permute.xlu0 %3181
      %3183 = vrot.lane.b32.xlu0 %v2695, 126
      %v3184 = vpop.permute.xlu0 %3183
      %3185 = vrot.lane.b32.xlu0 %v2699, 126
      %v3186 = vpop.permute.xlu0 %3185
      %3187 = vrot.lane.b32.xlu0 %v2700, 126
      %v3188 = vpop.permute.xlu0 %3187
      %v3205 = vcombine.low %v3158, %v3174
      %v3207 = vunpack.c.l.s4 1983009808
      %v3208 = vunpack.c.0.s8 %v3207
      %v3209 = vlaneseq
      %v3210 = vshrl.u32 %v3209, 7
      %v3211 = vsub.s32 %v3208, %v3210
      %v3212 = vrot.slane %v3205, %v3211
      %v3213 = vcombine.low %v3166, %v3182
      %v3215 = vunpack.c.l.s4 1983009808
      %v3216 = vunpack.c.0.s8 %v3215
      %v3217 = vlaneseq
      %v3218 = vshrl.u32 %v3217, 7
      %v3219 = vsub.s32 %v3216, %v3218
      %v3220 = vrot.slane %v3213, %v3219
      %v3221 = vcombine.low %v3212, %v3220
      %v3222 = vcombine.high %v3212, %v3220
      %v3224 = vunpack.c.l.s4 1934713408
      %v3225 = vunpack.c.0.s8 %v3224
      %v3226 = vlaneseq
      %v3227 = vshrl.u32 %v3226, 7
      %v3228 = vsub.s32 %v3225, %v3227
      %v3229 = vrot.slane %v3221, %v3228
      %v3231 = vunpack.c.l.s4 1934713408
      %v3232 = vunpack.c.0.s8 %v3231
      %v3233 = vlaneseq
      %v3234 = vshrl.u32 %v3233, 7
      %v3235 = vsub.s32 %v3232, %v3234
      %v3236 = vrot.slane %v3222, %v3235
      %v3237 = vcombine.high %v3229, 0
      %v3238 = vcombine.high %v3236, 0
      %v3239 = vcombine.low %v3162, %v3178
      %v3241 = vunpack.c.l.s4 1983009808
      %v3242 = vunpack.c.0.s8 %v3241
      %v3243 = vlaneseq
      %v3244 = vshrl.u32 %v3243, 7
      %v3245 = vsub.s32 %v3242, %v3244
      %v3246 = vrot.slane %v3239, %v3245
      %v3247 = vcombine.low %v3170, %v3186
      %v3249 = vunpack.c.l.s4 1983009808
      %v3250 = vunpack.c.0.s8 %v3249
      %v3251 = vlaneseq
      %v3252 = vshrl.u32 %v3251, 7
      %v3253 = vsub.s32 %v3250, %v3252
      %v3254 = vrot.slane %v3247, %v3253
      %v3255 = vcombine.low %v3246, %v3254
      %v3256 = vcombine.high %v3246, %v3254
      %v3258 = vunpack.c.l.s4 1934713408
      %v3259 = vunpack.c.0.s8 %v3258
      %v3260 = vlaneseq
      %v3261 = vshrl.u32 %v3260, 7
      %v3262 = vsub.s32 %v3259, %v3261
      %v3263 = vrot.slane %v3255, %v3262
      %v3265 = vunpack.c.l.s4 1934713408
      %v3266 = vunpack.c.0.s8 %v3265
      %v3267 = vlaneseq
      %v3268 = vshrl.u32 %v3267, 7
      %v3269 = vsub.s32 %v3266, %v3268
      %v3270 = vrot.slane %v3256, %v3269
      %v3271 = vcombine.high %v3263, 0
      %v3272 = vcombine.high %v3270, 0
      %v3273 = vcombine.low %v3160, %v3176
      %v3275 = vunpack.c.l.s4 1983009808
      %v3276 = vunpack.c.0.s8 %v3275
      %v3277 = vlaneseq
      %v3278 = vshrl.u32 %v3277, 7
      %v3279 = vsub.s32 %v3276, %v3278
      %v3280 = vrot.slane %v3273, %v3279
      %v3281 = vcombine.low %v3168, %v3184
      %v3283 = vunpack.c.l.s4 1983009808
      %v3284 = vunpack.c.0.s8 %v3283
      %v3285 = vlaneseq
      %v3286 = vshrl.u32 %v3285, 7
      %v3287 = vsub.s32 %v3284, %v3286
      %v3288 = vrot.slane %v3281, %v3287
      %v3289 = vcombine.low %v3280, %v3288
      %v3291 = vunpack.c.l.s4 1934713408
      %v3292 = vunpack.c.0.s8 %v3291
      %v3293 = vlaneseq
      %v3294 = vshrl.u32 %v3293, 7
      %v3295 = vsub.s32 %v3292, %v3294
      %v3296 = vrot.slane %v3289, %v3295
      %v3297 = vcombine.low %v3164, %v3180
      %v3299 = vunpack.c.l.s4 1983009808
      %v3300 = vunpack.c.0.s8 %v3299
      %v3301 = vlaneseq
      %v3302 = vshrl.u32 %v3301, 7
      %v3303 = vsub.s32 %v3300, %v3302
      %v3304 = vrot.slane %v3297, %v3303
      %v3305 = vcombine.low %v3172, %v3188
      %v3307 = vunpack.c.l.s4 1983009808
      %v3308 = vunpack.c.0.s8 %v3307
      %v3309 = vlaneseq
      %v3310 = vshrl.u32 %v3309, 7
      %v3311 = vsub.s32 %v3308, %v3310
      %v3312 = vrot.slane %v3305, %v3311
      %v3313 = vcombine.low %v3304, %v3312
      %v3315 = vunpack.c.l.s4 1934713408
      %v3316 = vunpack.c.0.s8 %v3315
      %v3317 = vlaneseq
      %v3318 = vshrl.u32 %v3317, 7
      %v3319 = vsub.s32 %v3316, %v3318
      %v3320 = vrot.slane %v3313, %v3319
      %v3323 = vpack.i.b16 %v3263, %v3229
      %v3324 = vshrl.u32 %v3229, 16
      %v3325 = vshrl.u32 %v3263, 16
      %v3326 = vpack.i.b16 %v3325, %v3324
      %v3329 = vpack.i.b16 %v3271, %v3237
      %v3330 = vshrl.u32 %v3237, 16
      %v3331 = vshrl.u32 %v3271, 16
      %v3332 = vpack.i.b16 %v3331, %v3330
      %v3335 = vpack.i.b16 %v3270, %v3236
      %v3336 = vshrl.u32 %v3236, 16
      %v3337 = vshrl.u32 %v3270, 16
      %v3338 = vpack.i.b16 %v3337, %v3336
      %v3341 = vpack.i.b16 %v3272, %v3238
      %v3342 = vshrl.u32 %v3238, 16
      %v3343 = vshrl.u32 %v3272, 16
      %v3344 = vpack.i.b16 %v3343, %v3342
      %v3347 = vpack.i.b16 %v3320, %v3296
      %v3348 = vshrl.u32 %v3296, 16
      %v3349 = vshrl.u32 %v3320, 16
      %v3350 = vpack.i.b16 %v3349, %v3348
      %v3351 = vunpack.c.l.b16 %v3326
      %v3352 = vpack.c.b16 %v3351, %v3351
      %3353 = vrot.lane.b32.xlu0 %v3352, 16
      %v3354 = vpop.permute.xlu0 %3353
      %v3355 = vunpack.c.l.b16 %v3329
      %v3356 = vpack.c.b16 %v3355, %v3355
      %3357 = vrot.lane.b32.xlu0 %v3356, 32
      %v3358 = vpop.permute.xlu0 %3357
      %v3359 = vunpack.c.l.b16 %v3332
      %v3360 = vpack.c.b16 %v3359, %v3359
      %3361 = vrot.lane.b32.xlu0 %v3360, 48
      %v3362 = vpop.permute.xlu0 %3361
      %v3363 = vunpack.c.l.b16 %v3335
      %v3364 = vpack.c.b16 %v3363, %v3363
      %3365 = vrot.lane.b32.xlu0 %v3364, 64
      %v3366 = vpop.permute.xlu0 %3365
      %v3367 = vunpack.c.l.b16 %v3338
      %v3368 = vpack.c.b16 %v3367, %v3367
      %3369 = vrot.lane.b32.xlu0 %v3368, 80
      %v3370 = vpop.permute.xlu0 %3369
      %v3371 = vunpack.c.l.b16 %v3341
      %v3372 = vpack.c.b16 %v3371, %v3371
      %3373 = vrot.lane.b32.xlu0 %v3372, 96
      %v3374 = vpop.permute.xlu0 %3373
      %v3375 = vunpack.c.l.b16 %v3344
      %v3376 = vpack.c.b16 %v3375, %v3375
      %3377 = vrot.lane.b32.xlu0 %v3376, 112
      %v3378 = vpop.permute.xlu0 %3377
      %v3379 = vunpack.c.l.b16 %v3350
      %v3380 = vpack.c.b16 %v3379, %v3379
      %3381 = vrot.lane.b32.xlu0 %v3380, 16
      %v3382 = vpop.permute.xlu0 %3381
      %v3385 = vsel %vm1242, %v3323, %v3354
      %v3387 = vsel %vm1246, %v3385, %v3358
      %v3389 = vsel %vm1249, %v3387, %v3362
      %v3391 = vsel %vm1252, %v3389, %v3366
      %v3393 = vsel %vm1255, %v3391, %v3370
      %v3395 = vsel %vm1258, %v3393, %v3374
      %v3397 = vsel %vm1261, %v3395, %v3378
      %v3400 = vsel %vm1242, %v3347, %v3382
      %v3403 = vrot.slane %v1523, 4
      %v3404 = vrot.slane %v1526, 4
      %v3407 = vrot.slane %v2142, 4
      %v3408 = vrot.slane %v2145, 4
      %v3411 = vrot.slane %v2630, 4
      %v3412 = vrot.slane %v2633, 4
      %v3415 = vrot.slane %v3153, 4
      %v3416 = vrot.slane %v3156, 4
      %v3418 = vsel %vm411, %v1263, %v3403
      %v3421 = vsel %vm411, %v1266, %v3404
      %v3424 = vsel %vm411, %v1767, %v3407
      %v3427 = vsel %vm411, %v1770, %v3408
      %v3430 = vsel %vm411, %v2386, %v3411
      %v3433 = vsel %vm411, %v2389, %v3412
      %v3436 = vsel %vm411, %v2909, %v3415
      %v3439 = vsel %vm411, %v2912, %v3416
      %v3441 = vld [vmem:[%s6] sm:$0x3]
      %v3442 = vld [vmem:[%s7] sm:$0xf]
      %3444 = vset.pattern.permute.xlu0 0
      %3445 = vperm.xlu0 %3444, %v3442
      %v3446 = vpop.permute.xlu0 %3445
      %vm3448 = vcmask 588800
      %v3450 = vsel %vm3448, %v3441, 0
      %v3452 = vsel %vm411, %v3397, 0
      %v3454 = vsel %vm411, %v3400, 0
      %3456 = vmatprep.subr.bf16.mxu0 %v3421
      %3457 = vmatpush1.bf16.msra.mxu0 %v3418
      %3458 = vmatprep.subr.bf16.mxu0 %v3427
      %3459 = vmatpush1.bf16.msra.mxu0 %v3424
      %3460 = vmatprep.subr.bf16.mxu0 %v3433
      %3461 = vmatpush1.bf16.msra.mxu0 %v3430
      %3462 = vmatprep.subr.bf16.mxu0 %v3439
      %3463 = vmatpush1.bf16.msra.mxu0 %v3436
      %3464 = vmatprep.subr.bf16.mxu0 %v3454
      %3465 = vmatpush1.bf16.msra.mxu0 %v3452
      %3466 = vmatprep.subr.bf16.mxu0 0
      %3467 = vmatpush1.bf16.msra.mxu0 0
      %3468 = vmatprep.subr.bf16.mxu0 0
      %3469 = vmatpush1.bf16.msra.mxu0 0
      %3470 = vmatprep.subr.bf16.mxu0 0
      %3471 = vmatpush1.bf16.msra.mxu0 0
      %3472 = vmatprep.subr.bf16.mxu0 0
      %3473 = vmatpush1.bf16.msra.mxu0 0
      %3474 = vmatprep.subr.bf16.mxu0 0
      %3475 = vmatpush1.bf16.msra.mxu0 0
      %3476 = vmatprep.subr.bf16.mxu0 0
      %3477 = vmatpush1.bf16.msra.mxu0 0
      %3478 = vmatprep.subr.bf16.mxu0 0
      %3479 = vmatpush1.bf16.msra.mxu0 0
      %3480 = vmatprep.subr.bf16.mxu0 0
      %3481 = vmatpush1.bf16.msra.mxu0 0
      %3482 = vmatprep.subr.bf16.mxu0 0
      %3483 = vmatpush1.bf16.msra.mxu0 0
      %3484 = vmatprep.subr.bf16.mxu0 0
      %3485 = vmatpush1.bf16.msra.mxu0 0
      %3486 = vmatprep.subr.bf16.mxu0 0
      %3487 = vmatpush1.bf16.msra.mxu0 0
      %3488 = vmatprep.mubr.bf16.mxu0 0
      %3489 = vmatmul.mubr.bf16.gmra.mrb[0].mxu0 %v3450
      %v3490 = vpop.f32.mrb[0].mxu0
      %v3491 = vadd.f32 %v3446, %v3490
      %v3492 = vpop.f32.mrb[0].mxu0
      %v3493 = vadd.f32 %v3446, %v3492
      %v3494 = vpop.f32.mrb[0].mxu0
      %v3495 = vpop.f32.mrb[0].mxu0
      %3496 = vdwg.mxu0
      %v3497 = vmax.f32 %v3491, 0.0
      %v3498 = vmax.f32 %v3493, 0.0
      %3500 = vrot.lane.b32.xlu0 %v3497, 112
      %v3501 = vpop.permute.xlu0 %3500
      %3503 = vrot.lane.b32.xlu0 %v3497, 96
      %v3504 = vpop.permute.xlu0 %3503
      %3506 = vrot.lane.b32.xlu0 %v3497, 80
      %v3507 = vpop.permute.xlu0 %3506
      %3509 = vrot.lane.b32.xlu0 %v3497, 64
      %v3510 = vpop.permute.xlu0 %3509
      %3512 = vrot.lane.b32.xlu0 %v3497, 48
      %v3513 = vpop.permute.xlu0 %3512
      %3515 = vrot.lane.b32.xlu0 %v3497, 32
      %v3516 = vpop.permute.xlu0 %3515
      %3518 = vrot.lane.b32.xlu0 %v3497, 16
      %v3519 = vpop.permute.xlu0 %3518
      %3522 = vrot.lane.b32.xlu0 %v3498, 112
      %v3523 = vpop.permute.xlu0 %3522
      %v3524 = vcombine.low %v3497, %v3504
      %v3526 = vunpack.c.l.s4 1983009808
      %v3527 = vunpack.c.0.s8 %v3526
      %v3528 = vlaneseq
      %v3529 = vshrl.u32 %v3528, 7
      %v3530 = vsub.s32 %v3527, %v3529
      %v3531 = vrot.slane %v3524, %v3530
      %v3532 = vcombine.low %v3501, %v3507
      %v3534 = vunpack.c.l.s4 1983009808
      %v3535 = vunpack.c.0.s8 %v3534
      %v3536 = vlaneseq
      %v3537 = vshrl.u32 %v3536, 7
      %v3538 = vsub.s32 %v3535, %v3537
      %v3539 = vrot.slane %v3532, %v3538
      %v3540 = vcombine.low %v3510, %v3516
      %v3542 = vunpack.c.l.s4 1983009808
      %v3543 = vunpack.c.0.s8 %v3542
      %v3544 = vlaneseq
      %v3545 = vshrl.u32 %v3544, 7
      %v3546 = vsub.s32 %v3543, %v3545
      %v3547 = vrot.slane %v3540, %v3546
      %v3548 = vcombine.low %v3513, %v3519
      %v3550 = vunpack.c.l.s4 1983009808
      %v3551 = vunpack.c.0.s8 %v3550
      %v3552 = vlaneseq
      %v3553 = vshrl.u32 %v3552, 7
      %v3554 = vsub.s32 %v3551, %v3553
      %v3555 = vrot.slane %v3548, %v3554
      %v3556 = vcombine.low %v3531, %v3539
      %v3557 = vcombine.high %v3531, %v3539
      %v3559 = vunpack.c.l.s4 1934713408
      %v3560 = vunpack.c.0.s8 %v3559
      %v3561 = vlaneseq
      %v3562 = vshrl.u32 %v3561, 7
      %v3563 = vsub.s32 %v3560, %v3562
      %v3564 = vrot.slane %v3556, %v3563
      %v3566 = vunpack.c.l.s4 1934713408
      %v3567 = vunpack.c.0.s8 %v3566
      %v3568 = vlaneseq
      %v3569 = vshrl.u32 %v3568, 7
      %v3570 = vsub.s32 %v3567, %v3569
      %v3571 = vrot.slane %v3557, %v3570
      %v3572 = vcombine.low %v3547, %v3555
      %v3573 = vcombine.high %v3547, %v3555
      %v3575 = vunpack.c.l.s4 1934713408
      %v3576 = vunpack.c.0.s8 %v3575
      %v3577 = vlaneseq
      %v3578 = vshrl.u32 %v3577, 7
      %v3579 = vsub.s32 %v3576, %v3578
      %v3580 = vrot.slane %v3572, %v3579
      %v3582 = vunpack.c.l.s4 1934713408
      %v3583 = vunpack.c.0.s8 %v3582
      %v3584 = vlaneseq
      %v3585 = vshrl.u32 %v3584, 7
      %v3586 = vsub.s32 %v3583, %v3585
      %v3587 = vrot.slane %v3573, %v3586
      %v3588 = vcombine.low %v3564, %v3580
      %v3589 = vcombine.high %v3564, %v3580
      %v3590 = vcombine.low %v3571, %v3587
      %v3591 = vcombine.high %v3571, %v3587
      %v3593 = vunpack.c.l.s4 1983009808
      %v3594 = vunpack.c.0.s8 %v3593
      %v3595 = vlaneseq
      %v3596 = vshrl.u32 %v3595, 7
      %v3597 = vsub.s32 %v3594, %v3596
      %v3598 = vrot.slane %v3498, %v3597
      %v3601 = vunpack.c.l.s4 1983009808
      %v3602 = vunpack.c.0.s8 %v3601
      %v3603 = vlaneseq
      %v3604 = vshrl.u32 %v3603, 7
      %v3605 = vsub.s32 %v3602, %v3604
      %v3606 = vrot.slane %v3523, %v3605
      %v3607 = vcombine.low %v3598, %v3606
      %v3608 = vcombine.high %v3598, %v3606
      %v3610 = vunpack.c.l.s4 1934713408
      %v3611 = vunpack.c.0.s8 %v3610
      %v3612 = vlaneseq
      %v3613 = vshrl.u32 %v3612, 7
      %v3614 = vsub.s32 %v3611, %v3613
      %v3615 = vrot.slane %v3607, %v3614
      %v3617 = vunpack.c.l.s4 1934713408
      %v3618 = vunpack.c.0.s8 %v3617
      %v3619 = vlaneseq
      %v3620 = vshrl.u32 %v3619, 7
      %v3621 = vsub.s32 %v3618, %v3620
      %v3622 = vrot.slane %v3608, %v3621
      %v3623 = vcombine.high %v3615, 0.0
      %v3624 = vcombine.high %v3622, 0.0
      %v3625 = vlaneseq
      %v3626 = vshrl.u32 %v3625, 7
      %v3627 = vadd.s32 %v3626, 8
      %s3628 = ssub.s32 %s398, 1
      %v3629 = vstv %s3628
      %v3630 = vadd.s32 %v3626, %v3629
      %v3631 = vadd.s32 %v3627, %v3629
      %vm3632 = vcmp.ge.s32.totalorder %v3630, 0
      %vm3633 = vcmp.ge.s32.totalorder %v3631, 0
      %vm3634 = vcmp.lt.s32.totalorder %v3630, 16
      %vm3635 = vcmp.lt.s32.totalorder %v3631, 16
      %vm3636 = vmand %vm3632, %vm3634
      %vm3637 = vmand %vm3633, %vm3635
      %v3638 = vsel %vm3636, 1, 0
      %v3639 = vsel %vm3637, 1, 0
      %v3640 = vcvt.s32.f32 %v3638
      %v3641 = vcvt.s32.f32 %v3639
      %v3642 = vmul.f32 %v3588, %v3640
      %v3643 = vmul.f32 %v3615, %v3641
      %v3644 = vmul.f32 %v3589, %v3640
      %v3645 = vmul.f32 %v3623, %v3641
      %v3646 = vmul.f32 %v3590, %v3640
      %v3647 = vmul.f32 %v3622, %v3641
      %v3648 = vmul.f32 %v3591, %v3640
      %v3649 = vmul.f32 %v3624, %v3641
      %3650 = vst.msk [vmem:[#allocation3] sm:$0xf] %vm895, 0
      %vm3651 = vcmask 0
      %3652 = vst.msk [vmem:[#allocation3 + $0x4] sm:$0x1] %vm3651, 0
      %3653 = vst.msk [vmem:[#allocation3 + $0x8] sm:$0xf] %vm895, 0
      %3654 = vst.msk [vmem:[#allocation3 + $0xc] sm:$0x1] %vm3651, 0
      %3655 = vst.msk [vmem:[#allocation3 + $0x10] sm:$0xf] %vm895, 0
      %3656 = vst.msk [vmem:[#allocation3 + $0x14] sm:$0x1] %vm3651, 0
      %3657 = vst.msk [vmem:[#allocation3 + $0x18] sm:$0xf] %vm895, 0
      %3658 = vst.msk [vmem:[#allocation3 + $0x1c] sm:$0x1] %vm3651, 0
      %3659 = vst.msk [vmem:[#allocation3] sm:$0xf] %vm913, 0
      %vm3660 = vcmask 139400
      %3661 = vst.msk [vmem:[#allocation3 + $0x4] sm:$0x1] %vm3660, 0
      %3662 = vst.msk [vmem:[#allocation3 + $0x8] sm:$0xf] %vm913, 0
      %3663 = vst.msk [vmem:[#allocation3 + $0xc] sm:$0x1] %vm3660, 0
      %3664 = vst.msk [vmem:[#allocation3 + $0x10] sm:$0xf] %vm913, 0
      %3665 = vst.msk [vmem:[#allocation3 + $0x14] sm:$0x1] %vm3660, 0
      %3666 = vst.msk [vmem:[#allocation3 + $0x18] sm:$0xf] %vm913, 0
      %3667 = vst.msk [vmem:[#allocation3 + $0x1c] sm:$0x1] %vm3660, 0
      %v3668 = vpack.c.bf16 %v3643, %v3642
      %v3669 = vpack.c.bf16 %v3645, %v3644
      %v3670 = vpack.c.bf16 %v3647, %v3646
      %v3671 = vpack.c.bf16 %v3649, %v3648
      %v3676 = vunpack.c.l.b16 %v3668
      %v3677 = vunpack.c.h.b16 %v3668
      %v3678 = vunpack.c.l.b16 %v3669
      %v3679 = vunpack.c.h.b16 %v3669
      %v3680 = vunpack.c.l.b16 %v3670
      %v3681 = vunpack.c.h.b16 %v3670
      %v3682 = vunpack.c.l.b16 %v3671
      %v3683 = vunpack.c.h.b16 %v3671
      %v3684 = vpack.c.b16 %v3676, %v3676
      %v3685 = vpack.c.b16 %v3677, %v3677
      %v3686 = vpack.c.b16 %v3678, %v3678
      %v3687 = vpack.c.b16 %v3679, %v3679
      %v3688 = vpack.c.b16 %v3680, %v3680
      %v3689 = vpack.c.b16 %v3681, %v3681
      %v3690 = vpack.c.b16 %v3682, %v3682
      %v3691 = vpack.c.b16 %v3683, %v3683
      %3692 = vrot.lane.b32.xlu0 %v3684, 1
      %v3693 = vpop.permute.xlu0 %3692
      %3694 = vrot.lane.b32.xlu0 %v3685, 1
      %v3695 = vpop.permute.xlu0 %3694
      %3696 = vrot.lane.b32.xlu0 %v3686, 1
      %v3697 = vpop.permute.xlu0 %3696
      %3698 = vrot.lane.b32.xlu0 %v3687, 1
      %v3699 = vpop.permute.xlu0 %3698
      %3700 = vrot.lane.b32.xlu0 %v3688, 1
      %v3701 = vpop.permute.xlu0 %3700
      %3702 = vrot.lane.b32.xlu0 %v3689, 1
      %v3703 = vpop.permute.xlu0 %3702
      %3704 = vrot.lane.b32.xlu0 %v3690, 1
      %v3705 = vpop.permute.xlu0 %3704
      %3706 = vrot.lane.b32.xlu0 %v3691, 1
      %v3707 = vpop.permute.xlu0 %3706
      %3716 = vst.msk [vmem:[#allocation3] sm:$0xf] %vm987, %v3693
      %vm3717 = vcmask 131080
      %3718 = vst.msk [vmem:[#allocation3 + $0x4] sm:$0x1] %vm3717, %v3695
      %3719 = vst.msk [vmem:[#allocation3 + $0x8] sm:$0xf] %vm987, %v3697
      %3720 = vst.msk [vmem:[#allocation3 + $0xc] sm:$0x1] %vm3717, %v3699
      %3721 = vst.msk [vmem:[#allocation3 + $0x10] sm:$0xf] %vm987, %v3701
      %3722 = vst.msk [vmem:[#allocation3 + $0x14] sm:$0x1] %vm3717, %v3703
      %3723 = vst.msk [vmem:[#allocation3 + $0x18] sm:$0xf] %vm987, %v3705
      %3724 = vst.msk [vmem:[#allocation3 + $0x1c] sm:$0x1] %vm3717, %v3707
      %v3725 = vld [vmem:[#allocation3] sm:$0xf]
      %v3726 = vld [vmem:[#allocation3 + $0x8] sm:$0xf]
      %v3727 = vld [vmem:[#allocation3 + $0x10] sm:$0xf]
      %v3728 = vld [vmem:[#allocation3 + $0x18] sm:$0xf]
      %v3731 = vpack.i.b16 %v3726, %v3725
      %v3732 = vshrl.u32 %v3725, 16
      %v3733 = vshrl.u32 %v3726, 16
      %v3734 = vpack.i.b16 %v3733, %v3732
      %v3737 = vpack.i.b16 %v3728, %v3727
      %v3738 = vshrl.u32 %v3727, 16
      %v3739 = vshrl.u32 %v3728, 16
      %v3740 = vpack.i.b16 %v3739, %v3738
      %v3743 = vunpack.c.l.s4 1983009808
      %v3744 = vunpack.c.0.s8 %v3743
      %v3745 = vlaneseq
      %v3746 = vshrl.u32 %v3745, 7
      %v3747 = vsub.s32 %v3744, %v3746
      %v3748 = vrot.slane %v3731, %v3747
      %v3751 = vunpack.c.l.s4 1983009808
      %v3752 = vunpack.c.0.s8 %v3751
      %v3753 = vlaneseq
      %v3754 = vshrl.u32 %v3753, 7
      %v3755 = vsub.s32 %v3752, %v3754
      %v3756 = vrot.slane %v3737, %v3755
      %v3757 = vcombine.low %v3748, %v3756
      %v3758 = vcombine.high %v3748, %v3756
      %v3760 = vunpack.c.l.s4 1934713408
      %v3761 = vunpack.c.0.s8 %v3760
      %v3762 = vlaneseq
      %v3763 = vshrl.u32 %v3762, 7
      %v3764 = vsub.s32 %v3761, %v3763
      %v3765 = vrot.slane %v3757, %v3764
      %v3767 = vunpack.c.l.s4 1934713408
      %v3768 = vunpack.c.0.s8 %v3767
      %v3769 = vlaneseq
      %v3770 = vshrl.u32 %v3769, 7
      %v3771 = vsub.s32 %v3768, %v3770
      %v3772 = vrot.slane %v3758, %v3771
      %v3773 = vcombine.high %v3765, 0
      %v3774 = vcombine.high %v3772, 0
      %v3777 = vunpack.c.l.s4 1983009808
      %v3778 = vunpack.c.0.s8 %v3777
      %v3779 = vlaneseq
      %v3780 = vshrl.u32 %v3779, 7
      %v3781 = vsub.s32 %v3778, %v3780
      %v3782 = vrot.slane %v3734, %v3781
      %v3785 = vunpack.c.l.s4 1983009808
      %v3786 = vunpack.c.0.s8 %v3785
      %v3787 = vlaneseq
      %v3788 = vshrl.u32 %v3787, 7
      %v3789 = vsub.s32 %v3786, %v3788
      %v3790 = vrot.slane %v3740, %v3789
      %v3791 = vcombine.low %v3782, %v3790
      %v3792 = vcombine.high %v3782, %v3790
      %v3794 = vunpack.c.l.s4 1934713408
      %v3795 = vunpack.c.0.s8 %v3794
      %v3796 = vlaneseq
      %v3797 = vshrl.u32 %v3796, 7
      %v3798 = vsub.s32 %v3795, %v3797
      %v3799 = vrot.slane %v3791, %v3798
      %v3801 = vunpack.c.l.s4 1934713408
      %v3802 = vunpack.c.0.s8 %v3801
      %v3803 = vlaneseq
      %v3804 = vshrl.u32 %v3803, 7
      %v3805 = vsub.s32 %v3802, %v3804
      %v3806 = vrot.slane %v3792, %v3805
      %v3807 = vcombine.high %v3799, 0
      %v3808 = vcombine.high %v3806, 0
      %v3810 = vunpack.c.l.b16 %v3799
      %v3811 = vpack.c.b16 %v3810, %v3810
      %3812 = vrot.lane.b32.xlu0 %v3811, 16
      %v3813 = vpop.permute.xlu0 %3812
      %v3815 = vunpack.c.l.b16 %v3773
      %v3816 = vpack.c.b16 %v3815, %v3815
      %3817 = vrot.lane.b32.xlu0 %v3816, 32
      %v3818 = vpop.permute.xlu0 %3817
      %v3820 = vunpack.c.l.b16 %v3807
      %v3821 = vpack.c.b16 %v3820, %v3820
      %3822 = vrot.lane.b32.xlu0 %v3821, 48
      %v3823 = vpop.permute.xlu0 %3822
      %v3825 = vunpack.c.l.b16 %v3772
      %v3826 = vpack.c.b16 %v3825, %v3825
      %3827 = vrot.lane.b32.xlu0 %v3826, 64
      %v3828 = vpop.permute.xlu0 %3827
      %v3830 = vunpack.c.l.b16 %v3806
      %v3831 = vpack.c.b16 %v3830, %v3830
      %3832 = vrot.lane.b32.xlu0 %v3831, 80
      %v3833 = vpop.permute.xlu0 %3832
      %v3835 = vunpack.c.l.b16 %v3774
      %v3836 = vpack.c.b16 %v3835, %v3835
      %3837 = vrot.lane.b32.xlu0 %v3836, 96
      %v3838 = vpop.permute.xlu0 %3837
      %v3840 = vunpack.c.l.b16 %v3808
      %v3841 = vpack.c.b16 %v3840, %v3840
      %3842 = vrot.lane.b32.xlu0 %v3841, 112
      %v3843 = vpop.permute.xlu0 %3842
      %v3846 = vsel %vm1242, %v3765, %v3813
      %v3848 = vsel %vm1246, %v3846, %v3818
      %v3850 = vsel %vm1249, %v3848, %v3823
      %v3852 = vsel %vm1252, %v3850, %v3828
      %v3854 = vsel %vm1255, %v3852, %v3833
      %v3856 = vsel %vm1258, %v3854, %v3838
      %v3858 = vsel %vm1261, %v3856, %v3843
      %3863 = vrot.lane.b32.xlu0 %v3725, 127
      %v3864 = vpop.permute.xlu0 %3863
      %3865 = vrot.lane.b32.xlu0 %v3726, 127
      %v3866 = vpop.permute.xlu0 %3865
      %3867 = vrot.lane.b32.xlu0 %v3727, 127
      %v3868 = vpop.permute.xlu0 %3867
      %3869 = vrot.lane.b32.xlu0 %v3728, 127
      %v3870 = vpop.permute.xlu0 %3869
      %v3873 = vpack.i.b16 %v3866, %v3864
      %v3874 = vshrl.u32 %v3864, 16
      %v3875 = vshrl.u32 %v3866, 16
      %v3876 = vpack.i.b16 %v3875, %v3874
      %v3879 = vpack.i.b16 %v3870, %v3868
      %v3880 = vshrl.u32 %v3868, 16
      %v3881 = vshrl.u32 %v3870, 16
      %v3882 = vpack.i.b16 %v3881, %v3880
      %v3885 = vunpack.c.l.s4 1983009808
      %v3886 = vunpack.c.0.s8 %v3885
      %v3887 = vlaneseq
      %v3888 = vshrl.u32 %v3887, 7
      %v3889 = vsub.s32 %v3886, %v3888
      %v3890 = vrot.slane %v3873, %v3889
      %v3893 = vunpack.c.l.s4 1983009808
      %v3894 = vunpack.c.0.s8 %v3893
      %v3895 = vlaneseq
      %v3896 = vshrl.u32 %v3895, 7
      %v3897 = vsub.s32 %v3894, %v3896
      %v3898 = vrot.slane %v3879, %v3897
      %v3899 = vcombine.low %v3890, %v3898
      %v3900 = vcombine.high %v3890, %v3898
      %v3902 = vunpack.c.l.s4 1934713408
      %v3903 = vunpack.c.0.s8 %v3902
      %v3904 = vlaneseq
      %v3905 = vshrl.u32 %v3904, 7
      %v3906 = vsub.s32 %v3903, %v3905
      %v3907 = vrot.slane %v3899, %v3906
      %v3909 = vunpack.c.l.s4 1934713408
      %v3910 = vunpack.c.0.s8 %v3909
      %v3911 = vlaneseq
      %v3912 = vshrl.u32 %v3911, 7
      %v3913 = vsub.s32 %v3910, %v3912
      %v3914 = vrot.slane %v3900, %v3913
      %v3915 = vcombine.high %v3907, 0
      %v3916 = vcombine.high %v3914, 0
      %v3919 = vunpack.c.l.s4 1983009808
      %v3920 = vunpack.c.0.s8 %v3919
      %v3921 = vlaneseq
      %v3922 = vshrl.u32 %v3921, 7
      %v3923 = vsub.s32 %v3920, %v3922
      %v3924 = vrot.slane %v3876, %v3923
      %v3927 = vunpack.c.l.s4 1983009808
      %v3928 = vunpack.c.0.s8 %v3927
      %v3929 = vlaneseq
      %v3930 = vshrl.u32 %v3929, 7
      %v3931 = vsub.s32 %v3928, %v3930
      %v3932 = vrot.slane %v3882, %v3931
      %v3933 = vcombine.low %v3924, %v3932
      %v3934 = vcombine.high %v3924, %v3932
      %v3936 = vunpack.c.l.s4 1934713408
      %v3937 = vunpack.c.0.s8 %v3936
      %v3938 = vlaneseq
      %v3939 = vshrl.u32 %v3938, 7
      %v3940 = vsub.s32 %v3937, %v3939
      %v3941 = vrot.slane %v3933, %v3940
      %v3943 = vunpack.c.l.s4 1934713408
      %v3944 = vunpack.c.0.s8 %v3943
      %v3945 = vlaneseq
      %v3946 = vshrl.u32 %v3945, 7
      %v3947 = vsub.s32 %v3944, %v3946
      %v3948 = vrot.slane %v3934, %v3947
      %v3949 = vcombine.high %v3941, 0
      %v3950 = vcombine.high %v3948, 0
      %v3952 = vunpack.c.l.b16 %v3941
      %v3953 = vpack.c.b16 %v3952, %v3952
      %3954 = vrot.lane.b32.xlu0 %v3953, 16
      %v3955 = vpop.permute.xlu0 %3954
      %v3957 = vunpack.c.l.b16 %v3915
      %v3958 = vpack.c.b16 %v3957, %v3957
      %3959 = vrot.lane.b32.xlu0 %v3958, 32
      %v3960 = vpop.permute.xlu0 %3959
      %v3962 = vunpack.c.l.b16 %v3949
      %v3963 = vpack.c.b16 %v3962, %v3962
      %3964 = vrot.lane.b32.xlu0 %v3963, 48
      %v3965 = vpop.permute.xlu0 %3964
      %v3967 = vunpack.c.l.b16 %v3914
      %v3968 = vpack.c.b16 %v3967, %v3967
      %3969 = vrot.lane.b32.xlu0 %v3968, 64
      %v3970 = vpop.permute.xlu0 %3969
      %v3972 = vunpack.c.l.b16 %v3948
      %v3973 = vpack.c.b16 %v3972, %v3972
      %3974 = vrot.lane.b32.xlu0 %v3973, 80
      %v3975 = vpop.permute.xlu0 %3974
      %v3977 = vunpack.c.l.b16 %v3916
      %v3978 = vpack.c.b16 %v3977, %v3977
      %3979 = vrot.lane.b32.xlu0 %v3978, 96
      %v3980 = vpop.permute.xlu0 %3979
      %v3982 = vunpack.c.l.b16 %v3950
      %v3983 = vpack.c.b16 %v3982, %v3982
      %3984 = vrot.lane.b32.xlu0 %v3983, 112
      %v3985 = vpop.permute.xlu0 %3984
      %v3988 = vsel %vm1242, %v3907, %v3955
      %v3990 = vsel %vm1246, %v3988, %v3960
      %v3992 = vsel %vm1249, %v3990, %v3965
      %v3994 = vsel %vm1252, %v3992, %v3970
      %v3996 = vsel %vm1255, %v3994, %v3975
      %v3998 = vsel %vm1258, %v3996, %v3980
      %v4000 = vsel %vm1261, %v3998, %v3985
      %4001 = vrot.lane.b32.xlu0 %v3725, 126
      %v4002 = vpop.permute.xlu0 %4001
      %4003 = vrot.lane.b32.xlu0 %v3726, 126
      %v4004 = vpop.permute.xlu0 %4003
      %4005 = vrot.lane.b32.xlu0 %v3727, 126
      %v4006 = vpop.permute.xlu0 %4005
      %4007 = vrot.lane.b32.xlu0 %v3728, 126
      %v4008 = vpop.permute.xlu0 %4007
      %v4011 = vpack.i.b16 %v4004, %v4002
      %v4012 = vshrl.u32 %v4002, 16
      %v4013 = vshrl.u32 %v4004, 16
      %v4014 = vpack.i.b16 %v4013, %v4012
      %v4017 = vpack.i.b16 %v4008, %v4006
      %v4018 = vshrl.u32 %v4006, 16
      %v4019 = vshrl.u32 %v4008, 16
      %v4020 = vpack.i.b16 %v4019, %v4018
      %v4023 = vunpack.c.l.s4 1983009808
      %v4024 = vunpack.c.0.s8 %v4023
      %v4025 = vlaneseq
      %v4026 = vshrl.u32 %v4025, 7
      %v4027 = vsub.s32 %v4024, %v4026
      %v4028 = vrot.slane %v4011, %v4027
      %v4031 = vunpack.c.l.s4 1983009808
      %v4032 = vunpack.c.0.s8 %v4031
      %v4033 = vlaneseq
      %v4034 = vshrl.u32 %v4033, 7
      %v4035 = vsub.s32 %v4032, %v4034
      %v4036 = vrot.slane %v4017, %v4035
      %v4037 = vcombine.low %v4028, %v4036
      %v4038 = vcombine.high %v4028, %v4036
      %v4040 = vunpack.c.l.s4 1934713408
      %v4041 = vunpack.c.0.s8 %v4040
      %v4042 = vlaneseq
      %v4043 = vshrl.u32 %v4042, 7
      %v4044 = vsub.s32 %v4041, %v4043
      %v4045 = vrot.slane %v4037, %v4044
      %v4047 = vunpack.c.l.s4 1934713408
      %v4048 = vunpack.c.0.s8 %v4047
      %v4049 = vlaneseq
      %v4050 = vshrl.u32 %v4049, 7
      %v4051 = vsub.s32 %v4048, %v4050
      %v4052 = vrot.slane %v4038, %v4051
      %v4053 = vcombine.high %v4045, 0
      %v4054 = vcombine.high %v4052, 0
      %v4057 = vunpack.c.l.s4 1983009808
      %v4058 = vunpack.c.0.s8 %v4057
      %v4059 = vlaneseq
      %v4060 = vshrl.u32 %v4059, 7
      %v4061 = vsub.s32 %v4058, %v4060
      %v4062 = vrot.slane %v4014, %v4061
      %v4065 = vunpack.c.l.s4 1983009808
      %v4066 = vunpack.c.0.s8 %v4065
      %v4067 = vlaneseq
      %v4068 = vshrl.u32 %v4067, 7
      %v4069 = vsub.s32 %v4066, %v4068
      %v4070 = vrot.slane %v4020, %v4069
      %v4071 = vcombine.low %v4062, %v4070
      %v4072 = vcombine.high %v4062, %v4070
      %v4074 = vunpack.c.l.s4 1934713408
      %v4075 = vunpack.c.0.s8 %v4074
      %v4076 = vlaneseq
      %v4077 = vshrl.u32 %v4076, 7
      %v4078 = vsub.s32 %v4075, %v4077
      %v4079 = vrot.slane %v4071, %v4078
      %v4081 = vunpack.c.l.s4 1934713408
      %v4082 = vunpack.c.0.s8 %v4081
      %v4083 = vlaneseq
      %v4084 = vshrl.u32 %v4083, 7
      %v4085 = vsub.s32 %v4082, %v4084
      %v4086 = vrot.slane %v4072, %v4085
      %v4087 = vcombine.high %v4079, 0
      %v4088 = vcombine.high %v4086, 0
      %v4090 = vunpack.c.l.b16 %v4079
      %v4091 = vpack.c.b16 %v4090, %v4090
      %4092 = vrot.lane.b32.xlu0 %v4091, 16
      %v4093 = vpop.permute.xlu0 %4092
      %v4095 = vunpack.c.l.b16 %v4053
      %v4096 = vpack.c.b16 %v4095, %v4095
      %4097 = vrot.lane.b32.xlu0 %v4096, 32
      %v4098 = vpop.permute.xlu0 %4097
      %v4100 = vunpack.c.l.b16 %v4087
      %v4101 = vpack.c.b16 %v4100, %v4100
      %4102 = vrot.lane.b32.xlu0 %v4101, 48
      %v4103 = vpop.permute.xlu0 %4102
      %v4105 = vunpack.c.l.b16 %v4052
      %v4106 = vpack.c.b16 %v4105, %v4105
      %4107 = vrot.lane.b32.xlu0 %v4106, 64
      %v4108 = vpop.permute.xlu0 %4107
      %v4110 = vunpack.c.l.b16 %v4086
      %v4111 = vpack.c.b16 %v4110, %v4110
      %4112 = vrot.lane.b32.xlu0 %v4111, 80
      %v4113 = vpop.permute.xlu0 %4112
      %v4115 = vunpack.c.l.b16 %v4054
      %v4116 = vpack.c.b16 %v4115, %v4115
      %4117 = vrot.lane.b32.xlu0 %v4116, 96
      %v4118 = vpop.permute.xlu0 %4117
      %v4120 = vunpack.c.l.b16 %v4088
      %v4121 = vpack.c.b16 %v4120, %v4120
      %4122 = vrot.lane.b32.xlu0 %v4121, 112
      %v4123 = vpop.permute.xlu0 %4122
      %v4126 = vsel %vm1242, %v4045, %v4093
      %v4128 = vsel %vm1246, %v4126, %v4098
      %v4130 = vsel %vm1249, %v4128, %v4103
      %v4132 = vsel %vm1252, %v4130, %v4108
      %v4134 = vsel %vm1255, %v4132, %v4113
      %v4136 = vsel %vm1258, %v4134, %v4118
      %v4138 = vsel %vm1261, %v4136, %v4123
      %v4139 = vld [vmem:[#allocation3 + $0x4] sm:$0x1]
      %v4140 = vld [vmem:[#allocation3 + $0xc] sm:$0x1]
      %v4141 = vld [vmem:[#allocation3 + $0x14] sm:$0x1]
      %v4142 = vld [vmem:[#allocation3 + $0x1c] sm:$0x1]
      %v4144 = vrot.slane %v3732, 4
      %v4145 = vshll.u32 %v3725, 16
      %v4147 = vrot.slane %v4145, 5
      %v4148 = vor.u32 %v4144, %v4147
      %v4149 = vrot.slane %v4148, 4
      %v4151 = vshll.u32 %v4139, 16
      %v4153 = vrot.slane %v4151, 5
      %v4154 = vsel %vm1781, %v4149, %v4153
      %v4156 = vrot.slane %v3733, 4
      %v4157 = vshll.u32 %v3726, 16
      %v4159 = vrot.slane %v4157, 5
      %v4160 = vor.u32 %v4156, %v4159
      %v4161 = vrot.slane %v4160, 4
      %v4163 = vshll.u32 %v4140, 16
      %v4165 = vrot.slane %v4163, 5
      %v4166 = vsel %vm1781, %v4161, %v4165
      %v4168 = vrot.slane %v3738, 4
      %v4169 = vshll.u32 %v3727, 16
      %v4171 = vrot.slane %v4169, 5
      %v4172 = vor.u32 %v4168, %v4171
      %v4173 = vrot.slane %v4172, 4
      %v4175 = vshll.u32 %v4141, 16
      %v4177 = vrot.slane %v4175, 5
      %v4178 = vsel %vm1781, %v4173, %v4177
      %v4180 = vrot.slane %v3739, 4
      %v4181 = vshll.u32 %v3728, 16
      %v4183 = vrot.slane %v4181, 5
      %v4184 = vor.u32 %v4180, %v4183
      %v4185 = vrot.slane %v4184, 4
      %v4187 = vshll.u32 %v4142, 16
      %v4189 = vrot.slane %v4187, 5
      %v4190 = vsel %vm1781, %v4185, %v4189
      %v4193 = vpack.i.b16 %v4166, %v4154
      %v4194 = vshrl.u32 %v4154, 16
      %v4195 = vshrl.u32 %v4166, 16
      %v4196 = vpack.i.b16 %v4195, %v4194
      %v4199 = vpack.i.b16 %v4190, %v4178
      %v4200 = vshrl.u32 %v4178, 16
      %v4201 = vshrl.u32 %v4190, 16
      %v4202 = vpack.i.b16 %v4201, %v4200
      %v4205 = vunpack.c.l.s4 1983009808
      %v4206 = vunpack.c.0.s8 %v4205
      %v4207 = vlaneseq
      %v4208 = vshrl.u32 %v4207, 7
      %v4209 = vsub.s32 %v4206, %v4208
      %v4210 = vrot.slane %v4193, %v4209
      %v4213 = vunpack.c.l.s4 1983009808
      %v4214 = vunpack.c.0.s8 %v4213
      %v4215 = vlaneseq
      %v4216 = vshrl.u32 %v4215, 7
      %v4217 = vsub.s32 %v4214, %v4216
      %v4218 = vrot.slane %v4199, %v4217
      %v4219 = vcombine.low %v4210, %v4218
      %v4220 = vcombine.high %v4210, %v4218
      %v4222 = vunpack.c.l.s4 1934713408
      %v4223 = vunpack.c.0.s8 %v4222
      %v4224 = vlaneseq
      %v4225 = vshrl.u32 %v4224, 7
      %v4226 = vsub.s32 %v4223, %v4225
      %v4227 = vrot.slane %v4219, %v4226
      %v4229 = vunpack.c.l.s4 1934713408
      %v4230 = vunpack.c.0.s8 %v4229
      %v4231 = vlaneseq
      %v4232 = vshrl.u32 %v4231, 7
      %v4233 = vsub.s32 %v4230, %v4232
      %v4234 = vrot.slane %v4220, %v4233
      %v4235 = vcombine.high %v4227, 0
      %v4236 = vcombine.high %v4234, 0
      %v4239 = vunpack.c.l.s4 1983009808
      %v4240 = vunpack.c.0.s8 %v4239
      %v4241 = vlaneseq
      %v4242 = vshrl.u32 %v4241, 7
      %v4243 = vsub.s32 %v4240, %v4242
      %v4244 = vrot.slane %v4196, %v4243
      %v4247 = vunpack.c.l.s4 1983009808
      %v4248 = vunpack.c.0.s8 %v4247
      %v4249 = vlaneseq
      %v4250 = vshrl.u32 %v4249, 7
      %v4251 = vsub.s32 %v4248, %v4250
      %v4252 = vrot.slane %v4202, %v4251
      %v4253 = vcombine.low %v4244, %v4252
      %v4254 = vcombine.high %v4244, %v4252
      %v4256 = vunpack.c.l.s4 1934713408
      %v4257 = vunpack.c.0.s8 %v4256
      %v4258 = vlaneseq
      %v4259 = vshrl.u32 %v4258, 7
      %v4260 = vsub.s32 %v4257, %v4259
      %v4261 = vrot.slane %v4253, %v4260
      %v4263 = vunpack.c.l.s4 1934713408
      %v4264 = vunpack.c.0.s8 %v4263
      %v4265 = vlaneseq
      %v4266 = vshrl.u32 %v4265, 7
      %v4267 = vsub.s32 %v4264, %v4266
      %v4268 = vrot.slane %v4254, %v4267
      %v4269 = vcombine.high %v4261, 0
      %v4270 = vcombine.high %v4268, 0
      %v4272 = vunpack.c.l.b16 %v4261
      %v4273 = vpack.c.b16 %v4272, %v4272
      %4274 = vrot.lane.b32.xlu0 %v4273, 16
      %v4275 = vpop.permute.xlu0 %4274
      %v4277 = vunpack.c.l.b16 %v4235
      %v4278 = vpack.c.b16 %v4277, %v4277
      %4279 = vrot.lane.b32.xlu0 %v4278, 32
      %v4280 = vpop.permute.xlu0 %4279
      %v4282 = vunpack.c.l.b16 %v4269
      %v4283 = vpack.c.b16 %v4282, %v4282
      %4284 = vrot.lane.b32.xlu0 %v4283, 48
      %v4285 = vpop.permute.xlu0 %4284
      %v4287 = vunpack.c.l.b16 %v4234
      %v4288 = vpack.c.b16 %v4287, %v4287
      %4289 = vrot.lane.b32.xlu0 %v4288, 64
      %v4290 = vpop.permute.xlu0 %4289
      %v4292 = vunpack.c.l.b16 %v4268
      %v4293 = vpack.c.b16 %v4292, %v4292
      %4294 = vrot.lane.b32.xlu0 %v4293, 80
      %v4295 = vpop.permute.xlu0 %4294
      %v4297 = vunpack.c.l.b16 %v4236
      %v4298 = vpack.c.b16 %v4297, %v4297
      %4299 = vrot.lane.b32.xlu0 %v4298, 96
      %v4300 = vpop.permute.xlu0 %4299
      %v4302 = vunpack.c.l.b16 %v4270
      %v4303 = vpack.c.b16 %v4302, %v4302
      %4304 = vrot.lane.b32.xlu0 %v4303, 112
      %v4305 = vpop.permute.xlu0 %4304
      %v4308 = vsel %vm1242, %v4227, %v4275
      %v4310 = vsel %vm1246, %v4308, %v4280
      %v4312 = vsel %vm1249, %v4310, %v4285
      %v4314 = vsel %vm1252, %v4312, %v4290
      %v4316 = vsel %vm1255, %v4314, %v4295
      %v4318 = vsel %vm1258, %v4316, %v4300
      %v4320 = vsel %vm1261, %v4318, %v4305
      %4321 = vrot.lane.b32.xlu0 %v4154, 127
      %v4322 = vpop.permute.xlu0 %4321
      %4323 = vrot.lane.b32.xlu0 %v4166, 127
      %v4324 = vpop.permute.xlu0 %4323
      %4325 = vrot.lane.b32.xlu0 %v4178, 127
      %v4326 = vpop.permute.xlu0 %4325
      %4327 = vrot.lane.b32.xlu0 %v4190, 127
      %v4328 = vpop.permute.xlu0 %4327
      %v4331 = vpack.i.b16 %v4324, %v4322
      %v4332 = vshrl.u32 %v4322, 16
      %v4333 = vshrl.u32 %v4324, 16
      %v4334 = vpack.i.b16 %v4333, %v4332
      %v4337 = vpack.i.b16 %v4328, %v4326
      %v4338 = vshrl.u32 %v4326, 16
      %v4339 = vshrl.u32 %v4328, 16
      %v4340 = vpack.i.b16 %v4339, %v4338
      %v4343 = vunpack.c.l.s4 1983009808
      %v4344 = vunpack.c.0.s8 %v4343
      %v4345 = vlaneseq
      %v4346 = vshrl.u32 %v4345, 7
      %v4347 = vsub.s32 %v4344, %v4346
      %v4348 = vrot.slane %v4331, %v4347
      %v4351 = vunpack.c.l.s4 1983009808
      %v4352 = vunpack.c.0.s8 %v4351
      %v4353 = vlaneseq
      %v4354 = vshrl.u32 %v4353, 7
      %v4355 = vsub.s32 %v4352, %v4354
      %v4356 = vrot.slane %v4337, %v4355
      %v4357 = vcombine.low %v4348, %v4356
      %v4358 = vcombine.high %v4348, %v4356
      %v4360 = vunpack.c.l.s4 1934713408
      %v4361 = vunpack.c.0.s8 %v4360
      %v4362 = vlaneseq
      %v4363 = vshrl.u32 %v4362, 7
      %v4364 = vsub.s32 %v4361, %v4363
      %v4365 = vrot.slane %v4357, %v4364
      %v4367 = vunpack.c.l.s4 1934713408
      %v4368 = vunpack.c.0.s8 %v4367
      %v4369 = vlaneseq
      %v4370 = vshrl.u32 %v4369, 7
      %v4371 = vsub.s32 %v4368, %v4370
      %v4372 = vrot.slane %v4358, %v4371
      %v4373 = vcombine.high %v4365, 0
      %v4374 = vcombine.high %v4372, 0
      %v4377 = vunpack.c.l.s4 1983009808
      %v4378 = vunpack.c.0.s8 %v4377
      %v4379 = vlaneseq
      %v4380 = vshrl.u32 %v4379, 7
      %v4381 = vsub.s32 %v4378, %v4380
      %v4382 = vrot.slane %v4334, %v4381
      %v4385 = vunpack.c.l.s4 1983009808
      %v4386 = vunpack.c.0.s8 %v4385
      %v4387 = vlaneseq
      %v4388 = vshrl.u32 %v4387, 7
      %v4389 = vsub.s32 %v4386, %v4388
      %v4390 = vrot.slane %v4340, %v4389
      %v4391 = vcombine.low %v4382, %v4390
      %v4392 = vcombine.high %v4382, %v4390
      %v4394 = vunpack.c.l.s4 1934713408
      %v4395 = vunpack.c.0.s8 %v4394
      %v4396 = vlaneseq
      %v4397 = vshrl.u32 %v4396, 7
      %v4398 = vsub.s32 %v4395, %v4397
      %v4399 = vrot.slane %v4391, %v4398
      %v4401 = vunpack.c.l.s4 1934713408
      %v4402 = vunpack.c.0.s8 %v4401
      %v4403 = vlaneseq
      %v4404 = vshrl.u32 %v4403, 7
      %v4405 = vsub.s32 %v4402, %v4404
      %v4406 = vrot.slane %v4392, %v4405
      %v4407 = vcombine.high %v4399, 0
      %v4408 = vcombine.high %v4406, 0
      %v4410 = vunpack.c.l.b16 %v4399
      %v4411 = vpack.c.b16 %v4410, %v4410
      %4412 = vrot.lane.b32.xlu0 %v4411, 16
      %v4413 = vpop.permute.xlu0 %4412
      %v4415 = vunpack.c.l.b16 %v4373
      %v4416 = vpack.c.b16 %v4415, %v4415
      %4417 = vrot.lane.b32.xlu0 %v4416, 32
      %v4418 = vpop.permute.xlu0 %4417
      %v4420 = vunpack.c.l.b16 %v4407
      %v4421 = vpack.c.b16 %v4420, %v4420
      %4422 = vrot.lane.b32.xlu0 %v4421, 48
      %v4423 = vpop.permute.xlu0 %4422
      %v4425 = vunpack.c.l.b16 %v4372
      %v4426 = vpack.c.b16 %v4425, %v4425
      %4427 = vrot.lane.b32.xlu0 %v4426, 64
      %v4428 = vpop.permute.xlu0 %4427
      %v4430 = vunpack.c.l.b16 %v4406
      %v4431 = vpack.c.b16 %v4430, %v4430
      %4432 = vrot.lane.b32.xlu0 %v4431, 80
      %v4433 = vpop.permute.xlu0 %4432
      %v4435 = vunpack.c.l.b16 %v4374
      %v4436 = vpack.c.b16 %v4435, %v4435
      %4437 = vrot.lane.b32.xlu0 %v4436, 96
      %v4438 = vpop.permute.xlu0 %4437
      %v4440 = vunpack.c.l.b16 %v4408
      %v4441 = vpack.c.b16 %v4440, %v4440
      %4442 = vrot.lane.b32.xlu0 %v4441, 112
      %v4443 = vpop.permute.xlu0 %4442
      %v4446 = vsel %vm1242, %v4365, %v4413
      %v4448 = vsel %vm1246, %v4446, %v4418
      %v4450 = vsel %vm1249, %v4448, %v4423
      %v4452 = vsel %vm1252, %v4450, %v4428
      %v4454 = vsel %vm1255, %v4452, %v4433
      %v4456 = vsel %vm1258, %v4454, %v4438
      %v4458 = vsel %vm1261, %v4456, %v4443
      %4459 = vrot.lane.b32.xlu0 %v4154, 126
      %v4460 = vpop.permute.xlu0 %4459
      %4461 = vrot.lane.b32.xlu0 %v4166, 126
      %v4462 = vpop.permute.xlu0 %4461
      %4463 = vrot.lane.b32.xlu0 %v4178, 126
      %v4464 = vpop.permute.xlu0 %4463
      %4465 = vrot.lane.b32.xlu0 %v4190, 126
      %v4466 = vpop.permute.xlu0 %4465
      %v4469 = vpack.i.b16 %v4462, %v4460
      %v4470 = vshrl.u32 %v4460, 16
      %v4471 = vshrl.u32 %v4462, 16
      %v4472 = vpack.i.b16 %v4471, %v4470
      %v4475 = vpack.i.b16 %v4466, %v4464
      %v4476 = vshrl.u32 %v4464, 16
      %v4477 = vshrl.u32 %v4466, 16
      %v4478 = vpack.i.b16 %v4477, %v4476
      %v4481 = vunpack.c.l.s4 1983009808
      %v4482 = vunpack.c.0.s8 %v4481
      %v4483 = vlaneseq
      %v4484 = vshrl.u32 %v4483, 7
      %v4485 = vsub.s32 %v4482, %v4484
      %v4486 = vrot.slane %v4469, %v4485
      %v4489 = vunpack.c.l.s4 1983009808
      %v4490 = vunpack.c.0.s8 %v4489
      %v4491 = vlaneseq
      %v4492 = vshrl.u32 %v4491, 7
      %v4493 = vsub.s32 %v4490, %v4492
      %v4494 = vrot.slane %v4475, %v4493
      %v4495 = vcombine.low %v4486, %v4494
      %v4496 = vcombine.high %v4486, %v4494
      %v4498 = vunpack.c.l.s4 1934713408
      %v4499 = vunpack.c.0.s8 %v4498
      %v4500 = vlaneseq
      %v4501 = vshrl.u32 %v4500, 7
      %v4502 = vsub.s32 %v4499, %v4501
      %v4503 = vrot.slane %v4495, %v4502
      %v4505 = vunpack.c.l.s4 1934713408
      %v4506 = vunpack.c.0.s8 %v4505
      %v4507 = vlaneseq
      %v4508 = vshrl.u32 %v4507, 7
      %v4509 = vsub.s32 %v4506, %v4508
      %v4510 = vrot.slane %v4496, %v4509
      %v4511 = vcombine.high %v4503, 0
      %v4512 = vcombine.high %v4510, 0
      %v4515 = vunpack.c.l.s4 1983009808
      %v4516 = vunpack.c.0.s8 %v4515
      %v4517 = vlaneseq
      %v4518 = vshrl.u32 %v4517, 7
      %v4519 = vsub.s32 %v4516, %v4518
      %v4520 = vrot.slane %v4472, %v4519
      %v4523 = vunpack.c.l.s4 1983009808
      %v4524 = vunpack.c.0.s8 %v4523
      %v4525 = vlaneseq
      %v4526 = vshrl.u32 %v4525, 7
      %v4527 = vsub.s32 %v4524, %v4526
      %v4528 = vrot.slane %v4478, %v4527
      %v4529 = vcombine.low %v4520, %v4528
      %v4530 = vcombine.high %v4520, %v4528
      %v4532 = vunpack.c.l.s4 1934713408
      %v4533 = vunpack.c.0.s8 %v4532
      %v4534 = vlaneseq
      %v4535 = vshrl.u32 %v4534, 7
      %v4536 = vsub.s32 %v4533, %v4535
      %v4537 = vrot.slane %v4529, %v4536
      %v4539 = vunpack.c.l.s4 1934713408
      %v4540 = vunpack.c.0.s8 %v4539
      %v4541 = vlaneseq
      %v4542 = vshrl.u32 %v4541, 7
      %v4543 = vsub.s32 %v4540, %v4542
      %v4544 = vrot.slane %v4530, %v4543
      %v4545 = vcombine.high %v4537, 0
      %v4546 = vcombine.high %v4544, 0
      %v4548 = vunpack.c.l.b16 %v4537
      %v4549 = vpack.c.b16 %v4548, %v4548
      %4550 = vrot.lane.b32.xlu0 %v4549, 16
      %v4551 = vpop.permute.xlu0 %4550
      %v4553 = vunpack.c.l.b16 %v4511
      %v4554 = vpack.c.b16 %v4553, %v4553
      %4555 = vrot.lane.b32.xlu0 %v4554, 32
      %v4556 = vpop.permute.xlu0 %4555
      %v4558 = vunpack.c.l.b16 %v4545
      %v4559 = vpack.c.b16 %v4558, %v4558
      %4560 = vrot.lane.b32.xlu0 %v4559, 48
      %v4561 = vpop.permute.xlu0 %4560
      %v4563 = vunpack.c.l.b16 %v4510
      %v4564 = vpack.c.b16 %v4563, %v4563
      %4565 = vrot.lane.b32.xlu0 %v4564, 64
      %v4566 = vpop.permute.xlu0 %4565
      %v4568 = vunpack.c.l.b16 %v4544
      %v4569 = vpack.c.b16 %v4568, %v4568
      %4570 = vrot.lane.b32.xlu0 %v4569, 80
      %v4571 = vpop.permute.xlu0 %4570
      %v4573 = vunpack.c.l.b16 %v4512
      %v4574 = vpack.c.b16 %v4573, %v4573
      %4575 = vrot.lane.b32.xlu0 %v4574, 96
      %v4576 = vpop.permute.xlu0 %4575
      %v4578 = vunpack.c.l.b16 %v4546
      %v4579 = vpack.c.b16 %v4578, %v4578
      %4580 = vrot.lane.b32.xlu0 %v4579, 112
      %v4581 = vpop.permute.xlu0 %4580
      %v4584 = vsel %vm1242, %v4503, %v4551
      %v4586 = vsel %vm1246, %v4584, %v4556
      %v4588 = vsel %vm1249, %v4586, %v4561
      %v4590 = vsel %vm1252, %v4588, %v4566
      %v4592 = vsel %vm1255, %v4590, %v4571
      %v4594 = vsel %vm1258, %v4592, %v4576
      %v4596 = vsel %vm1261, %v4594, %v4581
      %v4597 = vld [vmem:[#allocation3] sm:$0xe]
      %v4598 = vld [vmem:[#allocation3 + $0x8] sm:$0xe]
      %v4599 = vld [vmem:[#allocation3 + $0x10] sm:$0xe]
      %v4600 = vld [vmem:[#allocation3 + $0x18] sm:$0xe]
      %v4609 = vrot.slane %v4597, 5
      %v4610 = vrot.slane %v4609, 4
      %v4611 = vrot.slane %v4139, 5
      %v4612 = vsel %vm2660, %v4610, %v4611
      %v4613 = vrot.slane %v4598, 5
      %v4614 = vrot.slane %v4613, 4
      %v4615 = vrot.slane %v4140, 5
      %v4616 = vsel %vm2660, %v4614, %v4615
      %v4617 = vrot.slane %v4599, 5
      %v4618 = vrot.slane %v4617, 4
      %v4619 = vrot.slane %v4141, 5
      %v4620 = vsel %vm2660, %v4618, %v4619
      %v4621 = vrot.slane %v4600, 5
      %v4622 = vrot.slane %v4621, 4
      %v4623 = vrot.slane %v4142, 5
      %v4624 = vsel %vm2660, %v4622, %v4623
      %v4627 = vpack.i.b16 %v4616, %v4612
      %v4628 = vshrl.u32 %v4612, 16
      %v4629 = vshrl.u32 %v4616, 16
      %v4630 = vpack.i.b16 %v4629, %v4628
      %v4633 = vpack.i.b16 %v4624, %v4620
      %v4634 = vshrl.u32 %v4620, 16
      %v4635 = vshrl.u32 %v4624, 16
      %v4636 = vpack.i.b16 %v4635, %v4634
      %v4639 = vunpack.c.l.s4 1983009808
      %v4640 = vunpack.c.0.s8 %v4639
      %v4641 = vlaneseq
      %v4642 = vshrl.u32 %v4641, 7
      %v4643 = vsub.s32 %v4640, %v4642
      %v4644 = vrot.slane %v4627, %v4643
      %v4647 = vunpack.c.l.s4 1983009808
      %v4648 = vunpack.c.0.s8 %v4647
      %v4649 = vlaneseq
      %v4650 = vshrl.u32 %v4649, 7
      %v4651 = vsub.s32 %v4648, %v4650
      %v4652 = vrot.slane %v4633, %v4651
      %v4653 = vcombine.low %v4644, %v4652
      %v4654 = vcombine.high %v4644, %v4652
      %v4656 = vunpack.c.l.s4 1934713408
      %v4657 = vunpack.c.0.s8 %v4656
      %v4658 = vlaneseq
      %v4659 = vshrl.u32 %v4658, 7
      %v4660 = vsub.s32 %v4657, %v4659
      %v4661 = vrot.slane %v4653, %v4660
      %v4663 = vunpack.c.l.s4 1934713408
      %v4664 = vunpack.c.0.s8 %v4663
      %v4665 = vlaneseq
      %v4666 = vshrl.u32 %v4665, 7
      %v4667 = vsub.s32 %v4664, %v4666
      %v4668 = vrot.slane %v4654, %v4667
      %v4669 = vcombine.high %v4661, 0
      %v4670 = vcombine.high %v4668, 0
      %v4673 = vunpack.c.l.s4 1983009808
      %v4674 = vunpack.c.0.s8 %v4673
      %v4675 = vlaneseq
      %v4676 = vshrl.u32 %v4675, 7
      %v4677 = vsub.s32 %v4674, %v4676
      %v4678 = vrot.slane %v4630, %v4677
      %v4681 = vunpack.c.l.s4 1983009808
      %v4682 = vunpack.c.0.s8 %v4681
      %v4683 = vlaneseq
      %v4684 = vshrl.u32 %v4683, 7
      %v4685 = vsub.s32 %v4682, %v4684
      %v4686 = vrot.slane %v4636, %v4685
      %v4687 = vcombine.low %v4678, %v4686
      %v4688 = vcombine.high %v4678, %v4686
      %v4690 = vunpack.c.l.s4 1934713408
      %v4691 = vunpack.c.0.s8 %v4690
      %v4692 = vlaneseq
      %v4693 = vshrl.u32 %v4692, 7
      %v4694 = vsub.s32 %v4691, %v4693
      %v4695 = vrot.slane %v4687, %v4694
      %v4697 = vunpack.c.l.s4 1934713408
      %v4698 = vunpack.c.0.s8 %v4697
      %v4699 = vlaneseq
      %v4700 = vshrl.u32 %v4699, 7
      %v4701 = vsub.s32 %v4698, %v4700
      %v4702 = vrot.slane %v4688, %v4701
      %v4703 = vcombine.high %v4695, 0
      %v4704 = vcombine.high %v4702, 0
      %v4706 = vunpack.c.l.b16 %v4695
      %v4707 = vpack.c.b16 %v4706, %v4706
      %4708 = vrot.lane.b32.xlu0 %v4707, 16
      %v4709 = vpop.permute.xlu0 %4708
      %v4711 = vunpack.c.l.b16 %v4669
      %v4712 = vpack.c.b16 %v4711, %v4711
      %4713 = vrot.lane.b32.xlu0 %v4712, 32
      %v4714 = vpop.permute.xlu0 %4713
      %v4716 = vunpack.c.l.b16 %v4703
      %v4717 = vpack.c.b16 %v4716, %v4716
      %4718 = vrot.lane.b32.xlu0 %v4717, 48
      %v4719 = vpop.permute.xlu0 %4718
      %v4721 = vunpack.c.l.b16 %v4668
      %v4722 = vpack.c.b16 %v4721, %v4721
      %4723 = vrot.lane.b32.xlu0 %v4722, 64
      %v4724 = vpop.permute.xlu0 %4723
      %v4726 = vunpack.c.l.b16 %v4702
      %v4727 = vpack.c.b16 %v4726, %v4726
      %4728 = vrot.lane.b32.xlu0 %v4727, 80
      %v4729 = vpop.permute.xlu0 %4728
      %v4731 = vunpack.c.l.b16 %v4670
      %v4732 = vpack.c.b16 %v4731, %v4731
      %4733 = vrot.lane.b32.xlu0 %v4732, 96
      %v4734 = vpop.permute.xlu0 %4733
      %v4736 = vunpack.c.l.b16 %v4704
      %v4737 = vpack.c.b16 %v4736, %v4736
      %4738 = vrot.lane.b32.xlu0 %v4737, 112
      %v4739 = vpop.permute.xlu0 %4738
      %v4742 = vsel %vm1242, %v4661, %v4709
      %v4744 = vsel %vm1246, %v4742, %v4714
      %v4746 = vsel %vm1249, %v4744, %v4719
      %v4748 = vsel %vm1252, %v4746, %v4724
      %v4750 = vsel %vm1255, %v4748, %v4729
      %v4752 = vsel %vm1258, %v4750, %v4734
      %v4754 = vsel %vm1261, %v4752, %v4739
      %4755 = vrot.lane.b32.xlu0 %v4612, 127
      %v4756 = vpop.permute.xlu0 %4755
      %4757 = vrot.lane.b32.xlu0 %v4616, 127
      %v4758 = vpop.permute.xlu0 %4757
      %4759 = vrot.lane.b32.xlu0 %v4620, 127
      %v4760 = vpop.permute.xlu0 %4759
      %4761 = vrot.lane.b32.xlu0 %v4624, 127
      %v4762 = vpop.permute.xlu0 %4761
      %v4765 = vpack.i.b16 %v4758, %v4756
      %v4766 = vshrl.u32 %v4756, 16
      %v4767 = vshrl.u32 %v4758, 16
      %v4768 = vpack.i.b16 %v4767, %v4766
      %v4771 = vpack.i.b16 %v4762, %v4760
      %v4772 = vshrl.u32 %v4760, 16
      %v4773 = vshrl.u32 %v4762, 16
      %v4774 = vpack.i.b16 %v4773, %v4772
      %v4777 = vunpack.c.l.s4 1983009808
      %v4778 = vunpack.c.0.s8 %v4777
      %v4779 = vlaneseq
      %v4780 = vshrl.u32 %v4779, 7
      %v4781 = vsub.s32 %v4778, %v4780
      %v4782 = vrot.slane %v4765, %v4781
      %v4785 = vunpack.c.l.s4 1983009808
      %v4786 = vunpack.c.0.s8 %v4785
      %v4787 = vlaneseq
      %v4788 = vshrl.u32 %v4787, 7
      %v4789 = vsub.s32 %v4786, %v4788
      %v4790 = vrot.slane %v4771, %v4789
      %v4791 = vcombine.low %v4782, %v4790
      %v4792 = vcombine.high %v4782, %v4790
      %v4794 = vunpack.c.l.s4 1934713408
      %v4795 = vunpack.c.0.s8 %v4794
      %v4796 = vlaneseq
      %v4797 = vshrl.u32 %v4796, 7
      %v4798 = vsub.s32 %v4795, %v4797
      %v4799 = vrot.slane %v4791, %v4798
      %v4801 = vunpack.c.l.s4 1934713408
      %v4802 = vunpack.c.0.s8 %v4801
      %v4803 = vlaneseq
      %v4804 = vshrl.u32 %v4803, 7
      %v4805 = vsub.s32 %v4802, %v4804
      %v4806 = vrot.slane %v4792, %v4805
      %v4807 = vcombine.high %v4799, 0
      %v4808 = vcombine.high %v4806, 0
      %v4811 = vunpack.c.l.s4 1983009808
      %v4812 = vunpack.c.0.s8 %v4811
      %v4813 = vlaneseq
      %v4814 = vshrl.u32 %v4813, 7
      %v4815 = vsub.s32 %v4812, %v4814
      %v4816 = vrot.slane %v4768, %v4815
      %v4819 = vunpack.c.l.s4 1983009808
      %v4820 = vunpack.c.0.s8 %v4819
      %v4821 = vlaneseq
      %v4822 = vshrl.u32 %v4821, 7
      %v4823 = vsub.s32 %v4820, %v4822
      %v4824 = vrot.slane %v4774, %v4823
      %v4825 = vcombine.low %v4816, %v4824
      %v4826 = vcombine.high %v4816, %v4824
      %v4828 = vunpack.c.l.s4 1934713408
      %v4829 = vunpack.c.0.s8 %v4828
      %v4830 = vlaneseq
      %v4831 = vshrl.u32 %v4830, 7
      %v4832 = vsub.s32 %v4829, %v4831
      %v4833 = vrot.slane %v4825, %v4832
      %v4835 = vunpack.c.l.s4 1934713408
      %v4836 = vunpack.c.0.s8 %v4835
      %v4837 = vlaneseq
      %v4838 = vshrl.u32 %v4837, 7
      %v4839 = vsub.s32 %v4836, %v4838
      %v4840 = vrot.slane %v4826, %v4839
      %v4841 = vcombine.high %v4833, 0
      %v4842 = vcombine.high %v4840, 0
      %v4844 = vunpack.c.l.b16 %v4833
      %v4845 = vpack.c.b16 %v4844, %v4844
      %4846 = vrot.lane.b32.xlu0 %v4845, 16
      %v4847 = vpop.permute.xlu0 %4846
      %v4849 = vunpack.c.l.b16 %v4807
      %v4850 = vpack.c.b16 %v4849, %v4849
      %4851 = vrot.lane.b32.xlu0 %v4850, 32
      %v4852 = vpop.permute.xlu0 %4851
      %v4854 = vunpack.c.l.b16 %v4841
      %v4855 = vpack.c.b16 %v4854, %v4854
      %4856 = vrot.lane.b32.xlu0 %v4855, 48
      %v4857 = vpop.permute.xlu0 %4856
      %v4859 = vunpack.c.l.b16 %v4806
      %v4860 = vpack.c.b16 %v4859, %v4859
      %4861 = vrot.lane.b32.xlu0 %v4860, 64
      %v4862 = vpop.permute.xlu0 %4861
      %v4864 = vunpack.c.l.b16 %v4840
      %v4865 = vpack.c.b16 %v4864, %v4864
      %4866 = vrot.lane.b32.xlu0 %v4865, 80
      %v4867 = vpop.permute.xlu0 %4866
      %v4869 = vunpack.c.l.b16 %v4808
      %v4870 = vpack.c.b16 %v4869, %v4869
      %4871 = vrot.lane.b32.xlu0 %v4870, 96
      %v4872 = vpop.permute.xlu0 %4871
      %v4874 = vunpack.c.l.b16 %v4842
      %v4875 = vpack.c.b16 %v4874, %v4874
      %4876 = vrot.lane.b32.xlu0 %v4875, 112
      %v4877 = vpop.permute.xlu0 %4876
      %v4880 = vsel %vm1242, %v4799, %v4847
      %v4882 = vsel %vm1246, %v4880, %v4852
      %v4884 = vsel %vm1249, %v4882, %v4857
      %v4886 = vsel %vm1252, %v4884, %v4862
      %v4888 = vsel %vm1255, %v4886, %v4867
      %v4890 = vsel %vm1258, %v4888, %v4872
      %v4892 = vsel %vm1261, %v4890, %v4877
      %4893 = vrot.lane.b32.xlu0 %v4612, 126
      %v4894 = vpop.permute.xlu0 %4893
      %4895 = vrot.lane.b32.xlu0 %v4616, 126
      %v4896 = vpop.permute.xlu0 %4895
      %4897 = vrot.lane.b32.xlu0 %v4620, 126
      %v4898 = vpop.permute.xlu0 %4897
      %4899 = vrot.lane.b32.xlu0 %v4624, 126
      %v4900 = vpop.permute.xlu0 %4899
      %v4903 = vpack.i.b16 %v4896, %v4894
      %v4904 = vshrl.u32 %v4894, 16
      %v4905 = vshrl.u32 %v4896, 16
      %v4906 = vpack.i.b16 %v4905, %v4904
      %v4909 = vpack.i.b16 %v4900, %v4898
      %v4910 = vshrl.u32 %v4898, 16
      %v4911 = vshrl.u32 %v4900, 16
      %v4912 = vpack.i.b16 %v4911, %v4910
      %v4915 = vunpack.c.l.s4 1983009808
      %v4916 = vunpack.c.0.s8 %v4915
      %v4917 = vlaneseq
      %v4918 = vshrl.u32 %v4917, 7
      %v4919 = vsub.s32 %v4916, %v4918
      %v4920 = vrot.slane %v4903, %v4919
      %v4923 = vunpack.c.l.s4 1983009808
      %v4924 = vunpack.c.0.s8 %v4923
      %v4925 = vlaneseq
      %v4926 = vshrl.u32 %v4925, 7
      %v4927 = vsub.s32 %v4924, %v4926
      %v4928 = vrot.slane %v4909, %v4927
      %v4929 = vcombine.low %v4920, %v4928
      %v4930 = vcombine.high %v4920, %v4928
      %v4932 = vunpack.c.l.s4 1934713408
      %v4933 = vunpack.c.0.s8 %v4932
      %v4934 = vlaneseq
      %v4935 = vshrl.u32 %v4934, 7
      %v4936 = vsub.s32 %v4933, %v4935
      %v4937 = vrot.slane %v4929, %v4936
      %v4939 = vunpack.c.l.s4 1934713408
      %v4940 = vunpack.c.0.s8 %v4939
      %v4941 = vlaneseq
      %v4942 = vshrl.u32 %v4941, 7
      %v4943 = vsub.s32 %v4940, %v4942
      %v4944 = vrot.slane %v4930, %v4943
      %v4945 = vcombine.high %v4937, 0
      %v4946 = vcombine.high %v4944, 0
      %v4949 = vunpack.c.l.s4 1983009808
      %v4950 = vunpack.c.0.s8 %v4949
      %v4951 = vlaneseq
      %v4952 = vshrl.u32 %v4951, 7
      %v4953 = vsub.s32 %v4950, %v4952
      %v4954 = vrot.slane %v4906, %v4953
      %v4957 = vunpack.c.l.s4 1983009808
      %v4958 = vunpack.c.0.s8 %v4957
      %v4959 = vlaneseq
      %v4960 = vshrl.u32 %v4959, 7
      %v4961 = vsub.s32 %v4958, %v4960
      %v4962 = vrot.slane %v4912, %v4961
      %v4963 = vcombine.low %v4954, %v4962
      %v4964 = vcombine.high %v4954, %v4962
      %v4966 = vunpack.c.l.s4 1934713408
      %v4967 = vunpack.c.0.s8 %v4966
      %v4968 = vlaneseq
      %v4969 = vshrl.u32 %v4968, 7
      %v4970 = vsub.s32 %v4967, %v4969
      %v4971 = vrot.slane %v4963, %v4970
      %v4973 = vunpack.c.l.s4 1934713408
      %v4974 = vunpack.c.0.s8 %v4973
      %v4975 = vlaneseq
      %v4976 = vshrl.u32 %v4975, 7
      %v4977 = vsub.s32 %v4974, %v4976
      %v4978 = vrot.slane %v4964, %v4977
      %v4979 = vcombine.high %v4971, 0
      %v4980 = vcombine.high %v4978, 0
      %v4982 = vunpack.c.l.b16 %v4971
      %v4983 = vpack.c.b16 %v4982, %v4982
      %4984 = vrot.lane.b32.xlu0 %v4983, 16
      %v4985 = vpop.permute.xlu0 %4984
      %v4987 = vunpack.c.l.b16 %v4945
      %v4988 = vpack.c.b16 %v4987, %v4987
      %4989 = vrot.lane.b32.xlu0 %v4988, 32
      %v4990 = vpop.permute.xlu0 %4989
      %v4992 = vunpack.c.l.b16 %v4979
      %v4993 = vpack.c.b16 %v4992, %v4992
      %4994 = vrot.lane.b32.xlu0 %v4993, 48
      %v4995 = vpop.permute.xlu0 %4994
      %v4997 = vunpack.c.l.b16 %v4944
      %v4998 = vpack.c.b16 %v4997, %v4997
      %4999 = vrot.lane.b32.xlu0 %v4998, 64
      %v5000 = vpop.permute.xlu0 %4999
      %v5002 = vunpack.c.l.b16 %v4978
      %v5003 = vpack.c.b16 %v5002, %v5002
      %5004 = vrot.lane.b32.xlu0 %v5003, 80
      %v5005 = vpop.permute.xlu0 %5004
      %v5007 = vunpack.c.l.b16 %v4946
      %v5008 = vpack.c.b16 %v5007, %v5007
      %5009 = vrot.lane.b32.xlu0 %v5008, 96
      %v5010 = vpop.permute.xlu0 %5009
      %v5012 = vunpack.c.l.b16 %v4980
      %v5013 = vpack.c.b16 %v5012, %v5012
      %5014 = vrot.lane.b32.xlu0 %v5013, 112
      %v5015 = vpop.permute.xlu0 %5014
      %v5018 = vsel %vm1242, %v4937, %v4985
      %v5020 = vsel %vm1246, %v5018, %v4990
      %v5022 = vsel %vm1249, %v5020, %v4995
      %v5024 = vsel %vm1252, %v5022, %v5000
      %v5026 = vsel %vm1255, %v5024, %v5005
      %v5028 = vsel %vm1258, %v5026, %v5010
      %v5030 = vsel %vm1261, %v5028, %v5015
      %v5032 = vrot.slane %v4000, 6
      %v5034 = vrot.slane %v4138, 4
      %v5036 = vrot.slane %v4320, 2
      %v5038 = vrot.slane %v4596, 6
      %v5040 = vrot.slane %v4754, 4
      %v5042 = vrot.slane %v4892, 2
      %v5044 = vsel %vm511, %v3858, %v5032
      %v5046 = vsel %vm411, %v5044, %v5034
      %vm5047 = vcmask 1045504
      %v5049 = vsel %vm5047, %v5046, %v5036
      %v5052 = vsel %vm511, %v4458, %v5038
      %v5054 = vsel %vm411, %v5052, %v5040
      %v5056 = vsel %vm5047, %v5054, %v5042
      %v5058 = vld [vmem:[%s8] sm:$0x3]
      %v5059 = vld [vmem:[%s9] sm:$0xf]
      %5061 = vset.pattern.permute.xlu0 0
      %5062 = vperm.xlu0 %5061, %v5059
      %v5063 = vpop.permute.xlu0 %5062
      %vm5065 = vcmask 293888
      %v5067 = vsel %vm5065, %v5058, 0
      %v5069 = vsel %vm511, %v5030, 0
      %5071 = vmatprep.subr.bf16.mxu0 0
      %5072 = vmatpush1.bf16.msra.mxu0 %v5049
      %5073 = vmatprep.subr.bf16.mxu0 0
      %5074 = vmatpush1.bf16.msra.mxu0 %v5056
      %5075 = vmatprep.subr.bf16.mxu0 0
      %5076 = vmatpush1.bf16.msra.mxu0 %v5069
      %5077 = vmatprep.subr.bf16.mxu0 0
      %5078 = vmatpush1.bf16.msra.mxu0 0
      %5079 = vmatprep.subr.bf16.mxu0 0
      %5080 = vmatpush1.bf16.msra.mxu0 0
      %5081 = vmatprep.subr.bf16.mxu0 0
      %5082 = vmatpush1.bf16.msra.mxu0 0
      %5083 = vmatprep.subr.bf16.mxu0 0
      %5084 = vmatpush1.bf16.msra.mxu0 0
      %5085 = vmatprep.subr.bf16.mxu0 0
      %5086 = vmatpush1.bf16.msra.mxu0 0
      %5087 = vmatprep.subr.bf16.mxu0 0
      %5088 = vmatpush1.bf16.msra.mxu0 0
      %5089 = vmatprep.subr.bf16.mxu0 0
      %5090 = vmatpush1.bf16.msra.mxu0 0
      %5091 = vmatprep.subr.bf16.mxu0 0
      %5092 = vmatpush1.bf16.msra.mxu0 0
      %5093 = vmatprep.subr.bf16.mxu0 0
      %5094 = vmatpush1.bf16.msra.mxu0 0
      %5095 = vmatprep.subr.bf16.mxu0 0
      %5096 = vmatpush1.bf16.msra.mxu0 0
      %5097 = vmatprep.subr.bf16.mxu0 0
      %5098 = vmatpush1.bf16.msra.mxu0 0
      %5099 = vmatprep.subr.bf16.mxu0 0
      %5100 = vmatpush1.bf16.msra.mxu0 0
      %5101 = vmatprep.subr.bf16.mxu0 0
      %5102 = vmatpush1.bf16.msra.mxu0 0
      %5103 = vmatprep.mubr.bf16.mxu0 0
      %5104 = vmatmul.mubr.bf16.gmra.mrb[0].mxu0 %v5067
      %v5105 = vpop.f32.mrb[0].mxu0
      %v5106 = vadd.f32 %v5063, %v5105
      %v5107 = vpop.f32.mrb[0].mxu0
      %v5108 = vpop.f32.mrb[0].mxu0
      %v5109 = vpop.f32.mrb[0].mxu0
      %5110 = vdwg.mxu0
      %v5111 = vmax.f32 %v5106, 0.0
      %5112 = vst [vmem:[%s396] sm:$0xf] %v5111
      %p5113 = scmp.lt.s32.totalorder %s25, 1
      %s5114 = scalar_select %p5113, %s25, 1
      %p5115 = scmp.lt.s32.totalorder %s26, 1
      %s5116 = scalar_select %p5115, %s26, 1
      %s5117 = smul.addr %s5114, 2
      %s5118 = sadd.s32 %s5116, %s5117
      %s5119 = smul.addr %s5118, 4
      %s5120 = scalar_lea.vmem %s10, %s5119
      // Predicated region
      $region61: #{unet_up4_forward.1} parent=59 // pred_check
        %p5121 = pneg %p273
      $region62: #{unet_up4_forward.1} parent=59 // pred_check_branch
        %5123 = sbr.rel (%p5121) target = $region64
      $region63: #{unet_up4_forward.1} parent=59 // pred_region
        _
      $region64: #{unet_up4_forward.1} parent=59 // pred_fallthru
        _
    $region60: #{unet_up4_forward.1} parent=5 // pred_fallthru
      _
    %p5124 = scmp.le.s32.totalorder 2, %s16
    // Predicated region
    $region65: #{unet_up4_forward.1} parent=5 // pred_check
      %p5125 = pneg %p5124
    $region66: #{unet_up4_forward.1} parent=5 // pred_check_branch
      %5127 = sbr.rel (%p5125) target = $region68
    $region67: #{unet_up4_forward.1} parent=5 // pred_region
      %s5128 = ssub.s32 %s16, 2
      // Predicated region
      $region69: #{unet_up4_forward.1} parent=67 // pred_check
        %p5129 = pneg %p279
      $region70: #{unet_up4_forward.1} parent=67 // pred_check_branch
        %5131 = sbr.rel (%p5129) target = $region72
      $region71: #{unet_up4_forward.1} parent=67 // pred_region
        %p5132 = scmp.lt.s32.totalorder %s27, 1
        %s5133 = scalar_select %p5132, %s27, 1
        %p5134 = scmp.lt.s32.totalorder %s28, 1
        %s5135 = scalar_select %p5134, %s28, 1
        %s5136 = smul.addr %s5133, 2
        %s5137 = sadd.s32 %s5135, %s5136
        %s5138 = smul.addr %s5137, 4
        %s5139 = scalar_lea.vmem %s10, %s5138
      $region72: #{unet_up4_forward.1} parent=67 // pred_fallthru
        _
    $region68: #{unet_up4_forward.1} parent=5 // pred_fallthru
      _
  $region6: #{unet_up4_forward.1} parent=0 // loop_footer
    %s20 = sadd.s32 1, %s16
  $region7: #{unet_up4_forward.1} parent=0 // loop_footer_branch
    %15 = sbr.rel target = $region3
  $region8: #{unet_up4_forward.1} parent=0 // loop_exit
    _

</llo_original>
